<compile_context>
chip_gen: v6e
topology: v6e:2x2x1
jax: 0.10.0
libtpu: 0.0.40
codegen_flags: <defaults>
</compile_context>

<pallas_src>
import functools
import math

import jax
import jax.numpy as jnp
from jax import lax
from jax.experimental import pallas as pl
from jax.experimental.pallas import tpu as pltpu


def _attention_kernel(
    x_full_ref, x_q_ref, mask_ref,
    wq_ref, bq_ref, wk_ref, bk_ref, wv_ref, bv_ref, wo_ref, bo_ref,
    scores_ref, out_ref,
    k_scr, v_scr,
    *, num_heads,
):
    """Grid = (batch, q_block).  K/V for the whole sequence are produced once
    per batch element (qi == 0) into VMEM scratch; each grid step then handles
    one query block for all heads.  Every per-head op below is a full
    128-lane-wide MXU matmul (head_dim padded to Dp=128k), so the static head
    loop is exactly what a batched einsum would lower to — without the
    (NH, S, H) activation broadcast or any in-kernel reshape/transpose."""
    NH = num_heads
    qi = pl.program_id(1)
    TQ = x_q_ref.shape[1]
    H = x_full_ref.shape[2]

    # ---- K/V projections: once per batch element, full sequence ----
    @pl.when(qi == 0)
    def _():
        x = x_full_ref[0]                                    # (S, H) bf16
        for n in range(NH):                                  # static unroll
            k_scr[n] = (jnp.dot(x, wk_ref[n], preferred_element_type=jnp.float32)
                        + bk_ref[n]).astype(jnp.bfloat16)    # (S, Dp)
            v_scr[n] = (jnp.dot(x, wv_ref[n], preferred_element_type=jnp.float32)
                        + bv_ref[n]).astype(jnp.bfloat16)    # (S, Dp)

    x_q = x_q_ref[0]        # (TQ, H) bf16 — current query block
    m = mask_ref[0, 0]      # (TQ, S) f32 additive mask (shared across heads)
    bo = bo_ref[...]        # (1, H)  f32

    out_acc = jnp.zeros((TQ, H), jnp.float32)
    for n in range(NH):
        # Query projection; per-dim scale already folded into wq/bq.
        q_n = (jnp.dot(x_q, wq_ref[n], preferred_element_type=jnp.float32)
               + bq_ref[n])                                          # (TQ, Dp) f32

        # Scores: contract the last (lane) dims of q and k — no transposes.
        s_n = lax.dot_general(
            q_n.astype(jnp.bfloat16), k_scr[n],
            dimension_numbers=(((1,), (1,)), ((), ())),
            preferred_element_type=jnp.float32)                      # (TQ, S) f32
        s_n = s_n + m

        # Numerically-stable softmax with EXACT division: the returned scores
        # must match F.softmax (rows sum to 1), so no approx reciprocal here.
        s_n = s_n - jnp.max(s_n, axis=-1, keepdims=True)
        e_n = jnp.exp(s_n)
        p_n = e_n / jnp.sum(e_n, axis=-1, keepdims=True)             # (TQ, S) f32
        scores_ref[0, n] = p_n.astype(scores_ref.dtype)

        # PV + output projection, accumulated into one (TQ, H) f32 accumulator
        # (no (NH, TQ, H) intermediate, no concatenate).
        attn_n = jnp.dot(p_n.astype(jnp.bfloat16), v_scr[n],
                         preferred_element_type=jnp.float32)         # (TQ, Dp) f32
        out_acc = out_acc + jnp.dot(attn_n.astype(jnp.bfloat16), wo_ref[n],
                                    preferred_element_type=jnp.float32)

    out_ref[0] = (out_acc + bo).astype(out_ref.dtype)


def timesfm_attention(hidden_states, mask, params, *, num_heads, num_kv_heads, head_dim):
    """hidden_states: (B, S, H) f32; mask: (1|B, 1, S, S) f32 additive mask.
    params use PyTorch nn.Linear layouts: w* = (out, in), b* = (out,), scaling = (D,)."""
    B, S, H = hidden_states.shape
    assert num_heads % num_kv_heads == 0
    qpk = num_heads // num_kv_heads
    NH, NKV, D = num_heads, num_kv_heads, head_dim
    Dp = ((D + 127) // 128) * 128     # lane-aligned head_dim; zero-pad is exact

    # ---- layout plumbing (once per call, outside the kernel) ----
    def pad_axis(a, axis, target):
        if a.shape[axis] == target:
            return a
        widths = [(0, 0)] * a.ndim
        widths[axis] = (0, target - a.shape[axis])
        return jnp.pad(a, widths)

    r_softplus_0 = 1.442695041
    scale = (r_softplus_0 / math.sqrt(D)) * jax.nn.softplus(
        params["scaling"].astype(jnp.float32))                        # (D,)

    def head_major(w, n):  # nn.Linear weight (n*D, H) -> (n, H, D)
        return jnp.transpose(w.astype(jnp.float32).reshape(n, D, H), (0, 2, 1))

    # Fold the per-dim query scale into the q projection; expand K/V weights to
    # per-query-head (GQA) so the kernel never repeats/reshapes activations.
    wq_r = head_major(params["wq"], NH) * scale[None, None, :]
    wk_r = jnp.repeat(head_major(params["wk"], NKV), qpk, axis=0)      # (NH, H, D)
    wv_r = jnp.repeat(head_major(params["wv"], NKV), qpk, axis=0)      # (NH, H, D)
    wo_r = jnp.transpose(params["wo"].astype(jnp.float32).reshape(H, NH, D), (1, 2, 0))

    bq_r = params["bq"].astype(jnp.float32).reshape(NH, 1, D) * scale[None, None, :]
    bk_r = jnp.repeat(params["bk"].astype(jnp.float32).reshape(NKV, 1, D), qpk, axis=0)
    bv_r = jnp.repeat(params["bv"].astype(jnp.float32).reshape(NKV, 1, D), qpk, axis=0)
    bo_r = params["bo"].astype(jnp.float32).reshape(1, H)

    wq_r = pad_axis(wq_r, 2, Dp).astype(jnp.bfloat16)
    wk_r = pad_axis(wk_r, 2, Dp).astype(jnp.bfloat16)
    wv_r = pad_axis(wv_r, 2, Dp).astype(jnp.bfloat16)
    wo_r = pad_axis(wo_r, 1, Dp).astype(jnp.bfloat16)
    bq_r = pad_axis(bq_r, 2, Dp)
    bk_r = pad_axis(bk_r, 2, Dp)
    bv_r = pad_axis(bv_r, 2, Dp)

    x_bf16 = hidden_states.astype(jnp.bfloat16)
    mask = mask.astype(jnp.float32)
    assert mask.ndim == 4 and mask.shape[1] == 1 and mask.shape[-2:] == (S, S)
    mask_batched = mask.shape[0] > 1

    # ---- generation-aware q-tile size and VMEM budget ----
    try:
        vmem_cap = int(getattr(pltpu.get_tpu_info(), "vmem_capacity_bytes",
                               64 * 1024 * 1024))
    except Exception:
        vmem_cap = 64 * 1024 * 1024
    # ~48 MiB on v7x (64 MiB physical), ~96 MiB on v5e/v6e (128 MiB physical).
    vmem_limit = int(min(vmem_cap * 3 // 4, 100 * 1024 * 1024))
    tq_max = 256 if vmem_cap > (64 << 20) else 128
    TQ = S
    for t in (tq_max, 128, 64, 32, 16, 8):
        if t <= S and S % t == 0:
            TQ = t
            break
    NQ = S // TQ

    kernel = functools.partial(_attention_kernel, num_heads=NH)

    def run(single_buffer_consts):
        def const_spec(shape):
            idx = lambda b, qi, _n=len(shape): (0,) * _n
            if single_buffer_consts:
                # Constant operands: fetched once, no need to double-buffer.
                return pl.BlockSpec(shape, idx, pipeline_mode=pl.Buffered(1))
            return pl.BlockSpec(shape, idx)

        mask_idx = ((lambda b, qi: (b, 0, qi, 0)) if mask_batched
                    else (lambda b, qi: (0, 0, qi, 0)))

        grid_spec = pltpu.PrefetchScalarGridSpec(
            num_scalar_prefetch=0,
            grid=(B, NQ),
            in_specs=[
                pl.BlockSpec((1, S, H), lambda b, qi: (b, 0, 0)),     # x, full seq (K/V)
                pl.BlockSpec((1, TQ, H), lambda b, qi: (b, qi, 0)),   # x, query block
                pl.BlockSpec((1, 1, TQ, S), mask_idx),                # additive mask
                const_spec((NH, H, Dp)), const_spec((NH, 1, Dp)),     # q_proj (scale folded)
                const_spec((NH, H, Dp)), const_spec((NH, 1, Dp)),     # k_proj (GQA expanded)
                const_spec((NH, H, Dp)), const_spec((NH, 1, Dp)),     # v_proj (GQA expanded)
                const_spec((NH, Dp, H)), const_spec((1, H)),          # o_proj
            ],
            out_specs=(
                pl.BlockSpec((1, NH, TQ, S), lambda b, qi: (b, 0, qi, 0)),
                pl.BlockSpec((1, TQ, H), lambda b, qi: (b, qi, 0)),
            ),
            scratch_shapes=[
                pltpu.VMEM((NH, S, Dp), jnp.bfloat16),   # K scratch (per query head)
                pltpu.VMEM((NH, S, Dp), jnp.bfloat16),   # V scratch (per query head)
            ],
        )
        return pl.pallas_call(
            kernel,
            out_shape=(
                jax.ShapeDtypeStruct((B, NH, S, S), jnp.float32),   # post-softmax scores
                jax.ShapeDtypeStruct((B, S, H), jnp.float32),       # attention output
            ),
            grid_spec=grid_spec,
            compiler_params=pltpu.CompilerParams(
                # Batch axis -> megacore sharding on v7x.  The q-block axis must
                # stay "arbitrary": the K/V scratch is filled only at qi == 0, so
                # that axis cannot be split across cores.
                dimension_semantics=("parallel", "arbitrary"),
                vmem_limit_bytes=vmem_limit,
            ),
        )(x_bf16, x_bf16, mask,
          wq_r, bq_r, wk_r, bk_r, wv_r, bv_r, wo_r, bo_r)

    try:
        return run(True)
    except Exception:
        # Fallback for jax versions without BlockSpec(pipeline_mode=Buffered(1));
        # identical semantics, constants just get the default double buffer.
        return run(False)


def _reference(hidden_states, mask, params, *, num_heads, num_kv_heads, head_dim):
    """Pure-JAX f32 mirror of the PyTorch forward (kv_cache=None branch)."""
    B, S, _ = hidden_states.shape
    qpk = num_heads // num_kv_heads
    xq = hidden_states @ params["wq"].T + params["bq"]
    xk = hidden_states @ params["wk"].T + params["bk"]
    xv = hidden_states @ params["wv"].T + params["bv"]
    xq = xq.reshape(B, S, num_heads, head_dim)
    xk = xk.reshape(B, S, num_kv_heads, head_dim)
    xv = xv.reshape(B, S, num_kv_heads, head_dim)
    r_softplus_0 = 1.442695041
    scale = (r_softplus_0 / math.sqrt(head_dim)) * jax.nn.softplus(params["scaling"])
    xq = xq * scale[None, None, None, :]
    key = jnp.repeat(xk, qpk, axis=2)
    value = jnp.repeat(xv, qpk, axis=2)
    q = jnp.swapaxes(xq, 1, 2)
    k = jnp.swapaxes(key, 1, 2)
    v = jnp.swapaxes(value, 1, 2)
    scores = jnp.einsum('bhqd,bhkd->bhqk', q, k) + mask
    scores = jax.nn.softmax(scores, axis=-1)
    out = jnp.einsum('bhqk,bhkd->bhqd', scores, v)
    out = jnp.swapaxes(out, 1, 2).reshape(B, S, num_heads * head_dim)
    out = out @ params["wo"].T + params["bo"]
    return scores, out


if __name__ == "__main__":
    # Small, deterministic configuration (exercises the GQA path).
    B, S, H = 2, 8, 32
    num_heads, num_kv_heads, head_dim = 4, 2, 16
    q_size = num_heads * head_dim
    kv_size = num_kv_heads * head_dim

    key = jax.random.PRNGKey(0)
    ks = jax.random.split(key, 10)

    # PyTorch-layout parameters: Linear weight (out, in), bias (out,), scaling (D,).
    params = {
        "scaling": 0.1 * jax.random.normal(ks[0], (head_dim,), jnp.float32),
        "wq": 0.05 * jax.random.normal(ks[1], (q_size, H), jnp.float32),
        "bq": 0.01 * jax.random.normal(ks[2], (q_size,), jnp.float32),
        "wk": 0.05 * jax.random.normal(ks[3], (kv_size, H), jnp.float32),
        "bk": 0.01 * jax.random.normal(ks[4], (kv_size,), jnp.float32),
        "wv": 0.05 * jax.random.normal(ks[5], (kv_size, H), jnp.float32),
        "bv": 0.01 * jax.random.normal(ks[6], (kv_size,), jnp.float32),
        "wo": 0.05 * jax.random.normal(ks[7], (H, q_size), jnp.float32),
        "bo": 0.01 * jax.random.normal(ks[8], (H,), jnp.float32),
    }

    hidden_states = jax.random.normal(ks[9], (B, S, H), jnp.float32)

    # Causal additive mask (1, 1, S, S), broadcast over batch & heads.
    causal = jnp.tril(jnp.ones((S, S), jnp.float32))
    mask = jnp.where(causal == 1.0, 0.0, -1e9)[None, None, :, :]

    scores, output = timesfm_attention(
        hidden_states, mask, params,
        num_heads=num_heads, num_kv_heads=num_kv_heads, head_dim=head_dim,
    )
    jax.block_until_ready((scores, output))
    assert scores.shape == (B, num_heads, S, S)
    assert output.shape == (B, S, H)

    # Sanity check against the f32 pure-JAX reference (bf16 MXU inputs => loose tol).
    ref_scores, ref_output = _reference(
        hidden_states, mask, params,
        num_heads=num_heads, num_kv_heads=num_kv_heads, head_dim=head_dim,
    )
    err_s = float(jnp.max(jnp.abs(scores - ref_scores)))
    err_o = float(jnp.max(jnp.abs(output - ref_output)))
    assert err_s < 3e-2 and err_o < 3e-2, (err_s, err_o)

    print("KERNEL_OK")
</pallas_src>

<mosaic_0001>
module attributes {stable_mosaic.version = 11 : i64} {
  func.func @_attention_kernel(%arg0: i32, %arg1: i32, %arg2: memref<1x8x32xbf16, #tpu.memory_space<vmem>>, %arg3: memref<1x8x32xbf16, #tpu.memory_space<vmem>>, %arg4: memref<1x1x8x8xf32, #tpu.memory_space<vmem>>, %arg5: memref<4x32x128xbf16, #tpu.memory_space<vmem>>, %arg6: memref<4x1x128xf32, #tpu.memory_space<vmem>>, %arg7: memref<4x32x128xbf16, #tpu.memory_space<vmem>>, %arg8: memref<4x1x128xf32, #tpu.memory_space<vmem>>, %arg9: memref<4x32x128xbf16, #tpu.memory_space<vmem>>, %arg10: memref<4x1x128xf32, #tpu.memory_space<vmem>>, %arg11: memref<4x128x32xbf16, #tpu.memory_space<vmem>>, %arg12: memref<1x32xf32, #tpu.memory_space<vmem>>, %arg13: memref<1x4x8x8xf32, #tpu.memory_space<vmem>>, %arg14: memref<1x8x32xf32, #tpu.memory_space<vmem>>, %arg15: memref<4x8x128xbf16, #tpu.memory_space<vmem>>, %arg16: memref<4x8x128xbf16, #tpu.memory_space<vmem>>) attributes {dimension_semantics = [#tpu.dimension_semantics<parallel>, #tpu.dimension_semantics<arbitrary>], iteration_bounds = array<i64: 2, 1>, scalar_prefetch = 0 : i64, scratch_operands = 2 : i64, tpu.core_type = #tpu.core_type<tc>, window_params = [{transform_indices = @transform_0, window_bounds = array<i64: 1, 8, 32>}, {transform_indices = @transform_1, window_bounds = array<i64: 1, 8, 32>}, {transform_indices = @transform_2, window_bounds = array<i64: 1, 1, 8, 8>}, {pipeline_mode = #tpu.pipeline_mode<synchronous>, transform_indices = @transform_3, window_bounds = array<i64: 4, 32, 128>}, {pipeline_mode = #tpu.pipeline_mode<synchronous>, transform_indices = @transform_4, window_bounds = array<i64: 4, 1, 128>}, {pipeline_mode = #tpu.pipeline_mode<synchronous>, transform_indices = @transform_5, window_bounds = array<i64: 4, 32, 128>}, {pipeline_mode = #tpu.pipeline_mode<synchronous>, transform_indices = @transform_6, window_bounds = array<i64: 4, 1, 128>}, {pipeline_mode = #tpu.pipeline_mode<synchronous>, transform_indices = @transform_7, window_bounds = array<i64: 4, 32, 128>}, {pipeline_mode = #tpu.pipeline_mode<synchronous>, transform_indices = @transform_8, window_bounds = array<i64: 4, 1, 128>}, {pipeline_mode = #tpu.pipeline_mode<synchronous>, transform_indices = @transform_9, window_bounds = array<i64: 4, 128, 32>}, {pipeline_mode = #tpu.pipeline_mode<synchronous>, transform_indices = @transform_10, window_bounds = array<i64: 1, 32>}, {transform_indices = @transform_11, window_bounds = array<i64: 1, 4, 8, 8>}, {transform_indices = @transform_12, window_bounds = array<i64: 1, 8, 32>}]} {
    %c0_i32 = arith.constant 0 : i32
    %0 = arith.cmpi eq, %arg1, %c0_i32 : i32
    %1 = arith.extui %0 : i1 to i32
    %c0_i32_0 = arith.constant 0 : i32
    %2 = arith.cmpi ne, %1, %c0_i32_0 : i32
    scf.if %2 {
      %c0_109 = arith.constant 0 : index
      %c0_110 = arith.constant 0 : index
      %c0_111 = arith.constant 0 : index
      %146 = vector.load %arg2[%c0_109, %c0_110, %c0_111] : memref<1x8x32xbf16, #tpu.memory_space<vmem>>, vector<1x8x32xbf16>
      %147 = vector.shape_cast %146 : vector<1x8x32xbf16> to vector<8x32xbf16>
      %c0_112 = arith.constant 0 : index
      %c0_113 = arith.constant 0 : index
      %c0_114 = arith.constant 0 : index
      %148 = vector.load %arg7[%c0_112, %c0_113, %c0_114] : memref<4x32x128xbf16, #tpu.memory_space<vmem>>, vector<1x32x128xbf16>
      %149 = vector.shape_cast %148 : vector<1x32x128xbf16> to vector<32x128xbf16>
      %cst_115 = arith.constant dense<0.000000e+00> : vector<8x128xf32>
      %150 = tpu.matmul %147, %149, %cst_115 {dimension_numbers = #tpu.dot_dimension_numbers<[1], [0], [0], [1], [0, 0, 1, 1], [], []>} : vector<8x32xbf16>, vector<32x128xbf16>, vector<8x128xf32> -> vector<8x128xf32>
      %c0_116 = arith.constant 0 : index
      %c0_117 = arith.constant 0 : index
      %c0_118 = arith.constant 0 : index
      %151 = vector.load %arg8[%c0_116, %c0_117, %c0_118] : memref<4x1x128xf32, #tpu.memory_space<vmem>>, vector<1x1x128xf32>
      %152 = vector.shape_cast %151 : vector<1x1x128xf32> to vector<1x128xf32>
      %153 = vector.broadcast %152 : vector<1x128xf32> to vector<8x128xf32>
      %154 = arith.addf %150, %153 : vector<8x128xf32>
      %155 = arith.truncf %154 : vector<8x128xf32> to vector<8x128xbf16>
      %c0_119 = arith.constant 0 : index
      %c0_120 = arith.constant 0 : index
      %c0_121 = arith.constant 0 : index
      %156 = vector.load %arg15[%c0_119, %c0_120, %c0_121] : memref<4x8x128xbf16, #tpu.memory_space<vmem>>, vector<1x8x128xbf16>
      %157 = vector.shape_cast %156 : vector<1x8x128xbf16> to vector<8x128xbf16>
      %158 = vector.shape_cast %155 : vector<8x128xbf16> to vector<1x8x128xbf16>
      tpu.vector_store %arg15[%c0_119, %c0_120, %c0_121], %158 {strides = array<i32>} : memref<4x8x128xbf16, #tpu.memory_space<vmem>>, vector<1x8x128xbf16>,
      %c0_122 = arith.constant 0 : index
      %c0_123 = arith.constant 0 : index
      %c0_124 = arith.constant 0 : index
      %159 = vector.load %arg9[%c0_122, %c0_123, %c0_124] : memref<4x32x128xbf16, #tpu.memory_space<vmem>>, vector<1x32x128xbf16>
      %160 = vector.shape_cast %159 : vector<1x32x128xbf16> to vector<32x128xbf16>
      %cst_125 = arith.constant dense<0.000000e+00> : vector<8x128xf32>
      %161 = tpu.matmul %147, %160, %cst_125 {dimension_numbers = #tpu.dot_dimension_numbers<[1], [0], [0], [1], [0, 0, 1, 1], [], []>} : vector<8x32xbf16>, vector<32x128xbf16>, vector<8x128xf32> -> vector<8x128xf32>
      %c0_126 = arith.constant 0 : index
      %c0_127 = arith.constant 0 : index
      %c0_128 = arith.constant 0 : index
      %162 = vector.load %arg10[%c0_126, %c0_127, %c0_128] : memref<4x1x128xf32, #tpu.memory_space<vmem>>, vector<1x1x128xf32>
      %163 = vector.shape_cast %162 : vector<1x1x128xf32> to vector<1x128xf32>
      %164 = vector.broadcast %163 : vector<1x128xf32> to vector<8x128xf32>
      %165 = arith.addf %161, %164 : vector<8x128xf32>
      %166 = arith.truncf %165 : vector<8x128xf32> to vector<8x128xbf16>
      %c0_129 = arith.constant 0 : index
      %c0_130 = arith.constant 0 : index
      %c0_131 = arith.constant 0 : index
      %167 = vector.load %arg16[%c0_129, %c0_130, %c0_131] : memref<4x8x128xbf16, #tpu.memory_space<vmem>>, vector<1x8x128xbf16>
      %168 = vector.shape_cast %167 : vector<1x8x128xbf16> to vector<8x128xbf16>
      %169 = vector.shape_cast %166 : vector<8x128xbf16> to vector<1x8x128xbf16>
      tpu.vector_store %arg16[%c0_129, %c0_130, %c0_131], %169 {strides = array<i32>} : memref<4x8x128xbf16, #tpu.memory_space<vmem>>, vector<1x8x128xbf16>,
      %c1_132 = arith.constant 1 : index
      %c0_133 = arith.constant 0 : index
      %c0_134 = arith.constant 0 : index
      %170 = vector.load %arg7[%c1_132, %c0_133, %c0_134] : memref<4x32x128xbf16, #tpu.memory_space<vmem>>, vector<1x32x128xbf16>
      %171 = vector.shape_cast %170 : vector<1x32x128xbf16> to vector<32x128xbf16>
      %cst_135 = arith.constant dense<0.000000e+00> : vector<8x128xf32>
      %172 = tpu.matmul %147, %171, %cst_135 {dimension_numbers = #tpu.dot_dimension_numbers<[1], [0], [0], [1], [0, 0, 1, 1], [], []>} : vector<8x32xbf16>, vector<32x128xbf16>, vector<8x128xf32> -> vector<8x128xf32>
      %c1_136 = arith.constant 1 : index
      %c0_137 = arith.constant 0 : index
      %c0_138 = arith.constant 0 : index
      %173 = vector.load %arg8[%c1_136, %c0_137, %c0_138] : memref<4x1x128xf32, #tpu.memory_space<vmem>>, vector<1x1x128xf32>
      %174 = vector.shape_cast %173 : vector<1x1x128xf32> to vector<1x128xf32>
      %175 = vector.broadcast %174 : vector<1x128xf32> to vector<8x128xf32>
      %176 = arith.addf %172, %175 : vector<8x128xf32>
      %177 = arith.truncf %176 : vector<8x128xf32> to vector<8x128xbf16>
      %c1_139 = arith.constant 1 : index
      %c0_140 = arith.constant 0 : index
      %c0_141 = arith.constant 0 : index
      %178 = vector.load %arg15[%c1_139, %c0_140, %c0_141] : memref<4x8x128xbf16, #tpu.memory_space<vmem>>, vector<1x8x128xbf16>
      %179 = vector.shape_cast %178 : vector<1x8x128xbf16> to vector<8x128xbf16>
      %180 = vector.shape_cast %177 : vector<8x128xbf16> to vector<1x8x128xbf16>
      tpu.vector_store %arg15[%c1_139, %c0_140, %c0_141], %180 {strides = array<i32>} : memref<4x8x128xbf16, #tpu.memory_space<vmem>>, vector<1x8x128xbf16>,
      %c1_142 = arith.constant 1 : index
      %c0_143 = arith.constant 0 : index
      %c0_144 = arith.constant 0 : index
      %181 = vector.load %arg9[%c1_142, %c0_143, %c0_144] : memref<4x32x128xbf16, #tpu.memory_space<vmem>>, vector<1x32x128xbf16>
      %182 = vector.shape_cast %181 : vector<1x32x128xbf16> to vector<32x128xbf16>
      %cst_145 = arith.constant dense<0.000000e+00> : vector<8x128xf32>
      %183 = tpu.matmul %147, %182, %cst_145 {dimension_numbers = #tpu.dot_dimension_numbers<[1], [0], [0], [1], [0, 0, 1, 1], [], []>} : vector<8x32xbf16>, vector<32x128xbf16>, vector<8x128xf32> -> vector<8x128xf32>
      %c1_146 = arith.constant 1 : index
      %c0_147 = arith.constant 0 : index
      %c0_148 = arith.constant 0 : index
      %184 = vector.load %arg10[%c1_146, %c0_147, %c0_148] : memref<4x1x128xf32, #tpu.memory_space<vmem>>, vector<1x1x128xf32>
      %185 = vector.shape_cast %184 : vector<1x1x128xf32> to vector<1x128xf32>
      %186 = vector.broadcast %185 : vector<1x128xf32> to vector<8x128xf32>
      %187 = arith.addf %183, %186 : vector<8x128xf32>
      %188 = arith.truncf %187 : vector<8x128xf32> to vector<8x128xbf16>
      %c1_149 = arith.constant 1 : index
      %c0_150 = arith.constant 0 : index
      %c0_151 = arith.constant 0 : index
      %189 = vector.load %arg16[%c1_149, %c0_150, %c0_151] : memref<4x8x128xbf16, #tpu.memory_space<vmem>>, vector<1x8x128xbf16>
      %190 = vector.shape_cast %189 : vector<1x8x128xbf16> to vector<8x128xbf16>
      %191 = vector.shape_cast %188 : vector<8x128xbf16> to vector<1x8x128xbf16>
      tpu.vector_store %arg16[%c1_149, %c0_150, %c0_151], %191 {strides = array<i32>} : memref<4x8x128xbf16, #tpu.memory_space<vmem>>, vector<1x8x128xbf16>,
      %c2_152 = arith.constant 2 : index
      %c0_153 = arith.constant 0 : index
      %c0_154 = arith.constant 0 : index
      %192 = vector.load %arg7[%c2_152, %c0_153, %c0_154] : memref<4x32x128xbf16, #tpu.memory_space<vmem>>, vector<1x32x128xbf16>
      %193 = vector.shape_cast %192 : vector<1x32x128xbf16> to vector<32x128xbf16>
      %cst_155 = arith.constant dense<0.000000e+00> : vector<8x128xf32>
      %194 = tpu.matmul %147, %193, %cst_155 {dimension_numbers = #tpu.dot_dimension_numbers<[1], [0], [0], [1], [0, 0, 1, 1], [], []>} : vector<8x32xbf16>, vector<32x128xbf16>, vector<8x128xf32> -> vector<8x128xf32>
      %c2_156 = arith.constant 2 : index
      %c0_157 = arith.constant 0 : index
      %c0_158 = arith.constant 0 : index
      %195 = vector.load %arg8[%c2_156, %c0_157, %c0_158] : memref<4x1x128xf32, #tpu.memory_space<vmem>>, vector<1x1x128xf32>
      %196 = vector.shape_cast %195 : vector<1x1x128xf32> to vector<1x128xf32>
      %197 = vector.broadcast %196 : vector<1x128xf32> to vector<8x128xf32>
      %198 = arith.addf %194, %197 : vector<8x128xf32>
      %199 = arith.truncf %198 : vector<8x128xf32> to vector<8x128xbf16>
      %c2_159 = arith.constant 2 : index
      %c0_160 = arith.constant 0 : index
      %c0_161 = arith.constant 0 : index
      %200 = vector.load %arg15[%c2_159, %c0_160, %c0_161] : memref<4x8x128xbf16, #tpu.memory_space<vmem>>, vector<1x8x128xbf16>
      %201 = vector.shape_cast %200 : vector<1x8x128xbf16> to vector<8x128xbf16>
      %202 = vector.shape_cast %199 : vector<8x128xbf16> to vector<1x8x128xbf16>
      tpu.vector_store %arg15[%c2_159, %c0_160, %c0_161], %202 {strides = array<i32>} : memref<4x8x128xbf16, #tpu.memory_space<vmem>>, vector<1x8x128xbf16>,
      %c2_162 = arith.constant 2 : index
      %c0_163 = arith.constant 0 : index
      %c0_164 = arith.constant 0 : index
      %203 = vector.load %arg9[%c2_162, %c0_163, %c0_164] : memref<4x32x128xbf16, #tpu.memory_space<vmem>>, vector<1x32x128xbf16>
      %204 = vector.shape_cast %203 : vector<1x32x128xbf16> to vector<32x128xbf16>
      %cst_165 = arith.constant dense<0.000000e+00> : vector<8x128xf32>
      %205 = tpu.matmul %147, %204, %cst_165 {dimension_numbers = #tpu.dot_dimension_numbers<[1], [0], [0], [1], [0, 0, 1, 1], [], []>} : vector<8x32xbf16>, vector<32x128xbf16>, vector<8x128xf32> -> vector<8x128xf32>
      %c2_166 = arith.constant 2 : index
      %c0_167 = arith.constant 0 : index
      %c0_168 = arith.constant 0 : index
      %206 = vector.load %arg10[%c2_166, %c0_167, %c0_168] : memref<4x1x128xf32, #tpu.memory_space<vmem>>, vector<1x1x128xf32>
      %207 = vector.shape_cast %206 : vector<1x1x128xf32> to vector<1x128xf32>
      %208 = vector.broadcast %207 : vector<1x128xf32> to vector<8x128xf32>
      %209 = arith.addf %205, %208 : vector<8x128xf32>
      %210 = arith.truncf %209 : vector<8x128xf32> to vector<8x128xbf16>
      %c2_169 = arith.constant 2 : index
      %c0_170 = arith.constant 0 : index
      %c0_171 = arith.constant 0 : index
      %211 = vector.load %arg16[%c2_169, %c0_170, %c0_171] : memref<4x8x128xbf16, #tpu.memory_space<vmem>>, vector<1x8x128xbf16>
      %212 = vector.shape_cast %211 : vector<1x8x128xbf16> to vector<8x128xbf16>
      %213 = vector.shape_cast %210 : vector<8x128xbf16> to vector<1x8x128xbf16>
      tpu.vector_store %arg16[%c2_169, %c0_170, %c0_171], %213 {strides = array<i32>} : memref<4x8x128xbf16, #tpu.memory_space<vmem>>, vector<1x8x128xbf16>,
      %c3_172 = arith.constant 3 : index
      %c0_173 = arith.constant 0 : index
      %c0_174 = arith.constant 0 : index
      %214 = vector.load %arg7[%c3_172, %c0_173, %c0_174] : memref<4x32x128xbf16, #tpu.memory_space<vmem>>, vector<1x32x128xbf16>
      %215 = vector.shape_cast %214 : vector<1x32x128xbf16> to vector<32x128xbf16>
      %cst_175 = arith.constant dense<0.000000e+00> : vector<8x128xf32>
      %216 = tpu.matmul %147, %215, %cst_175 {dimension_numbers = #tpu.dot_dimension_numbers<[1], [0], [0], [1], [0, 0, 1, 1], [], []>} : vector<8x32xbf16>, vector<32x128xbf16>, vector<8x128xf32> -> vector<8x128xf32>
      %c3_176 = arith.constant 3 : index
      %c0_177 = arith.constant 0 : index
      %c0_178 = arith.constant 0 : index
      %217 = vector.load %arg8[%c3_176, %c0_177, %c0_178] : memref<4x1x128xf32, #tpu.memory_space<vmem>>, vector<1x1x128xf32>
      %218 = vector.shape_cast %217 : vector<1x1x128xf32> to vector<1x128xf32>
      %219 = vector.broadcast %218 : vector<1x128xf32> to vector<8x128xf32>
      %220 = arith.addf %216, %219 : vector<8x128xf32>
      %221 = arith.truncf %220 : vector<8x128xf32> to vector<8x128xbf16>
      %c3_179 = arith.constant 3 : index
      %c0_180 = arith.constant 0 : index
      %c0_181 = arith.constant 0 : index
      %222 = vector.load %arg15[%c3_179, %c0_180, %c0_181] : memref<4x8x128xbf16, #tpu.memory_space<vmem>>, vector<1x8x128xbf16>
      %223 = vector.shape_cast %222 : vector<1x8x128xbf16> to vector<8x128xbf16>
      %224 = vector.shape_cast %221 : vector<8x128xbf16> to vector<1x8x128xbf16>
      tpu.vector_store %arg15[%c3_179, %c0_180, %c0_181], %224 {strides = array<i32>} : memref<4x8x128xbf16, #tpu.memory_space<vmem>>, vector<1x8x128xbf16>,
      %c3_182 = arith.constant 3 : index
      %c0_183 = arith.constant 0 : index
      %c0_184 = arith.constant 0 : index
      %225 = vector.load %arg9[%c3_182, %c0_183, %c0_184] : memref<4x32x128xbf16, #tpu.memory_space<vmem>>, vector<1x32x128xbf16>
      %226 = vector.shape_cast %225 : vector<1x32x128xbf16> to vector<32x128xbf16>
      %cst_185 = arith.constant dense<0.000000e+00> : vector<8x128xf32>
      %227 = tpu.matmul %147, %226, %cst_185 {dimension_numbers = #tpu.dot_dimension_numbers<[1], [0], [0], [1], [0, 0, 1, 1], [], []>} : vector<8x32xbf16>, vector<32x128xbf16>, vector<8x128xf32> -> vector<8x128xf32>
      %c3_186 = arith.constant 3 : index
      %c0_187 = arith.constant 0 : index
      %c0_188 = arith.constant 0 : index
      %228 = vector.load %arg10[%c3_186, %c0_187, %c0_188] : memref<4x1x128xf32, #tpu.memory_space<vmem>>, vector<1x1x128xf32>
      %229 = vector.shape_cast %228 : vector<1x1x128xf32> to vector<1x128xf32>
      %230 = vector.broadcast %229 : vector<1x128xf32> to vector<8x128xf32>
      %231 = arith.addf %227, %230 : vector<8x128xf32>
      %232 = arith.truncf %231 : vector<8x128xf32> to vector<8x128xbf16>
      %c3_189 = arith.constant 3 : index
      %c0_190 = arith.constant 0 : index
      %c0_191 = arith.constant 0 : index
      %233 = vector.load %arg16[%c3_189, %c0_190, %c0_191] : memref<4x8x128xbf16, #tpu.memory_space<vmem>>, vector<1x8x128xbf16>
      %234 = vector.shape_cast %233 : vector<1x8x128xbf16> to vector<8x128xbf16>
      %235 = vector.shape_cast %232 : vector<8x128xbf16> to vector<1x8x128xbf16>
      tpu.vector_store %arg16[%c3_189, %c0_190, %c0_191], %235 {strides = array<i32>} : memref<4x8x128xbf16, #tpu.memory_space<vmem>>, vector<1x8x128xbf16>,
    } else {
    }
    %c0 = arith.constant 0 : index
    %c0_1 = arith.constant 0 : index
    %c0_2 = arith.constant 0 : index
    %3 = vector.load %arg3[%c0, %c0_1, %c0_2] : memref<1x8x32xbf16, #tpu.memory_space<vmem>>, vector<1x8x32xbf16>
    %4 = vector.shape_cast %3 : vector<1x8x32xbf16> to vector<8x32xbf16>
    %c0_3 = arith.constant 0 : index
    %c0_4 = arith.constant 0 : index
    %c0_5 = arith.constant 0 : index
    %c0_6 = arith.constant 0 : index
    %5 = vector.load %arg4[%c0_3, %c0_4, %c0_5, %c0_6] : memref<1x1x8x8xf32, #tpu.memory_space<vmem>>, vector<1x1x8x8xf32>
    %6 = vector.shape_cast %5 : vector<1x1x8x8xf32> to vector<8x8xf32>
    %c0_7 = arith.constant 0 : index
    %c0_8 = arith.constant 0 : index
    %7 = vector.load %arg12[%c0_7, %c0_8] : memref<1x32xf32, #tpu.memory_space<vmem>>, vector<1x32xf32>
    %cst = arith.constant 0.000000e+00 : f32
    %8 = vector.broadcast %cst : f32 to vector<8x32xf32>
    %c0_9 = arith.constant 0 : index
    %c0_10 = arith.constant 0 : index
    %c0_11 = arith.constant 0 : index
    %9 = vector.load %arg5[%c0_9, %c0_10, %c0_11] : memref<4x32x128xbf16, #tpu.memory_space<vmem>>, vector<1x32x128xbf16>
    %10 = vector.shape_cast %9 : vector<1x32x128xbf16> to vector<32x128xbf16>
    %cst_12 = arith.constant dense<0.000000e+00> : vector<8x128xf32>
    %11 = tpu.matmul %4, %10, %cst_12 {dimension_numbers = #tpu.dot_dimension_numbers<[1], [0], [0], [1], [0, 0, 1, 1], [], []>} : vector<8x32xbf16>, vector<32x128xbf16>, vector<8x128xf32> -> vector<8x128xf32>
    %c0_13 = arith.constant 0 : index
    %c0_14 = arith.constant 0 : index
    %c0_15 = arith.constant 0 : index
    %12 = vector.load %arg6[%c0_13, %c0_14, %c0_15] : memref<4x1x128xf32, #tpu.memory_space<vmem>>, vector<1x1x128xf32>
    %13 = vector.shape_cast %12 : vector<1x1x128xf32> to vector<1x128xf32>
    %14 = vector.broadcast %13 : vector<1x128xf32> to vector<8x128xf32>
    %15 = arith.addf %11, %14 : vector<8x128xf32>
    %16 = arith.truncf %15 : vector<8x128xf32> to vector<8x128xbf16>
    %c0_16 = arith.constant 0 : index
    %c0_17 = arith.constant 0 : index
    %c0_18 = arith.constant 0 : index
    %17 = vector.load %arg15[%c0_16, %c0_17, %c0_18] : memref<4x8x128xbf16, #tpu.memory_space<vmem>>, vector<1x8x128xbf16>
    %18 = vector.shape_cast %17 : vector<1x8x128xbf16> to vector<8x128xbf16>
    %cst_19 = arith.constant dense<0.000000e+00> : vector<8x8xf32>
    %19 = tpu.matmul %16, %18, %cst_19 {dimension_numbers = #tpu.dot_dimension_numbers<[1], [1], [0], [0], [0, 0, 1, 0], [], []>} : vector<8x128xbf16>, vector<8x128xbf16>, vector<8x8xf32> -> vector<8x8xf32>
    %20 = arith.addf %19, %6 : vector<8x8xf32>
    %cst_20 = arith.constant dense<0xFF800000> : vector<8xf32>
    %21 = vector.multi_reduction <maximumf>, %20, %cst_20 [1] : vector<8x8xf32> to vector<8xf32>
    %22 = vector.shape_cast %21 : vector<8xf32> to vector<8x1xf32>
    %23 = vector.broadcast %22 : vector<8x1xf32> to vector<8x8xf32>
    %24 = arith.subf %20, %23 : vector<8x8xf32>
    %25 = math.exp %24 : vector<8x8xf32>
    %cst_21 = arith.constant dense<0.000000e+00> : vector<8xf32>
    %26 = vector.multi_reduction <add>, %25, %cst_21 [1] : vector<8x8xf32> to vector<8xf32>
    %27 = vector.shape_cast %26 : vector<8xf32> to vector<8x1xf32>
    %28 = vector.broadcast %27 : vector<8x1xf32> to vector<8x8xf32>
    %29 = arith.divf %25, %28 : vector<8x8xf32>
    %c0_22 = arith.constant 0 : index
    %c0_23 = arith.constant 0 : index
    %c0_24 = arith.constant 0 : index
    %c0_25 = arith.constant 0 : index
    %30 = vector.load %arg13[%c0_22, %c0_23, %c0_24, %c0_25] : memref<1x4x8x8xf32, #tpu.memory_space<vmem>>, vector<1x1x8x8xf32>
    %31 = vector.shape_cast %30 : vector<1x1x8x8xf32> to vector<8x8xf32>
    %32 = vector.shape_cast %29 : vector<8x8xf32> to vector<1x1x8x8xf32>
    tpu.vector_store %arg13[%c0_22, %c0_23, %c0_24, %c0_25], %32 {strides = array<i32>} : memref<1x4x8x8xf32, #tpu.memory_space<vmem>>, vector<1x1x8x8xf32>,
    %33 = arith.truncf %29 : vector<8x8xf32> to vector<8x8xbf16>
    %c0_26 = arith.constant 0 : index
    %c0_27 = arith.constant 0 : index
    %c0_28 = arith.constant 0 : index
    %34 = vector.load %arg16[%c0_26, %c0_27, %c0_28] : memref<4x8x128xbf16, #tpu.memory_space<vmem>>, vector<1x8x128xbf16>
    %35 = vector.shape_cast %34 : vector<1x8x128xbf16> to vector<8x128xbf16>
    %cst_29 = arith.constant dense<0.000000e+00> : vector<8x128xf32>
    %36 = tpu.matmul %33, %35, %cst_29 {dimension_numbers = #tpu.dot_dimension_numbers<[1], [0], [0], [1], [0, 0, 1, 1], [], []>} : vector<8x8xbf16>, vector<8x128xbf16>, vector<8x128xf32> -> vector<8x128xf32>
    %37 = arith.truncf %36 : vector<8x128xf32> to vector<8x128xbf16>
    %c0_30 = arith.constant 0 : index
    %c0_31 = arith.constant 0 : index
    %c0_32 = arith.constant 0 : index
    %38 = vector.load %arg11[%c0_30, %c0_31, %c0_32] : memref<4x128x32xbf16, #tpu.memory_space<vmem>>, vector<1x128x32xbf16>
    %39 = vector.shape_cast %38 : vector<1x128x32xbf16> to vector<128x32xbf16>
    %cst_33 = arith.constant dense<0.000000e+00> : vector<8x32xf32>
    %40 = tpu.matmul %37, %39, %cst_33 {dimension_numbers = #tpu.dot_dimension_numbers<[1], [0], [0], [1], [0, 0, 1, 1], [], []>} : vector<8x128xbf16>, vector<128x32xbf16>, vector<8x32xf32> -> vector<8x32xf32>
    %41 = arith.addf %8, %40 : vector<8x32xf32>
    %c1 = arith.constant 1 : index
    %c0_34 = arith.constant 0 : index
    %c0_35 = arith.constant 0 : index
    %42 = vector.load %arg5[%c1, %c0_34, %c0_35] : memref<4x32x128xbf16, #tpu.memory_space<vmem>>, vector<1x32x128xbf16>
    %43 = vector.shape_cast %42 : vector<1x32x128xbf16> to vector<32x128xbf16>
    %cst_36 = arith.constant dense<0.000000e+00> : vector<8x128xf32>
    %44 = tpu.matmul %4, %43, %cst_36 {dimension_numbers = #tpu.dot_dimension_numbers<[1], [0], [0], [1], [0, 0, 1, 1], [], []>} : vector<8x32xbf16>, vector<32x128xbf16>, vector<8x128xf32> -> vector<8x128xf32>
    %c1_37 = arith.constant 1 : index
    %c0_38 = arith.constant 0 : index
    %c0_39 = arith.constant 0 : index
    %45 = vector.load %arg6[%c1_37, %c0_38, %c0_39] : memref<4x1x128xf32, #tpu.memory_space<vmem>>, vector<1x1x128xf32>
    %46 = vector.shape_cast %45 : vector<1x1x128xf32> to vector<1x128xf32>
    %47 = vector.broadcast %46 : vector<1x128xf32> to vector<8x128xf32>
    %48 = arith.addf %44, %47 : vector<8x128xf32>
    %49 = arith.truncf %48 : vector<8x128xf32> to vector<8x128xbf16>
    %c1_40 = arith.constant 1 : index
    %c0_41 = arith.constant 0 : index
    %c0_42 = arith.constant 0 : index
    %50 = vector.load %arg15[%c1_40, %c0_41, %c0_42] : memref<4x8x128xbf16, #tpu.memory_space<vmem>>, vector<1x8x128xbf16>
    %51 = vector.shape_cast %50 : vector<1x8x128xbf16> to vector<8x128xbf16>
    %cst_43 = arith.constant dense<0.000000e+00> : vector<8x8xf32>
    %52 = tpu.matmul %49, %51, %cst_43 {dimension_numbers = #tpu.dot_dimension_numbers<[1], [1], [0], [0], [0, 0, 1, 0], [], []>} : vector<8x128xbf16>, vector<8x128xbf16>, vector<8x8xf32> -> vector<8x8xf32>
    %53 = arith.addf %52, %6 : vector<8x8xf32>
    %cst_44 = arith.constant dense<0xFF800000> : vector<8xf32>
    %54 = vector.multi_reduction <maximumf>, %53, %cst_44 [1] : vector<8x8xf32> to vector<8xf32>
    %55 = vector.shape_cast %54 : vector<8xf32> to vector<8x1xf32>
    %56 = vector.broadcast %55 : vector<8x1xf32> to vector<8x8xf32>
    %57 = arith.subf %53, %56 : vector<8x8xf32>
    %58 = math.exp %57 : vector<8x8xf32>
    %cst_45 = arith.constant dense<0.000000e+00> : vector<8xf32>
    %59 = vector.multi_reduction <add>, %58, %cst_45 [1] : vector<8x8xf32> to vector<8xf32>
    %60 = vector.shape_cast %59 : vector<8xf32> to vector<8x1xf32>
    %61 = vector.broadcast %60 : vector<8x1xf32> to vector<8x8xf32>
    %62 = arith.divf %58, %61 : vector<8x8xf32>
    %c0_46 = arith.constant 0 : index
    %c1_47 = arith.constant 1 : index
    %c0_48 = arith.constant 0 : index
    %c0_49 = arith.constant 0 : index
    %63 = vector.load %arg13[%c0_46, %c1_47, %c0_48, %c0_49] : memref<1x4x8x8xf32, #tpu.memory_space<vmem>>, vector<1x1x8x8xf32>
    %64 = vector.shape_cast %63 : vector<1x1x8x8xf32> to vector<8x8xf32>
    %65 = vector.shape_cast %62 : vector<8x8xf32> to vector<1x1x8x8xf32>
    tpu.vector_store %arg13[%c0_46, %c1_47, %c0_48, %c0_49], %65 {strides = array<i32>} : memref<1x4x8x8xf32, #tpu.memory_space<vmem>>, vector<1x1x8x8xf32>,
    %66 = arith.truncf %62 : vector<8x8xf32> to vector<8x8xbf16>
    %c1_50 = arith.constant 1 : index
    %c0_51 = arith.constant 0 : index
    %c0_52 = arith.constant 0 : index
    %67 = vector.load %arg16[%c1_50, %c0_51, %c0_52] : memref<4x8x128xbf16, #tpu.memory_space<vmem>>, vector<1x8x128xbf16>
    %68 = vector.shape_cast %67 : vector<1x8x128xbf16> to vector<8x128xbf16>
    %cst_53 = arith.constant dense<0.000000e+00> : vector<8x128xf32>
    %69 = tpu.matmul %66, %68, %cst_53 {dimension_numbers = #tpu.dot_dimension_numbers<[1], [0], [0], [1], [0, 0, 1, 1], [], []>} : vector<8x8xbf16>, vector<8x128xbf16>, vector<8x128xf32> -> vector<8x128xf32>
    %70 = arith.truncf %69 : vector<8x128xf32> to vector<8x128xbf16>
    %c1_54 = arith.constant 1 : index
    %c0_55 = arith.constant 0 : index
    %c0_56 = arith.constant 0 : index
    %71 = vector.load %arg11[%c1_54, %c0_55, %c0_56] : memref<4x128x32xbf16, #tpu.memory_space<vmem>>, vector<1x128x32xbf16>
    %72 = vector.shape_cast %71 : vector<1x128x32xbf16> to vector<128x32xbf16>
    %cst_57 = arith.constant dense<0.000000e+00> : vector<8x32xf32>
    %73 = tpu.matmul %70, %72, %cst_57 {dimension_numbers = #tpu.dot_dimension_numbers<[1], [0], [0], [1], [0, 0, 1, 1], [], []>} : vector<8x128xbf16>, vector<128x32xbf16>, vector<8x32xf32> -> vector<8x32xf32>
    %74 = arith.addf %41, %73 : vector<8x32xf32>
    %c2 = arith.constant 2 : index
    %c0_58 = arith.constant 0 : index
    %c0_59 = arith.constant 0 : index
    %75 = vector.load %arg5[%c2, %c0_58, %c0_59] : memref<4x32x128xbf16, #tpu.memory_space<vmem>>, vector<1x32x128xbf16>
    %76 = vector.shape_cast %75 : vector<1x32x128xbf16> to vector<32x128xbf16>
    %cst_60 = arith.constant dense<0.000000e+00> : vector<8x128xf32>
    %77 = tpu.matmul %4, %76, %cst_60 {dimension_numbers = #tpu.dot_dimension_numbers<[1], [0], [0], [1], [0, 0, 1, 1], [], []>} : vector<8x32xbf16>, vector<32x128xbf16>, vector<8x128xf32> -> vector<8x128xf32>
    %c2_61 = arith.constant 2 : index
    %c0_62 = arith.constant 0 : index
    %c0_63 = arith.constant 0 : index
    %78 = vector.load %arg6[%c2_61, %c0_62, %c0_63] : memref<4x1x128xf32, #tpu.memory_space<vmem>>, vector<1x1x128xf32>
    %79 = vector.shape_cast %78 : vector<1x1x128xf32> to vector<1x128xf32>
    %80 = vector.broadcast %79 : vector<1x128xf32> to vector<8x128xf32>
    %81 = arith.addf %77, %80 : vector<8x128xf32>
    %82 = arith.truncf %81 : vector<8x128xf32> to vector<8x128xbf16>
    %c2_64 = arith.constant 2 : index
    %c0_65 = arith.constant 0 : index
    %c0_66 = arith.constant 0 : index
    %83 = vector.load %arg15[%c2_64, %c0_65, %c0_66] : memref<4x8x128xbf16, #tpu.memory_space<vmem>>, vector<1x8x128xbf16>
    %84 = vector.shape_cast %83 : vector<1x8x128xbf16> to vector<8x128xbf16>
    %cst_67 = arith.constant dense<0.000000e+00> : vector<8x8xf32>
    %85 = tpu.matmul %82, %84, %cst_67 {dimension_numbers = #tpu.dot_dimension_numbers<[1], [1], [0], [0], [0, 0, 1, 0], [], []>} : vector<8x128xbf16>, vector<8x128xbf16>, vector<8x8xf32> -> vector<8x8xf32>
    %86 = arith.addf %85, %6 : vector<8x8xf32>
    %cst_68 = arith.constant dense<0xFF800000> : vector<8xf32>
    %87 = vector.multi_reduction <maximumf>, %86, %cst_68 [1] : vector<8x8xf32> to vector<8xf32>
    %88 = vector.shape_cast %87 : vector<8xf32> to vector<8x1xf32>
    %89 = vector.broadcast %88 : vector<8x1xf32> to vector<8x8xf32>
    %90 = arith.subf %86, %89 : vector<8x8xf32>
    %91 = math.exp %90 : vector<8x8xf32>
    %cst_69 = arith.constant dense<0.000000e+00> : vector<8xf32>
    %92 = vector.multi_reduction <add>, %91, %cst_69 [1] : vector<8x8xf32> to vector<8xf32>
    %93 = vector.shape_cast %92 : vector<8xf32> to vector<8x1xf32>
    %94 = vector.broadcast %93 : vector<8x1xf32> to vector<8x8xf32>
    %95 = arith.divf %91, %94 : vector<8x8xf32>
    %c0_70 = arith.constant 0 : index
    %c2_71 = arith.constant 2 : index
    %c0_72 = arith.constant 0 : index
    %c0_73 = arith.constant 0 : index
    %96 = vector.load %arg13[%c0_70, %c2_71, %c0_72, %c0_73] : memref<1x4x8x8xf32, #tpu.memory_space<vmem>>, vector<1x1x8x8xf32>
    %97 = vector.shape_cast %96 : vector<1x1x8x8xf32> to vector<8x8xf32>
    %98 = vector.shape_cast %95 : vector<8x8xf32> to vector<1x1x8x8xf32>
    tpu.vector_store %arg13[%c0_70, %c2_71, %c0_72, %c0_73], %98 {strides = array<i32>} : memref<1x4x8x8xf32, #tpu.memory_space<vmem>>, vector<1x1x8x8xf32>,
    %99 = arith.truncf %95 : vector<8x8xf32> to vector<8x8xbf16>
    %c2_74 = arith.constant 2 : index
    %c0_75 = arith.constant 0 : index
    %c0_76 = arith.constant 0 : index
    %100 = vector.load %arg16[%c2_74, %c0_75, %c0_76] : memref<4x8x128xbf16, #tpu.memory_space<vmem>>, vector<1x8x128xbf16>
    %101 = vector.shape_cast %100 : vector<1x8x128xbf16> to vector<8x128xbf16>
    %cst_77 = arith.constant dense<0.000000e+00> : vector<8x128xf32>
    %102 = tpu.matmul %99, %101, %cst_77 {dimension_numbers = #tpu.dot_dimension_numbers<[1], [0], [0], [1], [0, 0, 1, 1], [], []>} : vector<8x8xbf16>, vector<8x128xbf16>, vector<8x128xf32> -> vector<8x128xf32>
    %103 = arith.truncf %102 : vector<8x128xf32> to vector<8x128xbf16>
    %c2_78 = arith.constant 2 : index
    %c0_79 = arith.constant 0 : index
    %c0_80 = arith.constant 0 : index
    %104 = vector.load %arg11[%c2_78, %c0_79, %c0_80] : memref<4x128x32xbf16, #tpu.memory_space<vmem>>, vector<1x128x32xbf16>
    %105 = vector.shape_cast %104 : vector<1x128x32xbf16> to vector<128x32xbf16>
    %cst_81 = arith.constant dense<0.000000e+00> : vector<8x32xf32>
    %106 = tpu.matmul %103, %105, %cst_81 {dimension_numbers = #tpu.dot_dimension_numbers<[1], [0], [0], [1], [0, 0, 1, 1], [], []>} : vector<8x128xbf16>, vector<128x32xbf16>, vector<8x32xf32> -> vector<8x32xf32>
    %107 = arith.addf %74, %106 : vector<8x32xf32>
    %c3 = arith.constant 3 : index
    %c0_82 = arith.constant 0 : index
    %c0_83 = arith.constant 0 : index
    %108 = vector.load %arg5[%c3, %c0_82, %c0_83] : memref<4x32x128xbf16, #tpu.memory_space<vmem>>, vector<1x32x128xbf16>
    %109 = vector.shape_cast %108 : vector<1x32x128xbf16> to vector<32x128xbf16>
    %cst_84 = arith.constant dense<0.000000e+00> : vector<8x128xf32>
    %110 = tpu.matmul %4, %109, %cst_84 {dimension_numbers = #tpu.dot_dimension_numbers<[1], [0], [0], [1], [0, 0, 1, 1], [], []>} : vector<8x32xbf16>, vector<32x128xbf16>, vector<8x128xf32> -> vector<8x128xf32>
    %c3_85 = arith.constant 3 : index
    %c0_86 = arith.constant 0 : index
    %c0_87 = arith.constant 0 : index
    %111 = vector.load %arg6[%c3_85, %c0_86, %c0_87] : memref<4x1x128xf32, #tpu.memory_space<vmem>>, vector<1x1x128xf32>
    %112 = vector.shape_cast %111 : vector<1x1x128xf32> to vector<1x128xf32>
    %113 = vector.broadcast %112 : vector<1x128xf32> to vector<8x128xf32>
    %114 = arith.addf %110, %113 : vector<8x128xf32>
    %115 = arith.truncf %114 : vector<8x128xf32> to vector<8x128xbf16>
    %c3_88 = arith.constant 3 : index
    %c0_89 = arith.constant 0 : index
    %c0_90 = arith.constant 0 : index
    %116 = vector.load %arg15[%c3_88, %c0_89, %c0_90] : memref<4x8x128xbf16, #tpu.memory_space<vmem>>, vector<1x8x128xbf16>
    %117 = vector.shape_cast %116 : vector<1x8x128xbf16> to vector<8x128xbf16>
    %cst_91 = arith.constant dense<0.000000e+00> : vector<8x8xf32>
    %118 = tpu.matmul %115, %117, %cst_91 {dimension_numbers = #tpu.dot_dimension_numbers<[1], [1], [0], [0], [0, 0, 1, 0], [], []>} : vector<8x128xbf16>, vector<8x128xbf16>, vector<8x8xf32> -> vector<8x8xf32>
    %119 = arith.addf %118, %6 : vector<8x8xf32>
    %cst_92 = arith.constant dense<0xFF800000> : vector<8xf32>
    %120 = vector.multi_reduction <maximumf>, %119, %cst_92 [1] : vector<8x8xf32> to vector<8xf32>
    %121 = vector.shape_cast %120 : vector<8xf32> to vector<8x1xf32>
    %122 = vector.broadcast %121 : vector<8x1xf32> to vector<8x8xf32>
    %123 = arith.subf %119, %122 : vector<8x8xf32>
    %124 = math.exp %123 : vector<8x8xf32>
    %cst_93 = arith.constant dense<0.000000e+00> : vector<8xf32>
    %125 = vector.multi_reduction <add>, %124, %cst_93 [1] : vector<8x8xf32> to vector<8xf32>
    %126 = vector.shape_cast %125 : vector<8xf32> to vector<8x1xf32>
    %127 = vector.broadcast %126 : vector<8x1xf32> to vector<8x8xf32>
    %128 = arith.divf %124, %127 : vector<8x8xf32>
    %c0_94 = arith.constant 0 : index
    %c3_95 = arith.constant 3 : index
    %c0_96 = arith.constant 0 : index
    %c0_97 = arith.constant 0 : index
    %129 = vector.load %arg13[%c0_94, %c3_95, %c0_96, %c0_97] : memref<1x4x8x8xf32, #tpu.memory_space<vmem>>, vector<1x1x8x8xf32>
    %130 = vector.shape_cast %129 : vector<1x1x8x8xf32> to vector<8x8xf32>
    %131 = vector.shape_cast %128 : vector<8x8xf32> to vector<1x1x8x8xf32>
    tpu.vector_store %arg13[%c0_94, %c3_95, %c0_96, %c0_97], %131 {strides = array<i32>} : memref<1x4x8x8xf32, #tpu.memory_space<vmem>>, vector<1x1x8x8xf32>,
    %132 = arith.truncf %128 : vector<8x8xf32> to vector<8x8xbf16>
    %c3_98 = arith.constant 3 : index
    %c0_99 = arith.constant 0 : index
    %c0_100 = arith.constant 0 : index
    %133 = vector.load %arg16[%c3_98, %c0_99, %c0_100] : memref<4x8x128xbf16, #tpu.memory_space<vmem>>, vector<1x8x128xbf16>
    %134 = vector.shape_cast %133 : vector<1x8x128xbf16> to vector<8x128xbf16>
    %cst_101 = arith.constant dense<0.000000e+00> : vector<8x128xf32>
    %135 = tpu.matmul %132, %134, %cst_101 {dimension_numbers = #tpu.dot_dimension_numbers<[1], [0], [0], [1], [0, 0, 1, 1], [], []>} : vector<8x8xbf16>, vector<8x128xbf16>, vector<8x128xf32> -> vector<8x128xf32>
    %136 = arith.truncf %135 : vector<8x128xf32> to vector<8x128xbf16>
    %c3_102 = arith.constant 3 : index
    %c0_103 = arith.constant 0 : index
    %c0_104 = arith.constant 0 : index
    %137 = vector.load %arg11[%c3_102, %c0_103, %c0_104] : memref<4x128x32xbf16, #tpu.memory_space<vmem>>, vector<1x128x32xbf16>
    %138 = vector.shape_cast %137 : vector<1x128x32xbf16> to vector<128x32xbf16>
    %cst_105 = arith.constant dense<0.000000e+00> : vector<8x32xf32>
    %139 = tpu.matmul %136, %138, %cst_105 {dimension_numbers = #tpu.dot_dimension_numbers<[1], [0], [0], [1], [0, 0, 1, 1], [], []>} : vector<8x128xbf16>, vector<128x32xbf16>, vector<8x32xf32> -> vector<8x32xf32>
    %140 = arith.addf %107, %139 : vector<8x32xf32>
    %141 = vector.broadcast %7 : vector<1x32xf32> to vector<8x32xf32>
    %142 = arith.addf %140, %141 : vector<8x32xf32>
    %c0_106 = arith.constant 0 : index
    %c0_107 = arith.constant 0 : index
    %c0_108 = arith.constant 0 : index
    %143 = vector.load %arg14[%c0_106, %c0_107, %c0_108] : memref<1x8x32xf32, #tpu.memory_space<vmem>>, vector<1x8x32xf32>
    %144 = vector.shape_cast %143 : vector<1x8x32xf32> to vector<8x32xf32>
    %145 = vector.shape_cast %142 : vector<8x32xf32> to vector<1x8x32xf32>
    tpu.vector_store %arg14[%c0_106, %c0_107, %c0_108], %145 {strides = array<i32>} : memref<1x8x32xf32, #tpu.memory_space<vmem>>, vector<1x8x32xf32>,
    return
  }
  func.func @transform_0(%arg0: i32, %arg1: i32) -> (i32, i32, i32) {
    %c0_i32 = arith.constant 0 : i32
    %c0_i32_0 = arith.constant 0 : i32
    %c0_i32_1 = arith.constant 0 : i32
    return %arg0, %c0_i32, %c0_i32_0 : i32, i32, i32
  }
  func.func @transform_1(%arg0: i32, %arg1: i32) -> (i32, i32, i32) {
    %c0_i32 = arith.constant 0 : i32
    %c0_i32_0 = arith.constant 0 : i32
    return %arg0, %arg1, %c0_i32 : i32, i32, i32
  }
  func.func @transform_2(%arg0: i32, %arg1: i32) -> (i32, i32, i32, i32) {
    %c0_i32 = arith.constant 0 : i32
    %c0_i32_0 = arith.constant 0 : i32
    %c0_i32_1 = arith.constant 0 : i32
    %c0_i32_2 = arith.constant 0 : i32
    return %c0_i32, %c0_i32_0, %arg1, %c0_i32_1 : i32, i32, i32, i32
  }
  func.func @transform_3(%arg0: i32, %arg1: i32) -> (i32, i32, i32) {
    %c0_i32 = arith.constant 0 : i32
    %c0_i32_0 = arith.constant 0 : i32
    %c0_i32_1 = arith.constant 0 : i32
    %c0_i32_2 = arith.constant 0 : i32
    return %c0_i32, %c0_i32_0, %c0_i32_1 : i32, i32, i32
  }
  func.func @transform_4(%arg0: i32, %arg1: i32) -> (i32, i32, i32) {
    %c0_i32 = arith.constant 0 : i32
    %c0_i32_0 = arith.constant 0 : i32
    %c0_i32_1 = arith.constant 0 : i32
    %c0_i32_2 = arith.constant 0 : i32
    return %c0_i32, %c0_i32_0, %c0_i32_1 : i32, i32, i32
  }
  func.func @transform_5(%arg0: i32, %arg1: i32) -> (i32, i32, i32) {
    %c0_i32 = arith.constant 0 : i32
    %c0_i32_0 = arith.constant 0 : i32
    %c0_i32_1 = arith.constant 0 : i32
    %c0_i32_2 = arith.constant 0 : i32
    return %c0_i32, %c0_i32_0, %c0_i32_1 : i32, i32, i32
  }
  func.func @transform_6(%arg0: i32, %arg1: i32) -> (i32, i32, i32) {
    %c0_i32 = arith.constant 0 : i32
    %c0_i32_0 = arith.constant 0 : i32
    %c0_i32_1 = arith.constant 0 : i32
    %c0_i32_2 = arith.constant 0 : i32
    return %c0_i32, %c0_i32_0, %c0_i32_1 : i32, i32, i32
  }
  func.func @transform_7(%arg0: i32, %arg1: i32) -> (i32, i32, i32) {
    %c0_i32 = arith.constant 0 : i32
    %c0_i32_0 = arith.constant 0 : i32
    %c0_i32_1 = arith.constant 0 : i32
    %c0_i32_2 = arith.constant 0 : i32
    return %c0_i32, %c0_i32_0, %c0_i32_1 : i32, i32, i32
  }
  func.func @transform_8(%arg0: i32, %arg1: i32) -> (i32, i32, i32) {
    %c0_i32 = arith.constant 0 : i32
    %c0_i32_0 = arith.constant 0 : i32
    %c0_i32_1 = arith.constant 0 : i32
    %c0_i32_2 = arith.constant 0 : i32
    return %c0_i32, %c0_i32_0, %c0_i32_1 : i32, i32, i32
  }
  func.func @transform_9(%arg0: i32, %arg1: i32) -> (i32, i32, i32) {
    %c0_i32 = arith.constant 0 : i32
    %c0_i32_0 = arith.constant 0 : i32
    %c0_i32_1 = arith.constant 0 : i32
    %c0_i32_2 = arith.constant 0 : i32
    return %c0_i32, %c0_i32_0, %c0_i32_1 : i32, i32, i32
  }
  func.func @transform_10(%arg0: i32, %arg1: i32) -> (i32, i32) {
    %c0_i32 = arith.constant 0 : i32
    %c0_i32_0 = arith.constant 0 : i32
    %c0_i32_1 = arith.constant 0 : i32
    return %c0_i32, %c0_i32_0 : i32, i32
  }
  func.func @transform_11(%arg0: i32, %arg1: i32) -> (i32, i32, i32, i32) {
    %c0_i32 = arith.constant 0 : i32
    %c0_i32_0 = arith.constant 0 : i32
    %c0_i32_1 = arith.constant 0 : i32
    return %arg0, %c0_i32, %arg1, %c0_i32_0 : i32, i32, i32, i32
  }
  func.func @transform_12(%arg0: i32, %arg1: i32) -> (i32, i32, i32) {
    %c0_i32 = arith.constant 0 : i32
    %c0_i32_0 = arith.constant 0 : i32
    return %arg0, %arg1, %c0_i32 : i32, i32, i32
  }
}

module attributes {stable_mosaic.version = 11 : i64} {
  func.func @_attention_kernel(%arg0: i32, %arg1: i32, %arg2: memref<1x8x32xbf16, #tpu.memory_space<vmem>>, %arg3: memref<1x8x32xbf16, #tpu.memory_space<vmem>>, %arg4: memref<1x1x8x8xf32, #tpu.memory_space<vmem>>, %arg5: memref<4x32x128xbf16, #tpu.memory_space<vmem>>, %arg6: memref<4x1x128xf32, #tpu.memory_space<vmem>>, %arg7: memref<4x32x128xbf16, #tpu.memory_space<vmem>>, %arg8: memref<4x1x128xf32, #tpu.memory_space<vmem>>, %arg9: memref<4x32x128xbf16, #tpu.memory_space<vmem>>, %arg10: memref<4x1x128xf32, #tpu.memory_space<vmem>>, %arg11: memref<4x128x32xbf16, #tpu.memory_space<vmem>>, %arg12: memref<1x32xf32, #tpu.memory_space<vmem>>, %arg13: memref<1x4x8x8xf32, #tpu.memory_space<vmem>>, %arg14: memref<1x8x32xf32, #tpu.memory_space<vmem>>, %arg15: memref<4x8x128xbf16, #tpu.memory_space<vmem>>, %arg16: memref<4x8x128xbf16, #tpu.memory_space<vmem>>) attributes {dimension_semantics = [#tpu.dimension_semantics<parallel>, #tpu.dimension_semantics<arbitrary>], iteration_bounds = array<i64: 2, 1>, scalar_prefetch = 0 : i64, scratch_operands = 2 : i64, tpu.core_type = #tpu.core_type<tc>, window_params = [{transform_indices = @transform_0, window_bounds = array<i64: 1, 8, 32>}, {transform_indices = @transform_1, window_bounds = array<i64: 1, 8, 32>}, {transform_indices = @transform_2, window_bounds = array<i64: 1, 1, 8, 8>}, {pipeline_mode = #tpu.pipeline_mode<synchronous>, transform_indices = @transform_3, window_bounds = array<i64: 4, 32, 128>}, {pipeline_mode = #tpu.pipeline_mode<synchronous>, transform_indices = @transform_4, window_bounds = array<i64: 4, 1, 128>}, {pipeline_mode = #tpu.pipeline_mode<synchronous>, transform_indices = @transform_5, window_bounds = array<i64: 4, 32, 128>}, {pipeline_mode = #tpu.pipeline_mode<synchronous>, transform_indices = @transform_6, window_bounds = array<i64: 4, 1, 128>}, {pipeline_mode = #tpu.pipeline_mode<synchronous>, transform_indices = @transform_7, window_bounds = array<i64: 4, 32, 128>}, {pipeline_mode = #tpu.pipeline_mode<synchronous>, transform_indices = @transform_8, window_bounds = array<i64: 4, 1, 128>}, {pipeline_mode = #tpu.pipeline_mode<synchronous>, transform_indices = @transform_9, window_bounds = array<i64: 4, 128, 32>}, {pipeline_mode = #tpu.pipeline_mode<synchronous>, transform_indices = @transform_10, window_bounds = array<i64: 1, 32>}, {transform_indices = @transform_11, window_bounds = array<i64: 1, 4, 8, 8>}, {transform_indices = @transform_12, window_bounds = array<i64: 1, 8, 32>}]} {
    %c0_i32 = arith.constant 0 : i32
    %0 = arith.cmpi eq, %arg1, %c0_i32 : i32
    %1 = arith.extui %0 : i1 to i32
    %c0_i32_0 = arith.constant 0 : i32
    %2 = arith.cmpi ne, %1, %c0_i32_0 : i32
    scf.if %2 {
      %c0_109 = arith.constant 0 : index
      %c0_110 = arith.constant 0 : index
      %c0_111 = arith.constant 0 : index
      %146 = vector.load %arg2[%c0_109, %c0_110, %c0_111] : memref<1x8x32xbf16, #tpu.memory_space<vmem>>, vector<1x8x32xbf16>
      %147 = vector.shape_cast %146 : vector<1x8x32xbf16> to vector<8x32xbf16>
      %c0_112 = arith.constant 0 : index
      %c0_113 = arith.constant 0 : index
      %c0_114 = arith.constant 0 : index
      %148 = vector.load %arg7[%c0_112, %c0_113, %c0_114] : memref<4x32x128xbf16, #tpu.memory_space<vmem>>, vector<1x32x128xbf16>
      %149 = vector.shape_cast %148 : vector<1x32x128xbf16> to vector<32x128xbf16>
      %cst_115 = arith.constant dense<0.000000e+00> : vector<8x128xf32>
      %150 = tpu.matmul %147, %149, %cst_115 {dimension_numbers = #tpu.dot_dimension_numbers<[1], [0], [0], [1], [0, 0, 1, 1], [], []>} : vector<8x32xbf16>, vector<32x128xbf16>, vector<8x128xf32> -> vector<8x128xf32>
      %c0_116 = arith.constant 0 : index
      %c0_117 = arith.constant 0 : index
      %c0_118 = arith.constant 0 : index
      %151 = vector.load %arg8[%c0_116, %c0_117, %c0_118] : memref<4x1x128xf32, #tpu.memory_space<vmem>>, vector<1x1x128xf32>
      %152 = vector.shape_cast %151 : vector<1x1x128xf32> to vector<1x128xf32>
      %153 = vector.broadcast %152 : vector<1x128xf32> to vector<8x128xf32>
      %154 = arith.addf %150, %153 : vector<8x128xf32>
      %155 = arith.truncf %154 : vector<8x128xf32> to vector<8x128xbf16>
      %c0_119 = arith.constant 0 : index
      %c0_120 = arith.constant 0 : index
      %c0_121 = arith.constant 0 : index
      %156 = vector.load %arg15[%c0_119, %c0_120, %c0_121] : memref<4x8x128xbf16, #tpu.memory_space<vmem>>, vector<1x8x128xbf16>
      %157 = vector.shape_cast %156 : vector<1x8x128xbf16> to vector<8x128xbf16>
      %158 = vector.shape_cast %155 : vector<8x128xbf16> to vector<1x8x128xbf16>
      tpu.vector_store %arg15[%c0_119, %c0_120, %c0_121], %158 {strides = array<i32>} : memref<4x8x128xbf16, #tpu.memory_space<vmem>>, vector<1x8x128xbf16>,
      %c0_122 = arith.constant 0 : index
      %c0_123 = arith.constant 0 : index
      %c0_124 = arith.constant 0 : index
      %159 = vector.load %arg9[%c0_122, %c0_123, %c0_124] : memref<4x32x128xbf16, #tpu.memory_space<vmem>>, vector<1x32x128xbf16>
      %160 = vector.shape_cast %159 : vector<1x32x128xbf16> to vector<32x128xbf16>
      %cst_125 = arith.constant dense<0.000000e+00> : vector<8x128xf32>
      %161 = tpu.matmul %147, %160, %cst_125 {dimension_numbers = #tpu.dot_dimension_numbers<[1], [0], [0], [1], [0, 0, 1, 1], [], []>} : vector<8x32xbf16>, vector<32x128xbf16>, vector<8x128xf32> -> vector<8x128xf32>
      %c0_126 = arith.constant 0 : index
      %c0_127 = arith.constant 0 : index
      %c0_128 = arith.constant 0 : index
      %162 = vector.load %arg10[%c0_126, %c0_127, %c0_128] : memref<4x1x128xf32, #tpu.memory_space<vmem>>, vector<1x1x128xf32>
      %163 = vector.shape_cast %162 : vector<1x1x128xf32> to vector<1x128xf32>
      %164 = vector.broadcast %163 : vector<1x128xf32> to vector<8x128xf32>
      %165 = arith.addf %161, %164 : vector<8x128xf32>
      %166 = arith.truncf %165 : vector<8x128xf32> to vector<8x128xbf16>
      %c0_129 = arith.constant 0 : index
      %c0_130 = arith.constant 0 : index
      %c0_131 = arith.constant 0 : index
      %167 = vector.load %arg16[%c0_129, %c0_130, %c0_131] : memref<4x8x128xbf16, #tpu.memory_space<vmem>>, vector<1x8x128xbf16>
      %168 = vector.shape_cast %167 : vector<1x8x128xbf16> to vector<8x128xbf16>
      %169 = vector.shape_cast %166 : vector<8x128xbf16> to vector<1x8x128xbf16>
      tpu.vector_store %arg16[%c0_129, %c0_130, %c0_131], %169 {strides = array<i32>} : memref<4x8x128xbf16, #tpu.memory_space<vmem>>, vector<1x8x128xbf16>,
      %c1_132 = arith.constant 1 : index
      %c0_133 = arith.constant 0 : index
      %c0_134 = arith.constant 0 : index
      %170 = vector.load %arg7[%c1_132, %c0_133, %c0_134] : memref<4x32x128xbf16, #tpu.memory_space<vmem>>, vector<1x32x128xbf16>
      %171 = vector.shape_cast %170 : vector<1x32x128xbf16> to vector<32x128xbf16>
      %cst_135 = arith.constant dense<0.000000e+00> : vector<8x128xf32>
      %172 = tpu.matmul %147, %171, %cst_135 {dimension_numbers = #tpu.dot_dimension_numbers<[1], [0], [0], [1], [0, 0, 1, 1], [], []>} : vector<8x32xbf16>, vector<32x128xbf16>, vector<8x128xf32> -> vector<8x128xf32>
      %c1_136 = arith.constant 1 : index
      %c0_137 = arith.constant 0 : index
      %c0_138 = arith.constant 0 : index
      %173 = vector.load %arg8[%c1_136, %c0_137, %c0_138] : memref<4x1x128xf32, #tpu.memory_space<vmem>>, vector<1x1x128xf32>
      %174 = vector.shape_cast %173 : vector<1x1x128xf32> to vector<1x128xf32>
      %175 = vector.broadcast %174 : vector<1x128xf32> to vector<8x128xf32>
      %176 = arith.addf %172, %175 : vector<8x128xf32>
      %177 = arith.truncf %176 : vector<8x128xf32> to vector<8x128xbf16>
      %c1_139 = arith.constant 1 : index
      %c0_140 = arith.constant 0 : index
      %c0_141 = arith.constant 0 : index
      %178 = vector.load %arg15[%c1_139, %c0_140, %c0_141] : memref<4x8x128xbf16, #tpu.memory_space<vmem>>, vector<1x8x128xbf16>
      %179 = vector.shape_cast %178 : vector<1x8x128xbf16> to vector<8x128xbf16>
      %180 = vector.shape_cast %177 : vector<8x128xbf16> to vector<1x8x128xbf16>
      tpu.vector_store %arg15[%c1_139, %c0_140, %c0_141], %180 {strides = array<i32>} : memref<4x8x128xbf16, #tpu.memory_space<vmem>>, vector<1x8x128xbf16>,
      %c1_142 = arith.constant 1 : index
      %c0_143 = arith.constant 0 : index
      %c0_144 = arith.constant 0 : index
      %181 = vector.load %arg9[%c1_142, %c0_143, %c0_144] : memref<4x32x128xbf16, #tpu.memory_space<vmem>>, vector<1x32x128xbf16>
      %182 = vector.shape_cast %181 : vector<1x32x128xbf16> to vector<32x128xbf16>
      %cst_145 = arith.constant dense<0.000000e+00> : vector<8x128xf32>
      %183 = tpu.matmul %147, %182, %cst_145 {dimension_numbers = #tpu.dot_dimension_numbers<[1], [0], [0], [1], [0, 0, 1, 1], [], []>} : vector<8x32xbf16>, vector<32x128xbf16>, vector<8x128xf32> -> vector<8x128xf32>
      %c1_146 = arith.constant 1 : index
      %c0_147 = arith.constant 0 : index
      %c0_148 = arith.constant 0 : index
      %184 = vector.load %arg10[%c1_146, %c0_147, %c0_148] : memref<4x1x128xf32, #tpu.memory_space<vmem>>, vector<1x1x128xf32>
      %185 = vector.shape_cast %184 : vector<1x1x128xf32> to vector<1x128xf32>
      %186 = vector.broadcast %185 : vector<1x128xf32> to vector<8x128xf32>
      %187 = arith.addf %183, %186 : vector<8x128xf32>
      %188 = arith.truncf %187 : vector<8x128xf32> to vector<8x128xbf16>
      %c1_149 = arith.constant 1 : index
      %c0_150 = arith.constant 0 : index
      %c0_151 = arith.constant 0 : index
      %189 = vector.load %arg16[%c1_149, %c0_150, %c0_151] : memref<4x8x128xbf16, #tpu.memory_space<vmem>>, vector<1x8x128xbf16>
      %190 = vector.shape_cast %189 : vector<1x8x128xbf16> to vector<8x128xbf16>
      %191 = vector.shape_cast %188 : vector<8x128xbf16> to vector<1x8x128xbf16>
      tpu.vector_store %arg16[%c1_149, %c0_150, %c0_151], %191 {strides = array<i32>} : memref<4x8x128xbf16, #tpu.memory_space<vmem>>, vector<1x8x128xbf16>,
      %c2_152 = arith.constant 2 : index
      %c0_153 = arith.constant 0 : index
      %c0_154 = arith.constant 0 : index
      %192 = vector.load %arg7[%c2_152, %c0_153, %c0_154] : memref<4x32x128xbf16, #tpu.memory_space<vmem>>, vector<1x32x128xbf16>
      %193 = vector.shape_cast %192 : vector<1x32x128xbf16> to vector<32x128xbf16>
      %cst_155 = arith.constant dense<0.000000e+00> : vector<8x128xf32>
      %194 = tpu.matmul %147, %193, %cst_155 {dimension_numbers = #tpu.dot_dimension_numbers<[1], [0], [0], [1], [0, 0, 1, 1], [], []>} : vector<8x32xbf16>, vector<32x128xbf16>, vector<8x128xf32> -> vector<8x128xf32>
      %c2_156 = arith.constant 2 : index
      %c0_157 = arith.constant 0 : index
      %c0_158 = arith.constant 0 : index
      %195 = vector.load %arg8[%c2_156, %c0_157, %c0_158] : memref<4x1x128xf32, #tpu.memory_space<vmem>>, vector<1x1x128xf32>
      %196 = vector.shape_cast %195 : vector<1x1x128xf32> to vector<1x128xf32>
      %197 = vector.broadcast %196 : vector<1x128xf32> to vector<8x128xf32>
      %198 = arith.addf %194, %197 : vector<8x128xf32>
      %199 = arith.truncf %198 : vector<8x128xf32> to vector<8x128xbf16>
      %c2_159 = arith.constant 2 : index
      %c0_160 = arith.constant 0 : index
      %c0_161 = arith.constant 0 : index
      %200 = vector.load %arg15[%c2_159, %c0_160, %c0_161] : memref<4x8x128xbf16, #tpu.memory_space<vmem>>, vector<1x8x128xbf16>
      %201 = vector.shape_cast %200 : vector<1x8x128xbf16> to vector<8x128xbf16>
      %202 = vector.shape_cast %199 : vector<8x128xbf16> to vector<1x8x128xbf16>
      tpu.vector_store %arg15[%c2_159, %c0_160, %c0_161], %202 {strides = array<i32>} : memref<4x8x128xbf16, #tpu.memory_space<vmem>>, vector<1x8x128xbf16>,
      %c2_162 = arith.constant 2 : index
      %c0_163 = arith.constant 0 : index
      %c0_164 = arith.constant 0 : index
      %203 = vector.load %arg9[%c2_162, %c0_163, %c0_164] : memref<4x32x128xbf16, #tpu.memory_space<vmem>>, vector<1x32x128xbf16>
      %204 = vector.shape_cast %203 : vector<1x32x128xbf16> to vector<32x128xbf16>
      %cst_165 = arith.constant dense<0.000000e+00> : vector<8x128xf32>
      %205 = tpu.matmul %147, %204, %cst_165 {dimension_numbers = #tpu.dot_dimension_numbers<[1], [0], [0], [1], [0, 0, 1, 1], [], []>} : vector<8x32xbf16>, vector<32x128xbf16>, vector<8x128xf32> -> vector<8x128xf32>
      %c2_166 = arith.constant 2 : index
      %c0_167 = arith.constant 0 : index
      %c0_168 = arith.constant 0 : index
      %206 = vector.load %arg10[%c2_166, %c0_167, %c0_168] : memref<4x1x128xf32, #tpu.memory_space<vmem>>, vector<1x1x128xf32>
      %207 = vector.shape_cast %206 : vector<1x1x128xf32> to vector<1x128xf32>
      %208 = vector.broadcast %207 : vector<1x128xf32> to vector<8x128xf32>
      %209 = arith.addf %205, %208 : vector<8x128xf32>
      %210 = arith.truncf %209 : vector<8x128xf32> to vector<8x128xbf16>
      %c2_169 = arith.constant 2 : index
      %c0_170 = arith.constant 0 : index
      %c0_171 = arith.constant 0 : index
      %211 = vector.load %arg16[%c2_169, %c0_170, %c0_171] : memref<4x8x128xbf16, #tpu.memory_space<vmem>>, vector<1x8x128xbf16>
      %212 = vector.shape_cast %211 : vector<1x8x128xbf16> to vector<8x128xbf16>
      %213 = vector.shape_cast %210 : vector<8x128xbf16> to vector<1x8x128xbf16>
      tpu.vector_store %arg16[%c2_169, %c0_170, %c0_171], %213 {strides = array<i32>} : memref<4x8x128xbf16, #tpu.memory_space<vmem>>, vector<1x8x128xbf16>,
      %c3_172 = arith.constant 3 : index
      %c0_173 = arith.constant 0 : index
      %c0_174 = arith.constant 0 : index
      %214 = vector.load %arg7[%c3_172, %c0_173, %c0_174] : memref<4x32x128xbf16, #tpu.memory_space<vmem>>, vector<1x32x128xbf16>
      %215 = vector.shape_cast %214 : vector<1x32x128xbf16> to vector<32x128xbf16>
      %cst_175 = arith.constant dense<0.000000e+00> : vector<8x128xf32>
      %216 = tpu.matmul %147, %215, %cst_175 {dimension_numbers = #tpu.dot_dimension_numbers<[1], [0], [0], [1], [0, 0, 1, 1], [], []>} : vector<8x32xbf16>, vector<32x128xbf16>, vector<8x128xf32> -> vector<8x128xf32>
      %c3_176 = arith.constant 3 : index
      %c0_177 = arith.constant 0 : index
      %c0_178 = arith.constant 0 : index
      %217 = vector.load %arg8[%c3_176, %c0_177, %c0_178] : memref<4x1x128xf32, #tpu.memory_space<vmem>>, vector<1x1x128xf32>
      %218 = vector.shape_cast %217 : vector<1x1x128xf32> to vector<1x128xf32>
      %219 = vector.broadcast %218 : vector<1x128xf32> to vector<8x128xf32>
      %220 = arith.addf %216, %219 : vector<8x128xf32>
      %221 = arith.truncf %220 : vector<8x128xf32> to vector<8x128xbf16>
      %c3_179 = arith.constant 3 : index
      %c0_180 = arith.constant 0 : index
      %c0_181 = arith.constant 0 : index
      %222 = vector.load %arg15[%c3_179, %c0_180, %c0_181] : memref<4x8x128xbf16, #tpu.memory_space<vmem>>, vector<1x8x128xbf16>
      %223 = vector.shape_cast %222 : vector<1x8x128xbf16> to vector<8x128xbf16>
      %224 = vector.shape_cast %221 : vector<8x128xbf16> to vector<1x8x128xbf16>
      tpu.vector_store %arg15[%c3_179, %c0_180, %c0_181], %224 {strides = array<i32>} : memref<4x8x128xbf16, #tpu.memory_space<vmem>>, vector<1x8x128xbf16>,
      %c3_182 = arith.constant 3 : index
      %c0_183 = arith.constant 0 : index
      %c0_184 = arith.constant 0 : index
      %225 = vector.load %arg9[%c3_182, %c0_183, %c0_184] : memref<4x32x128xbf16, #tpu.memory_space<vmem>>, vector<1x32x128xbf16>
      %226 = vector.shape_cast %225 : vector<1x32x128xbf16> to vector<32x128xbf16>
      %cst_185 = arith.constant dense<0.000000e+00> : vector<8x128xf32>
      %227 = tpu.matmul %147, %226, %cst_185 {dimension_numbers = #tpu.dot_dimension_numbers<[1], [0], [0], [1], [0, 0, 1, 1], [], []>} : vector<8x32xbf16>, vector<32x128xbf16>, vector<8x128xf32> -> vector<8x128xf32>
      %c3_186 = arith.constant 3 : index
      %c0_187 = arith.constant 0 : index
      %c0_188 = arith.constant 0 : index
      %228 = vector.load %arg10[%c3_186, %c0_187, %c0_188] : memref<4x1x128xf32, #tpu.memory_space<vmem>>, vector<1x1x128xf32>
      %229 = vector.shape_cast %228 : vector<1x1x128xf32> to vector<1x128xf32>
      %230 = vector.broadcast %229 : vector<1x128xf32> to vector<8x128xf32>
      %231 = arith.addf %227, %230 : vector<8x128xf32>
      %232 = arith.truncf %231 : vector<8x128xf32> to vector<8x128xbf16>
      %c3_189 = arith.constant 3 : index
      %c0_190 = arith.constant 0 : index
      %c0_191 = arith.constant 0 : index
      %233 = vector.load %arg16[%c3_189, %c0_190, %c0_191] : memref<4x8x128xbf16, #tpu.memory_space<vmem>>, vector<1x8x128xbf16>
      %234 = vector.shape_cast %233 : vector<1x8x128xbf16> to vector<8x128xbf16>
      %235 = vector.shape_cast %232 : vector<8x128xbf16> to vector<1x8x128xbf16>
      tpu.vector_store %arg16[%c3_189, %c0_190, %c0_191], %235 {strides = array<i32>} : memref<4x8x128xbf16, #tpu.memory_space<vmem>>, vector<1x8x128xbf16>,
    } else {
    }
    %c0 = arith.constant 0 : index
    %c0_1 = arith.constant 0 : index
    %c0_2 = arith.constant 0 : index
    %3 = vector.load %arg3[%c0, %c0_1, %c0_2] : memref<1x8x32xbf16, #tpu.memory_space<vmem>>, vector<1x8x32xbf16>
    %4 = vector.shape_cast %3 : vector<1x8x32xbf16> to vector<8x32xbf16>
    %c0_3 = arith.constant 0 : index
    %c0_4 = arith.constant 0 : index
    %c0_5 = arith.constant 0 : index
    %c0_6 = arith.constant 0 : index
    %5 = vector.load %arg4[%c0_3, %c0_4, %c0_5, %c0_6] : memref<1x1x8x8xf32, #tpu.memory_space<vmem>>, vector<1x1x8x8xf32>
    %6 = vector.shape_cast %5 : vector<1x1x8x8xf32> to vector<8x8xf32>
    %c0_7 = arith.constant 0 : index
    %c0_8 = arith.constant 0 : index
    %7 = vector.load %arg12[%c0_7, %c0_8] : memref<1x32xf32, #tpu.memory_space<vmem>>, vector<1x32xf32>
    %cst = arith.constant 0.000000e+00 : f32
    %8 = vector.broadcast %cst : f32 to vector<8x32xf32>
    %c0_9 = arith.constant 0 : index
    %c0_10 = arith.constant 0 : index
    %c0_11 = arith.constant 0 : index
    %9 = vector.load %arg5[%c0_9, %c0_10, %c0_11] : memref<4x32x128xbf16, #tpu.memory_space<vmem>>, vector<1x32x128xbf16>
    %10 = vector.shape_cast %9 : vector<1x32x128xbf16> to vector<32x128xbf16>
    %cst_12 = arith.constant dense<0.000000e+00> : vector<8x128xf32>
    %11 = tpu.matmul %4, %10, %cst_12 {dimension_numbers = #tpu.dot_dimension_numbers<[1], [0], [0], [1], [0, 0, 1, 1], [], []>} : vector<8x32xbf16>, vector<32x128xbf16>, vector<8x128xf32> -> vector<8x128xf32>
    %c0_13 = arith.constant 0 : index
    %c0_14 = arith.constant 0 : index
    %c0_15 = arith.constant 0 : index
    %12 = vector.load %arg6[%c0_13, %c0_14, %c0_15] : memref<4x1x128xf32, #tpu.memory_space<vmem>>, vector<1x1x128xf32>
    %13 = vector.shape_cast %12 : vector<1x1x128xf32> to vector<1x128xf32>
    %14 = vector.broadcast %13 : vector<1x128xf32> to vector<8x128xf32>
    %15 = arith.addf %11, %14 : vector<8x128xf32>
    %16 = arith.truncf %15 : vector<8x128xf32> to vector<8x128xbf16>
    %c0_16 = arith.constant 0 : index
    %c0_17 = arith.constant 0 : index
    %c0_18 = arith.constant 0 : index
    %17 = vector.load %arg15[%c0_16, %c0_17, %c0_18] : memref<4x8x128xbf16, #tpu.memory_space<vmem>>, vector<1x8x128xbf16>
    %18 = vector.shape_cast %17 : vector<1x8x128xbf16> to vector<8x128xbf16>
    %cst_19 = arith.constant dense<0.000000e+00> : vector<8x8xf32>
    %19 = tpu.matmul %16, %18, %cst_19 {dimension_numbers = #tpu.dot_dimension_numbers<[1], [1], [0], [0], [0, 0, 1, 0], [], []>} : vector<8x128xbf16>, vector<8x128xbf16>, vector<8x8xf32> -> vector<8x8xf32>
    %20 = arith.addf %19, %6 : vector<8x8xf32>
    %cst_20 = arith.constant dense<0xFF800000> : vector<8xf32>
    %21 = vector.multi_reduction <maximumf>, %20, %cst_20 [1] : vector<8x8xf32> to vector<8xf32>
    %22 = vector.shape_cast %21 : vector<8xf32> to vector<8x1xf32>
    %23 = vector.broadcast %22 : vector<8x1xf32> to vector<8x8xf32>
    %24 = arith.subf %20, %23 : vector<8x8xf32>
    %25 = math.exp %24 : vector<8x8xf32>
    %cst_21 = arith.constant dense<0.000000e+00> : vector<8xf32>
    %26 = vector.multi_reduction <add>, %25, %cst_21 [1] : vector<8x8xf32> to vector<8xf32>
    %27 = vector.shape_cast %26 : vector<8xf32> to vector<8x1xf32>
    %28 = vector.broadcast %27 : vector<8x1xf32> to vector<8x8xf32>
    %29 = arith.divf %25, %28 : vector<8x8xf32>
    %c0_22 = arith.constant 0 : index
    %c0_23 = arith.constant 0 : index
    %c0_24 = arith.constant 0 : index
    %c0_25 = arith.constant 0 : index
    %30 = vector.load %arg13[%c0_22, %c0_23, %c0_24, %c0_25] : memref<1x4x8x8xf32, #tpu.memory_space<vmem>>, vector<1x1x8x8xf32>
    %31 = vector.shape_cast %30 : vector<1x1x8x8xf32> to vector<8x8xf32>
    %32 = vector.shape_cast %29 : vector<8x8xf32> to vector<1x1x8x8xf32>
    tpu.vector_store %arg13[%c0_22, %c0_23, %c0_24, %c0_25], %32 {strides = array<i32>} : memref<1x4x8x8xf32, #tpu.memory_space<vmem>>, vector<1x1x8x8xf32>,
    %33 = arith.truncf %29 : vector<8x8xf32> to vector<8x8xbf16>
    %c0_26 = arith.constant 0 : index
    %c0_27 = arith.constant 0 : index
    %c0_28 = arith.constant 0 : index
    %34 = vector.load %arg16[%c0_26, %c0_27, %c0_28] : memref<4x8x128xbf16, #tpu.memory_space<vmem>>, vector<1x8x128xbf16>
    %35 = vector.shape_cast %34 : vector<1x8x128xbf16> to vector<8x128xbf16>
    %cst_29 = arith.constant dense<0.000000e+00> : vector<8x128xf32>
    %36 = tpu.matmul %33, %35, %cst_29 {dimension_numbers = #tpu.dot_dimension_numbers<[1], [0], [0], [1], [0, 0, 1, 1], [], []>} : vector<8x8xbf16>, vector<8x128xbf16>, vector<8x128xf32> -> vector<8x128xf32>
    %37 = arith.truncf %36 : vector<8x128xf32> to vector<8x128xbf16>
    %c0_30 = arith.constant 0 : index
    %c0_31 = arith.constant 0 : index
    %c0_32 = arith.constant 0 : index
    %38 = vector.load %arg11[%c0_30, %c0_31, %c0_32] : memref<4x128x32xbf16, #tpu.memory_space<vmem>>, vector<1x128x32xbf16>
    %39 = vector.shape_cast %38 : vector<1x128x32xbf16> to vector<128x32xbf16>
    %cst_33 = arith.constant dense<0.000000e+00> : vector<8x32xf32>
    %40 = tpu.matmul %37, %39, %cst_33 {dimension_numbers = #tpu.dot_dimension_numbers<[1], [0], [0], [1], [0, 0, 1, 1], [], []>} : vector<8x128xbf16>, vector<128x32xbf16>, vector<8x32xf32> -> vector<8x32xf32>
    %41 = arith.addf %8, %40 : vector<8x32xf32>
    %c1 = arith.constant 1 : index
    %c0_34 = arith.constant 0 : index
    %c0_35 = arith.constant 0 : index
    %42 = vector.load %arg5[%c1, %c0_34, %c0_35] : memref<4x32x128xbf16, #tpu.memory_space<vmem>>, vector<1x32x128xbf16>
    %43 = vector.shape_cast %42 : vector<1x32x128xbf16> to vector<32x128xbf16>
    %cst_36 = arith.constant dense<0.000000e+00> : vector<8x128xf32>
    %44 = tpu.matmul %4, %43, %cst_36 {dimension_numbers = #tpu.dot_dimension_numbers<[1], [0], [0], [1], [0, 0, 1, 1], [], []>} : vector<8x32xbf16>, vector<32x128xbf16>, vector<8x128xf32> -> vector<8x128xf32>
    %c1_37 = arith.constant 1 : index
    %c0_38 = arith.constant 0 : index
    %c0_39 = arith.constant 0 : index
    %45 = vector.load %arg6[%c1_37, %c0_38, %c0_39] : memref<4x1x128xf32, #tpu.memory_space<vmem>>, vector<1x1x128xf32>
    %46 = vector.shape_cast %45 : vector<1x1x128xf32> to vector<1x128xf32>
    %47 = vector.broadcast %46 : vector<1x128xf32> to vector<8x128xf32>
    %48 = arith.addf %44, %47 : vector<8x128xf32>
    %49 = arith.truncf %48 : vector<8x128xf32> to vector<8x128xbf16>
    %c1_40 = arith.constant 1 : index
    %c0_41 = arith.constant 0 : index
    %c0_42 = arith.constant 0 : index
    %50 = vector.load %arg15[%c1_40, %c0_41, %c0_42] : memref<4x8x128xbf16, #tpu.memory_space<vmem>>, vector<1x8x128xbf16>
    %51 = vector.shape_cast %50 : vector<1x8x128xbf16> to vector<8x128xbf16>
    %cst_43 = arith.constant dense<0.000000e+00> : vector<8x8xf32>
    %52 = tpu.matmul %49, %51, %cst_43 {dimension_numbers = #tpu.dot_dimension_numbers<[1], [1], [0], [0], [0, 0, 1, 0], [], []>} : vector<8x128xbf16>, vector<8x128xbf16>, vector<8x8xf32> -> vector<8x8xf32>
    %53 = arith.addf %52, %6 : vector<8x8xf32>
    %cst_44 = arith.constant dense<0xFF800000> : vector<8xf32>
    %54 = vector.multi_reduction <maximumf>, %53, %cst_44 [1] : vector<8x8xf32> to vector<8xf32>
    %55 = vector.shape_cast %54 : vector<8xf32> to vector<8x1xf32>
    %56 = vector.broadcast %55 : vector<8x1xf32> to vector<8x8xf32>
    %57 = arith.subf %53, %56 : vector<8x8xf32>
    %58 = math.exp %57 : vector<8x8xf32>
    %cst_45 = arith.constant dense<0.000000e+00> : vector<8xf32>
    %59 = vector.multi_reduction <add>, %58, %cst_45 [1] : vector<8x8xf32> to vector<8xf32>
    %60 = vector.shape_cast %59 : vector<8xf32> to vector<8x1xf32>
    %61 = vector.broadcast %60 : vector<8x1xf32> to vector<8x8xf32>
    %62 = arith.divf %58, %61 : vector<8x8xf32>
    %c0_46 = arith.constant 0 : index
    %c1_47 = arith.constant 1 : index
    %c0_48 = arith.constant 0 : index
    %c0_49 = arith.constant 0 : index
    %63 = vector.load %arg13[%c0_46, %c1_47, %c0_48, %c0_49] : memref<1x4x8x8xf32, #tpu.memory_space<vmem>>, vector<1x1x8x8xf32>
    %64 = vector.shape_cast %63 : vector<1x1x8x8xf32> to vector<8x8xf32>
    %65 = vector.shape_cast %62 : vector<8x8xf32> to vector<1x1x8x8xf32>
    tpu.vector_store %arg13[%c0_46, %c1_47, %c0_48, %c0_49], %65 {strides = array<i32>} : memref<1x4x8x8xf32, #tpu.memory_space<vmem>>, vector<1x1x8x8xf32>,
    %66 = arith.truncf %62 : vector<8x8xf32> to vector<8x8xbf16>
    %c1_50 = arith.constant 1 : index
    %c0_51 = arith.constant 0 : index
    %c0_52 = arith.constant 0 : index
    %67 = vector.load %arg16[%c1_50, %c0_51, %c0_52] : memref<4x8x128xbf16, #tpu.memory_space<vmem>>, vector<1x8x128xbf16>
    %68 = vector.shape_cast %67 : vector<1x8x128xbf16> to vector<8x128xbf16>
    %cst_53 = arith.constant dense<0.000000e+00> : vector<8x128xf32>
    %69 = tpu.matmul %66, %68, %cst_53 {dimension_numbers = #tpu.dot_dimension_numbers<[1], [0], [0], [1], [0, 0, 1, 1], [], []>} : vector<8x8xbf16>, vector<8x128xbf16>, vector<8x128xf32> -> vector<8x128xf32>
    %70 = arith.truncf %69 : vector<8x128xf32> to vector<8x128xbf16>
    %c1_54 = arith.constant 1 : index
    %c0_55 = arith.constant 0 : index
    %c0_56 = arith.constant 0 : index
    %71 = vector.load %arg11[%c1_54, %c0_55, %c0_56] : memref<4x128x32xbf16, #tpu.memory_space<vmem>>, vector<1x128x32xbf16>
    %72 = vector.shape_cast %71 : vector<1x128x32xbf16> to vector<128x32xbf16>
    %cst_57 = arith.constant dense<0.000000e+00> : vector<8x32xf32>
    %73 = tpu.matmul %70, %72, %cst_57 {dimension_numbers = #tpu.dot_dimension_numbers<[1], [0], [0], [1], [0, 0, 1, 1], [], []>} : vector<8x128xbf16>, vector<128x32xbf16>, vector<8x32xf32> -> vector<8x32xf32>
    %74 = arith.addf %41, %73 : vector<8x32xf32>
    %c2 = arith.constant 2 : index
    %c0_58 = arith.constant 0 : index
    %c0_59 = arith.constant 0 : index
    %75 = vector.load %arg5[%c2, %c0_58, %c0_59] : memref<4x32x128xbf16, #tpu.memory_space<vmem>>, vector<1x32x128xbf16>
    %76 = vector.shape_cast %75 : vector<1x32x128xbf16> to vector<32x128xbf16>
    %cst_60 = arith.constant dense<0.000000e+00> : vector<8x128xf32>
    %77 = tpu.matmul %4, %76, %cst_60 {dimension_numbers = #tpu.dot_dimension_numbers<[1], [0], [0], [1], [0, 0, 1, 1], [], []>} : vector<8x32xbf16>, vector<32x128xbf16>, vector<8x128xf32> -> vector<8x128xf32>
    %c2_61 = arith.constant 2 : index
    %c0_62 = arith.constant 0 : index
    %c0_63 = arith.constant 0 : index
    %78 = vector.load %arg6[%c2_61, %c0_62, %c0_63] : memref<4x1x128xf32, #tpu.memory_space<vmem>>, vector<1x1x128xf32>
    %79 = vector.shape_cast %78 : vector<1x1x128xf32> to vector<1x128xf32>
    %80 = vector.broadcast %79 : vector<1x128xf32> to vector<8x128xf32>
    %81 = arith.addf %77, %80 : vector<8x128xf32>
    %82 = arith.truncf %81 : vector<8x128xf32> to vector<8x128xbf16>
    %c2_64 = arith.constant 2 : index
    %c0_65 = arith.constant 0 : index
    %c0_66 = arith.constant 0 : index
    %83 = vector.load %arg15[%c2_64, %c0_65, %c0_66] : memref<4x8x128xbf16, #tpu.memory_space<vmem>>, vector<1x8x128xbf16>
    %84 = vector.shape_cast %83 : vector<1x8x128xbf16> to vector<8x128xbf16>
    %cst_67 = arith.constant dense<0.000000e+00> : vector<8x8xf32>
    %85 = tpu.matmul %82, %84, %cst_67 {dimension_numbers = #tpu.dot_dimension_numbers<[1], [1], [0], [0], [0, 0, 1, 0], [], []>} : vector<8x128xbf16>, vector<8x128xbf16>, vector<8x8xf32> -> vector<8x8xf32>
    %86 = arith.addf %85, %6 : vector<8x8xf32>
    %cst_68 = arith.constant dense<0xFF800000> : vector<8xf32>
    %87 = vector.multi_reduction <maximumf>, %86, %cst_68 [1] : vector<8x8xf32> to vector<8xf32>
    %88 = vector.shape_cast %87 : vector<8xf32> to vector<8x1xf32>
    %89 = vector.broadcast %88 : vector<8x1xf32> to vector<8x8xf32>
    %90 = arith.subf %86, %89 : vector<8x8xf32>
    %91 = math.exp %90 : vector<8x8xf32>
    %cst_69 = arith.constant dense<0.000000e+00> : vector<8xf32>
    %92 = vector.multi_reduction <add>, %91, %cst_69 [1] : vector<8x8xf32> to vector<8xf32>
    %93 = vector.shape_cast %92 : vector<8xf32> to vector<8x1xf32>
    %94 = vector.broadcast %93 : vector<8x1xf32> to vector<8x8xf32>
    %95 = arith.divf %91, %94 : vector<8x8xf32>
    %c0_70 = arith.constant 0 : index
    %c2_71 = arith.constant 2 : index
    %c0_72 = arith.constant 0 : index
    %c0_73 = arith.constant 0 : index
    %96 = vector.load %arg13[%c0_70, %c2_71, %c0_72, %c0_73] : memref<1x4x8x8xf32, #tpu.memory_space<vmem>>, vector<1x1x8x8xf32>
    %97 = vector.shape_cast %96 : vector<1x1x8x8xf32> to vector<8x8xf32>
    %98 = vector.shape_cast %95 : vector<8x8xf32> to vector<1x1x8x8xf32>
    tpu.vector_store %arg13[%c0_70, %c2_71, %c0_72, %c0_73], %98 {strides = array<i32>} : memref<1x4x8x8xf32, #tpu.memory_space<vmem>>, vector<1x1x8x8xf32>,
    %99 = arith.truncf %95 : vector<8x8xf32> to vector<8x8xbf16>
    %c2_74 = arith.constant 2 : index
    %c0_75 = arith.constant 0 : index
    %c0_76 = arith.constant 0 : index
    %100 = vector.load %arg16[%c2_74, %c0_75, %c0_76] : memref<4x8x128xbf16, #tpu.memory_space<vmem>>, vector<1x8x128xbf16>
    %101 = vector.shape_cast %100 : vector<1x8x128xbf16> to vector<8x128xbf16>
    %cst_77 = arith.constant dense<0.000000e+00> : vector<8x128xf32>
    %102 = tpu.matmul %99, %101, %cst_77 {dimension_numbers = #tpu.dot_dimension_numbers<[1], [0], [0], [1], [0, 0, 1, 1], [], []>} : vector<8x8xbf16>, vector<8x128xbf16>, vector<8x128xf32> -> vector<8x128xf32>
    %103 = arith.truncf %102 : vector<8x128xf32> to vector<8x128xbf16>
    %c2_78 = arith.constant 2 : index
    %c0_79 = arith.constant 0 : index
    %c0_80 = arith.constant 0 : index
    %104 = vector.load %arg11[%c2_78, %c0_79, %c0_80] : memref<4x128x32xbf16, #tpu.memory_space<vmem>>, vector<1x128x32xbf16>
    %105 = vector.shape_cast %104 : vector<1x128x32xbf16> to vector<128x32xbf16>
    %cst_81 = arith.constant dense<0.000000e+00> : vector<8x32xf32>
    %106 = tpu.matmul %103, %105, %cst_81 {dimension_numbers = #tpu.dot_dimension_numbers<[1], [0], [0], [1], [0, 0, 1, 1], [], []>} : vector<8x128xbf16>, vector<128x32xbf16>, vector<8x32xf32> -> vector<8x32xf32>
    %107 = arith.addf %74, %106 : vector<8x32xf32>
    %c3 = arith.constant 3 : index
    %c0_82 = arith.constant 0 : index
    %c0_83 = arith.constant 0 : index
    %108 = vector.load %arg5[%c3, %c0_82, %c0_83] : memref<4x32x128xbf16, #tpu.memory_space<vmem>>, vector<1x32x128xbf16>
    %109 = vector.shape_cast %108 : vector<1x32x128xbf16> to vector<32x128xbf16>
    %cst_84 = arith.constant dense<0.000000e+00> : vector<8x128xf32>
    %110 = tpu.matmul %4, %109, %cst_84 {dimension_numbers = #tpu.dot_dimension_numbers<[1], [0], [0], [1], [0, 0, 1, 1], [], []>} : vector<8x32xbf16>, vector<32x128xbf16>, vector<8x128xf32> -> vector<8x128xf32>
    %c3_85 = arith.constant 3 : index
    %c0_86 = arith.constant 0 : index
    %c0_87 = arith.constant 0 : index
    %111 = vector.load %arg6[%c3_85, %c0_86, %c0_87] : memref<4x1x128xf32, #tpu.memory_space<vmem>>, vector<1x1x128xf32>
    %112 = vector.shape_cast %111 : vector<1x1x128xf32> to vector<1x128xf32>
    %113 = vector.broadcast %112 : vector<1x128xf32> to vector<8x128xf32>
    %114 = arith.addf %110, %113 : vector<8x128xf32>
    %115 = arith.truncf %114 : vector<8x128xf32> to vector<8x128xbf16>
    %c3_88 = arith.constant 3 : index
    %c0_89 = arith.constant 0 : index
    %c0_90 = arith.constant 0 : index
    %116 = vector.load %arg15[%c3_88, %c0_89, %c0_90] : memref<4x8x128xbf16, #tpu.memory_space<vmem>>, vector<1x8x128xbf16>
    %117 = vector.shape_cast %116 : vector<1x8x128xbf16> to vector<8x128xbf16>
    %cst_91 = arith.constant dense<0.000000e+00> : vector<8x8xf32>
    %118 = tpu.matmul %115, %117, %cst_91 {dimension_numbers = #tpu.dot_dimension_numbers<[1], [1], [0], [0], [0, 0, 1, 0], [], []>} : vector<8x128xbf16>, vector<8x128xbf16>, vector<8x8xf32> -> vector<8x8xf32>
    %119 = arith.addf %118, %6 : vector<8x8xf32>
    %cst_92 = arith.constant dense<0xFF800000> : vector<8xf32>
    %120 = vector.multi_reduction <maximumf>, %119, %cst_92 [1] : vector<8x8xf32> to vector<8xf32>
    %121 = vector.shape_cast %120 : vector<8xf32> to vector<8x1xf32>
    %122 = vector.broadcast %121 : vector<8x1xf32> to vector<8x8xf32>
    %123 = arith.subf %119, %122 : vector<8x8xf32>
    %124 = math.exp %123 : vector<8x8xf32>
    %cst_93 = arith.constant dense<0.000000e+00> : vector<8xf32>
    %125 = vector.multi_reduction <add>, %124, %cst_93 [1] : vector<8x8xf32> to vector<8xf32>
    %126 = vector.shape_cast %125 : vector<8xf32> to vector<8x1xf32>
    %127 = vector.broadcast %126 : vector<8x1xf32> to vector<8x8xf32>
    %128 = arith.divf %124, %127 : vector<8x8xf32>
    %c0_94 = arith.constant 0 : index
    %c3_95 = arith.constant 3 : index
    %c0_96 = arith.constant 0 : index
    %c0_97 = arith.constant 0 : index
    %129 = vector.load %arg13[%c0_94, %c3_95, %c0_96, %c0_97] : memref<1x4x8x8xf32, #tpu.memory_space<vmem>>, vector<1x1x8x8xf32>
    %130 = vector.shape_cast %129 : vector<1x1x8x8xf32> to vector<8x8xf32>
    %131 = vector.shape_cast %128 : vector<8x8xf32> to vector<1x1x8x8xf32>
    tpu.vector_store %arg13[%c0_94, %c3_95, %c0_96, %c0_97], %131 {strides = array<i32>} : memref<1x4x8x8xf32, #tpu.memory_space<vmem>>, vector<1x1x8x8xf32>,
    %132 = arith.truncf %128 : vector<8x8xf32> to vector<8x8xbf16>
    %c3_98 = arith.constant 3 : index
    %c0_99 = arith.constant 0 : index
    %c0_100 = arith.constant 0 : index
    %133 = vector.load %arg16[%c3_98, %c0_99, %c0_100] : memref<4x8x128xbf16, #tpu.memory_space<vmem>>, vector<1x8x128xbf16>
    %134 = vector.shape_cast %133 : vector<1x8x128xbf16> to vector<8x128xbf16>
    %cst_101 = arith.constant dense<0.000000e+00> : vector<8x128xf32>
    %135 = tpu.matmul %132, %134, %cst_101 {dimension_numbers = #tpu.dot_dimension_numbers<[1], [0], [0], [1], [0, 0, 1, 1], [], []>} : vector<8x8xbf16>, vector<8x128xbf16>, vector<8x128xf32> -> vector<8x128xf32>
    %136 = arith.truncf %135 : vector<8x128xf32> to vector<8x128xbf16>
    %c3_102 = arith.constant 3 : index
    %c0_103 = arith.constant 0 : index
    %c0_104 = arith.constant 0 : index
    %137 = vector.load %arg11[%c3_102, %c0_103, %c0_104] : memref<4x128x32xbf16, #tpu.memory_space<vmem>>, vector<1x128x32xbf16>
    %138 = vector.shape_cast %137 : vector<1x128x32xbf16> to vector<128x32xbf16>
    %cst_105 = arith.constant dense<0.000000e+00> : vector<8x32xf32>
    %139 = tpu.matmul %136, %138, %cst_105 {dimension_numbers = #tpu.dot_dimension_numbers<[1], [0], [0], [1], [0, 0, 1, 1], [], []>} : vector<8x128xbf16>, vector<128x32xbf16>, vector<8x32xf32> -> vector<8x32xf32>
    %140 = arith.addf %107, %139 : vector<8x32xf32>
    %141 = vector.broadcast %7 : vector<1x32xf32> to vector<8x32xf32>
    %142 = arith.addf %140, %141 : vector<8x32xf32>
    %c0_106 = arith.constant 0 : index
    %c0_107 = arith.constant 0 : index
    %c0_108 = arith.constant 0 : index
    %143 = vector.load %arg14[%c0_106, %c0_107, %c0_108] : memref<1x8x32xf32, #tpu.memory_space<vmem>>, vector<1x8x32xf32>
    %144 = vector.shape_cast %143 : vector<1x8x32xf32> to vector<8x32xf32>
    %145 = vector.shape_cast %142 : vector<8x32xf32> to vector<1x8x32xf32>
    tpu.vector_store %arg14[%c0_106, %c0_107, %c0_108], %145 {strides = array<i32>} : memref<1x8x32xf32, #tpu.memory_space<vmem>>, vector<1x8x32xf32>,
    return
  }
  func.func @transform_0(%arg0: i32, %arg1: i32) -> (i32, i32, i32) {
    %c0_i32 = arith.constant 0 : i32
    %c0_i32_0 = arith.constant 0 : i32
    %c0_i32_1 = arith.constant 0 : i32
    return %arg0, %c0_i32, %c0_i32_0 : i32, i32, i32
  }
  func.func @transform_1(%arg0: i32, %arg1: i32) -> (i32, i32, i32) {
    %c0_i32 = arith.constant 0 : i32
    %c0_i32_0 = arith.constant 0 : i32
    return %arg0, %arg1, %c0_i32 : i32, i32, i32
  }
  func.func @transform_2(%arg0: i32, %arg1: i32) -> (i32, i32, i32, i32) {
    %c0_i32 = arith.constant 0 : i32
    %c0_i32_0 = arith.constant 0 : i32
    %c0_i32_1 = arith.constant 0 : i32
    %c0_i32_2 = arith.constant 0 : i32
    return %c0_i32, %c0_i32_0, %arg1, %c0_i32_1 : i32, i32, i32, i32
  }
  func.func @transform_3(%arg0: i32, %arg1: i32) -> (i32, i32, i32) {
    %c0_i32 = arith.constant 0 : i32
    %c0_i32_0 = arith.constant 0 : i32
    %c0_i32_1 = arith.constant 0 : i32
    %c0_i32_2 = arith.constant 0 : i32
    return %c0_i32, %c0_i32_0, %c0_i32_1 : i32, i32, i32
  }
  func.func @transform_4(%arg0: i32, %arg1: i32) -> (i32, i32, i32) {
    %c0_i32 = arith.constant 0 : i32
    %c0_i32_0 = arith.constant 0 : i32
    %c0_i32_1 = arith.constant 0 : i32
    %c0_i32_2 = arith.constant 0 : i32
    return %c0_i32, %c0_i32_0, %c0_i32_1 : i32, i32, i32
  }
  func.func @transform_5(%arg0: i32, %arg1: i32) -> (i32, i32, i32) {
    %c0_i32 = arith.constant 0 : i32
    %c0_i32_0 = arith.constant 0 : i32
    %c0_i32_1 = arith.constant 0 : i32
    %c0_i32_2 = arith.constant 0 : i32
    return %c0_i32, %c0_i32_0, %c0_i32_1 : i32, i32, i32
  }
  func.func @transform_6(%arg0: i32, %arg1: i32) -> (i32, i32, i32) {
    %c0_i32 = arith.constant 0 : i32
    %c0_i32_0 = arith.constant 0 : i32
    %c0_i32_1 = arith.constant 0 : i32
    %c0_i32_2 = arith.constant 0 : i32
    return %c0_i32, %c0_i32_0, %c0_i32_1 : i32, i32, i32
  }
  func.func @transform_7(%arg0: i32, %arg1: i32) -> (i32, i32, i32) {
    %c0_i32 = arith.constant 0 : i32
    %c0_i32_0 = arith.constant 0 : i32
    %c0_i32_1 = arith.constant 0 : i32
    %c0_i32_2 = arith.constant 0 : i32
    return %c0_i32, %c0_i32_0, %c0_i32_1 : i32, i32, i32
  }
  func.func @transform_8(%arg0: i32, %arg1: i32) -> (i32, i32, i32) {
    %c0_i32 = arith.constant 0 : i32
    %c0_i32_0 = arith.constant 0 : i32
    %c0_i32_1 = arith.constant 0 : i32
    %c0_i32_2 = arith.constant 0 : i32
    return %c0_i32, %c0_i32_0, %c0_i32_1 : i32, i32, i32
  }
  func.func @transform_9(%arg0: i32, %arg1: i32) -> (i32, i32, i32) {
    %c0_i32 = arith.constant 0 : i32
    %c0_i32_0 = arith.constant 0 : i32
    %c0_i32_1 = arith.constant 0 : i32
    %c0_i32_2 = arith.constant 0 : i32
    return %c0_i32, %c0_i32_0, %c0_i32_1 : i32, i32, i32
  }
  func.func @transform_10(%arg0: i32, %arg1: i32) -> (i32, i32) {
    %c0_i32 = arith.constant 0 : i32
    %c0_i32_0 = arith.constant 0 : i32
    %c0_i32_1 = arith.constant 0 : i32
    return %c0_i32, %c0_i32_0 : i32, i32
  }
  func.func @transform_11(%arg0: i32, %arg1: i32) -> (i32, i32, i32, i32) {
    %c0_i32 = arith.constant 0 : i32
    %c0_i32_0 = arith.constant 0 : i32
    %c0_i32_1 = arith.constant 0 : i32
    return %arg0, %c0_i32, %arg1, %c0_i32_0 : i32, i32, i32, i32
  }
  func.func @transform_12(%arg0: i32, %arg1: i32) -> (i32, i32, i32) {
    %c0_i32 = arith.constant 0 : i32
    %c0_i32_0 = arith.constant 0 : i32
    return %arg0, %arg1, %c0_i32 : i32, i32, i32
  }
}

</mosaic_0001>

<llo_original>
// kernel: tpu_custom_call.1
$region0: #{tpu_custom_call.1}
  #allocation0 [shape = 'u32[]', space=smem, size = 0x4, offset = 0x4, fixed_abs, tag = 'smem constant byte address 0x4 - core index']
  #allocation1 [shape = 'u32[144,128]{1,0:T(1,128)}', space=vmem, size = 0x12000, scoped, tag = 'internal scratch']
  #allocation2 [shape = 'bf16[4,8,128]{2,1,0:T(8,128)(2,1)}', space=vmem, size = 0x2000, scoped, tag = 'scratch operand']
  #allocation3 [shape = 'bf16[4,8,128]{2,1,0:T(8,128)(2,1)}', space=vmem, size = 0x2000, scoped, tag = 'scratch operand']
  %s0 = inlined_call_operand.vmem [shape: bf16[2,8,32], index: 0, kind: input, shape index: {}]
  %s1 = inlined_call_operand.vmem [shape: bf16[2,8,32], index: 1, kind: input, shape index: {}]
  %s2 = inlined_call_operand.vmem [shape: f32[1,1,8,8], index: 2, kind: input, shape index: {}]
  %s3 = inlined_call_operand.vmem [shape: bf16[4,32,128], index: 3, kind: input, shape index: {}]
  %s4 = inlined_call_operand.vmem [shape: f32[4,1,128], index: 4, kind: input, shape index: {}]
  %s5 = inlined_call_operand.vmem [shape: bf16[4,32,128], index: 5, kind: input, shape index: {}]
  %s6 = inlined_call_operand.vmem [shape: f32[4,1,128], index: 6, kind: input, shape index: {}]
  %s7 = inlined_call_operand.vmem [shape: bf16[4,32,128], index: 7, kind: input, shape index: {}]
  %s8 = inlined_call_operand.vmem [shape: f32[4,1,128], index: 8, kind: input, shape index: {}]
  %s9 = inlined_call_operand.vmem [shape: bf16[4,128,32], index: 9, kind: input, shape index: {}]
  %s10 = inlined_call_operand.vmem [shape: f32[1,32], index: 10, kind: input, shape index: {}]
  %s11 = inlined_call_operand.hbm [shape: f32[2,4,8,8], index: 11, kind: output, shape index: {0}]
  %s12 = inlined_call_operand.hbm [shape: f32[2,8,32], index: 12, kind: output, shape index: {1}]
  %13 = xla_tuple %s11, %s12
  %s14 = sld [smem:[#allocation0]]
  $region89: #{tpu_custom_call.1} parent=0
    _
  %s16 = ssub.s32 1, %s14
  %s17 = scalar_select 0, %s16, %s14
  $region1: #{tpu_custom_call.1} parent=0
    #allocation4 [shape = 'u8[32768]{0}', space=vmem, size = 0x8000, scoped, tag = 'output window, operand 0']
    #allocation5 [shape = 's32[2]{0}', space=sflag, size = 0x8, scoped, tag = 'scoped memory for tpu_custom_call.1']
    #allocation6 [shape = 'u8[8192]{0}', space=vmem, size = 0x2000, scoped, tag = 'output window, operand 1']
    #allocation7 [shape = 's32[2]{0}', space=sflag, size = 0x8, scoped, tag = 'scoped memory for tpu_custom_call.1']
    %18 = vsyncpa [#allocation5], 0
    %s19 = scalar_lea.sflag [#allocation5], 1
    %20 = vsyncpa %s19, 0
    %21 = vsyncpa [#allocation7], 0
    %s22 = scalar_lea.sflag [#allocation7], 1
    %23 = vsyncpa %s22, 0
    loop: start=0, step=1, limit=4
    $region2: #{tpu_custom_call.1} parent=1 // loop_pre_header
      _
    $region3: #{tpu_custom_call.1} parent=1 // loop_header
      %s25 = sphi 0, %s29
      %p26 = scmp.ge.s32.totalorder %s25, 4
      %s32 = sphi 0, %s44
      %s33 = sphi 0, %s40
      %s34 = sphi 0, %s32
      %s35 = sphi 0, %s33
      %s36 = sphi 0, %s34
      %s37 = sphi 0, %s35
      %s47 = sphi 0, %s49
      %s50 = sphi 0, %s47
      %s51 = sphi 0, %s50
      %s67 = sphi 0, %s51
      %s75 = sphi 0, %s77
      %s78 = sphi 0, %s75
      %s79 = sphi 0, %s78
      %s95 = sphi 0, %s79
      %s101 = sphi 0, %s103
      %s104 = sphi 0, %s101
      %s105 = sphi 0, %s104
      %s121 = sphi 0, %s105
      %s125 = sphi 0, %s125
      %s127 = sphi 0, %s125
      %s128 = sphi 0, %s127
      %s142 = sphi 0, %s128
      %s146 = sphi 0, %s146
      %s148 = sphi 0, %s146
      %s149 = sphi 0, %s148
      %s163 = sphi 0, %s149
      %s167 = sphi 0, %s167
      %s169 = sphi 0, %s167
      %s170 = sphi 0, %s169
      %s184 = sphi 0, %s170
      %s188 = sphi 0, %s188
      %s190 = sphi 0, %s188
      %s191 = sphi 0, %s190
      %s205 = sphi 0, %s191
      %s209 = sphi 0, %s209
      %s211 = sphi 0, %s209
      %s212 = sphi 0, %s211
      %s226 = sphi 0, %s212
      %s230 = sphi 0, %s230
      %s232 = sphi 0, %s230
      %s233 = sphi 0, %s232
      %s247 = sphi 0, %s233
      %s251 = sphi 0, %s251
      %s253 = sphi 0, %s251
      %s254 = sphi 0, %s253
      %s268 = sphi 0, %s254
      %s272 = sphi 0, %s272
      %s274 = sphi 0, %s272
      %s275 = sphi 0, %s274
      %s289 = sphi 0, %s275
      %s297 = sphi 0, %s299
      %s300 = sphi 0, %s297
      %s301 = sphi 0, %s300
      %s317 = sphi 0, %s301
      %s325 = sphi 0, %s327
      %s328 = sphi 0, %s325
      %s329 = sphi 0, %s328
      %s345 = sphi 0, %s329
    $region4: #{tpu_custom_call.1} parent=1 // loop_header_branch
      %28 = sbr.rel (%p26) target = $region8
    $region5: #{tpu_custom_call.1} parent=1 // loop_body
      %s30 = ssub.s32 %s25, 1
      %s31 = ssub.s32 %s25, 2
      %s38 = sadd.s32 1, %s33
      %p39 = scmp.ge.s32.totalorder %s38, 1
      %s40 = scalar_select %p39, 0, %s38
      %s41 = sadd.s32 1, %s32
      %s42 = scalar_select %p39, %s41, %s32
      %p43 = scmp.ge.s32.totalorder %s42, 2
      %s44 = scalar_select %p43, 0, %s42
      %s45 = ssub.s32 %s32, %s44
      %p46 = scmp.eq.s32.totalorder %s45, 0
      %s48 = sadd.s32 %s47, 1
      %s49 = scalar_select %p46, %s47, %s48
      %p52 = pneg %p46
      %p53 = scmp.eq.s32.totalorder %s25, 1
      %p54 = por %p52, %p53
      %p55 = scmp.ne.s32.totalorder %s47, %s50
      %p56 = scmp.eq.s32.totalorder %s25, 0
      %p57 = por %p55, %p56
      %p58 = scmp.ne.s32.totalorder %s47, %s50
      %p59 = scmp.eq.s32.totalorder %s30, 1
      %p60 = por %p58, %p59
      %p61 = scmp.ne.s32.totalorder %s50, %s51
      %p62 = scmp.eq.s32.totalorder %s30, 0
      %p63 = por %p61, %p62
      %p64 = scmp.ne.s32.totalorder %s50, %s51
      %p65 = scmp.eq.s32.totalorder %s31, 1
      %p66 = por %p64, %p65
      %p68 = scmp.ne.s32.totalorder %s51, %s67
      %p69 = scmp.eq.s32.totalorder %s31, 0
      %p70 = por %p68, %p69
      %s71 = ssub.s32 %s32, %s44
      %s72 = ssub.s32 %s33, %s40
      %s73 = sor.u32 %s71, %s72
      %p74 = scmp.eq.s32.totalorder %s73, 0
      %s76 = sadd.s32 %s75, 1
      %s77 = scalar_select %p74, %s75, %s76
      %p80 = pneg %p74
      %p81 = scmp.eq.s32.totalorder %s25, 1
      %p82 = por %p80, %p81
      %p83 = scmp.ne.s32.totalorder %s75, %s78
      %p84 = scmp.eq.s32.totalorder %s25, 0
      %p85 = por %p83, %p84
      %p86 = scmp.ne.s32.totalorder %s75, %s78
      %p87 = scmp.eq.s32.totalorder %s30, 1
      %p88 = por %p86, %p87
      %p89 = scmp.ne.s32.totalorder %s78, %s79
      %p90 = scmp.eq.s32.totalorder %s30, 0
      %p91 = por %p89, %p90
      %p92 = scmp.ne.s32.totalorder %s78, %s79
      %p93 = scmp.eq.s32.totalorder %s31, 1
      %p94 = por %p92, %p93
      %p96 = scmp.ne.s32.totalorder %s79, %s95
      %p97 = scmp.eq.s32.totalorder %s31, 0
      %p98 = por %p96, %p97
      %s99 = ssub.s32 %s33, %s40
      %p100 = scmp.eq.s32.totalorder %s99, 0
      %s102 = sadd.s32 %s101, 1
      %s103 = scalar_select %p100, %s101, %s102
      %p106 = pneg %p100
      %p107 = scmp.eq.s32.totalorder %s25, 1
      %p108 = por %p106, %p107
      %p109 = scmp.ne.s32.totalorder %s101, %s104
      %p110 = scmp.eq.s32.totalorder %s25, 0
      %p111 = por %p109, %p110
      %p112 = scmp.ne.s32.totalorder %s101, %s104
      %p113 = scmp.eq.s32.totalorder %s30, 1
      %p114 = por %p112, %p113
      %p115 = scmp.ne.s32.totalorder %s104, %s105
      %p116 = scmp.eq.s32.totalorder %s30, 0
      %p117 = por %p115, %p116
      %p118 = scmp.ne.s32.totalorder %s104, %s105
      %p119 = scmp.eq.s32.totalorder %s31, 1
      %p120 = por %p118, %p119
      %p122 = scmp.ne.s32.totalorder %s105, %s121
      %p123 = scmp.eq.s32.totalorder %s31, 0
      %p124 = por %p122, %p123
      %s126 = sadd.s32 %s125, 1
      %p129 = scmp.eq.s32.totalorder %s25, 1
      %p130 = scmp.ne.s32.totalorder %s125, %s127
      %p131 = scmp.eq.s32.totalorder %s25, 0
      %p132 = por %p130, %p131
      %p133 = scmp.ne.s32.totalorder %s125, %s127
      %p134 = scmp.eq.s32.totalorder %s30, 1
      %p135 = por %p133, %p134
      %p136 = scmp.ne.s32.totalorder %s127, %s128
      %p137 = scmp.eq.s32.totalorder %s30, 0
      %p138 = por %p136, %p137
      %p139 = scmp.ne.s32.totalorder %s127, %s128
      %p140 = scmp.eq.s32.totalorder %s31, 1
      %p141 = por %p139, %p140
      %p143 = scmp.ne.s32.totalorder %s128, %s142
      %p144 = scmp.eq.s32.totalorder %s31, 0
      %p145 = por %p143, %p144
      %s147 = sadd.s32 %s146, 1
      %p150 = scmp.eq.s32.totalorder %s25, 1
      %p151 = scmp.ne.s32.totalorder %s146, %s148
      %p152 = scmp.eq.s32.totalorder %s25, 0
      %p153 = por %p151, %p152
      %p154 = scmp.ne.s32.totalorder %s146, %s148
      %p155 = scmp.eq.s32.totalorder %s30, 1
      %p156 = por %p154, %p155
      %p157 = scmp.ne.s32.totalorder %s148, %s149
      %p158 = scmp.eq.s32.totalorder %s30, 0
      %p159 = por %p157, %p158
      %p160 = scmp.ne.s32.totalorder %s148, %s149
      %p161 = scmp.eq.s32.totalorder %s31, 1
      %p162 = por %p160, %p161
      %p164 = scmp.ne.s32.totalorder %s149, %s163
      %p165 = scmp.eq.s32.totalorder %s31, 0
      %p166 = por %p164, %p165
      %s168 = sadd.s32 %s167, 1
      %p171 = scmp.eq.s32.totalorder %s25, 1
      %p172 = scmp.ne.s32.totalorder %s167, %s169
      %p173 = scmp.eq.s32.totalorder %s25, 0
      %p174 = por %p172, %p173
      %p175 = scmp.ne.s32.totalorder %s167, %s169
      %p176 = scmp.eq.s32.totalorder %s30, 1
      %p177 = por %p175, %p176
      %p178 = scmp.ne.s32.totalorder %s169, %s170
      %p179 = scmp.eq.s32.totalorder %s30, 0
      %p180 = por %p178, %p179
      %p181 = scmp.ne.s32.totalorder %s169, %s170
      %p182 = scmp.eq.s32.totalorder %s31, 1
      %p183 = por %p181, %p182
      %p185 = scmp.ne.s32.totalorder %s170, %s184
      %p186 = scmp.eq.s32.totalorder %s31, 0
      %p187 = por %p185, %p186
      %s189 = sadd.s32 %s188, 1
      %p192 = scmp.eq.s32.totalorder %s25, 1
      %p193 = scmp.ne.s32.totalorder %s188, %s190
      %p194 = scmp.eq.s32.totalorder %s25, 0
      %p195 = por %p193, %p194
      %p196 = scmp.ne.s32.totalorder %s188, %s190
      %p197 = scmp.eq.s32.totalorder %s30, 1
      %p198 = por %p196, %p197
      %p199 = scmp.ne.s32.totalorder %s190, %s191
      %p200 = scmp.eq.s32.totalorder %s30, 0
      %p201 = por %p199, %p200
      %p202 = scmp.ne.s32.totalorder %s190, %s191
      %p203 = scmp.eq.s32.totalorder %s31, 1
      %p204 = por %p202, %p203
      %p206 = scmp.ne.s32.totalorder %s191, %s205
      %p207 = scmp.eq.s32.totalorder %s31, 0
      %p208 = por %p206, %p207
      %s210 = sadd.s32 %s209, 1
      %p213 = scmp.eq.s32.totalorder %s25, 1
      %p214 = scmp.ne.s32.totalorder %s209, %s211
      %p215 = scmp.eq.s32.totalorder %s25, 0
      %p216 = por %p214, %p215
      %p217 = scmp.ne.s32.totalorder %s209, %s211
      %p218 = scmp.eq.s32.totalorder %s30, 1
      %p219 = por %p217, %p218
      %p220 = scmp.ne.s32.totalorder %s211, %s212
      %p221 = scmp.eq.s32.totalorder %s30, 0
      %p222 = por %p220, %p221
      %p223 = scmp.ne.s32.totalorder %s211, %s212
      %p224 = scmp.eq.s32.totalorder %s31, 1
      %p225 = por %p223, %p224
      %p227 = scmp.ne.s32.totalorder %s212, %s226
      %p228 = scmp.eq.s32.totalorder %s31, 0
      %p229 = por %p227, %p228
      %s231 = sadd.s32 %s230, 1
      %p234 = scmp.eq.s32.totalorder %s25, 1
      %p235 = scmp.ne.s32.totalorder %s230, %s232
      %p236 = scmp.eq.s32.totalorder %s25, 0
      %p237 = por %p235, %p236
      %p238 = scmp.ne.s32.totalorder %s230, %s232
      %p239 = scmp.eq.s32.totalorder %s30, 1
      %p240 = por %p238, %p239
      %p241 = scmp.ne.s32.totalorder %s232, %s233
      %p242 = scmp.eq.s32.totalorder %s30, 0
      %p243 = por %p241, %p242
      %p244 = scmp.ne.s32.totalorder %s232, %s233
      %p245 = scmp.eq.s32.totalorder %s31, 1
      %p246 = por %p244, %p245
      %p248 = scmp.ne.s32.totalorder %s233, %s247
      %p249 = scmp.eq.s32.totalorder %s31, 0
      %p250 = por %p248, %p249
      %s252 = sadd.s32 %s251, 1
      %p255 = scmp.eq.s32.totalorder %s25, 1
      %p256 = scmp.ne.s32.totalorder %s251, %s253
      %p257 = scmp.eq.s32.totalorder %s25, 0
      %p258 = por %p256, %p257
      %p259 = scmp.ne.s32.totalorder %s251, %s253
      %p260 = scmp.eq.s32.totalorder %s30, 1
      %p261 = por %p259, %p260
      %p262 = scmp.ne.s32.totalorder %s253, %s254
      %p263 = scmp.eq.s32.totalorder %s30, 0
      %p264 = por %p262, %p263
      %p265 = scmp.ne.s32.totalorder %s253, %s254
      %p266 = scmp.eq.s32.totalorder %s31, 1
      %p267 = por %p265, %p266
      %p269 = scmp.ne.s32.totalorder %s254, %s268
      %p270 = scmp.eq.s32.totalorder %s31, 0
      %p271 = por %p269, %p270
      %s273 = sadd.s32 %s272, 1
      %p276 = scmp.eq.s32.totalorder %s25, 1
      %p277 = scmp.ne.s32.totalorder %s272, %s274
      %p278 = scmp.eq.s32.totalorder %s25, 0
      %p279 = por %p277, %p278
      %p280 = scmp.ne.s32.totalorder %s272, %s274
      %p281 = scmp.eq.s32.totalorder %s30, 1
      %p282 = por %p280, %p281
      %p283 = scmp.ne.s32.totalorder %s274, %s275
      %p284 = scmp.eq.s32.totalorder %s30, 0
      %p285 = por %p283, %p284
      %p286 = scmp.ne.s32.totalorder %s274, %s275
      %p287 = scmp.eq.s32.totalorder %s31, 1
      %p288 = por %p286, %p287
      %p290 = scmp.ne.s32.totalorder %s275, %s289
      %p291 = scmp.eq.s32.totalorder %s31, 0
      %p292 = por %p290, %p291
      %s293 = ssub.s32 %s32, %s44
      %s294 = ssub.s32 %s33, %s40
      %s295 = sor.u32 %s293, %s294
      %p296 = scmp.eq.s32.totalorder %s295, 0
      %s298 = sadd.s32 %s297, 1
      %s299 = scalar_select %p296, %s297, %s298
      %p302 = pneg %p296
      %p303 = scmp.eq.s32.totalorder %s25, 1
      %p304 = por %p302, %p303
      %p305 = scmp.ne.s32.totalorder %s297, %s300
      %p306 = scmp.eq.s32.totalorder %s25, 0
      %p307 = por %p305, %p306
      %p308 = scmp.ne.s32.totalorder %s297, %s300
      %p309 = scmp.eq.s32.totalorder %s30, 1
      %p310 = por %p308, %p309
      %p311 = scmp.ne.s32.totalorder %s300, %s301
      %p312 = scmp.eq.s32.totalorder %s30, 0
      %p313 = por %p311, %p312
      %p314 = scmp.ne.s32.totalorder %s300, %s301
      %p315 = scmp.eq.s32.totalorder %s31, 1
      %p316 = por %p314, %p315
      %p318 = scmp.ne.s32.totalorder %s301, %s317
      %p319 = scmp.eq.s32.totalorder %s31, 0
      %p320 = por %p318, %p319
      %s321 = ssub.s32 %s32, %s44
      %s322 = ssub.s32 %s33, %s40
      %s323 = sor.u32 %s321, %s322
      %p324 = scmp.eq.s32.totalorder %s323, 0
      %s326 = sadd.s32 %s325, 1
      %s327 = scalar_select %p324, %s325, %s326
      %p330 = pneg %p324
      %p331 = scmp.eq.s32.totalorder %s25, 1
      %p332 = por %p330, %p331
      %p333 = scmp.ne.s32.totalorder %s325, %s328
      %p334 = scmp.eq.s32.totalorder %s25, 0
      %p335 = por %p333, %p334
      %p336 = scmp.ne.s32.totalorder %s325, %s328
      %p337 = scmp.eq.s32.totalorder %s30, 1
      %p338 = por %p336, %p337
      %p339 = scmp.ne.s32.totalorder %s328, %s329
      %p340 = scmp.eq.s32.totalorder %s30, 0
      %p341 = por %p339, %p340
      %p342 = scmp.ne.s32.totalorder %s328, %s329
      %p343 = scmp.eq.s32.totalorder %s31, 1
      %p344 = por %p342, %p343
      %p346 = scmp.ne.s32.totalorder %s329, %s345
      %p347 = scmp.eq.s32.totalorder %s31, 0
      %p348 = por %p346, %p347
      %p349 = scmp.le.s32.totalorder 1, %s25
      %p350 = scmp.lt.s32.totalorder %s25, 3
      %p351 = pnand %p349, %p350
      %p352 = pneg %p351
      // Predicated region
      $region9: #{tpu_custom_call.1} parent=5 // pred_check
        _
      $region10: #{tpu_custom_call.1} parent=5 // pred_check_branch
        %354 = sbr.rel (%p351) target = $region12
      $region11: #{tpu_custom_call.1} parent=5 // pred_region
        %s355 = ssub.s32 %s25, 1
        // Predicated region
        $region13: #{tpu_custom_call.1} parent=11 // pred_check
          %p356 = pneg %p117
        $region14: #{tpu_custom_call.1} parent=11 // pred_check_branch
          %358 = sbr.rel (%p356) target = $region16
        $region15: #{tpu_custom_call.1} parent=11 // pred_region
          %p359 = scmp.lt.s32.totalorder %s35, 0
          %s360 = scalar_select %p359, %s35, 0
          %s361 = smul.addr %s360, 8
          %s362 = scalar_lea.vmem %s2, %s361
        $region16: #{tpu_custom_call.1} parent=11 // pred_fallthru
          _
        // Predicated region
        $region17: #{tpu_custom_call.1} parent=11 // pred_check
          %p363 = pneg %p138
        $region18: #{tpu_custom_call.1} parent=11 // pred_check_branch
          %365 = sbr.rel (%p363) target = $region20
        $region19: #{tpu_custom_call.1} parent=11 // pred_region
          _
        $region20: #{tpu_custom_call.1} parent=11 // pred_fallthru
          _
        // Predicated region
        $region21: #{tpu_custom_call.1} parent=11 // pred_check
          %p366 = pneg %p159
        $region22: #{tpu_custom_call.1} parent=11 // pred_check_branch
          %368 = sbr.rel (%p366) target = $region24
        $region23: #{tpu_custom_call.1} parent=11 // pred_region
          _
        $region24: #{tpu_custom_call.1} parent=11 // pred_fallthru
          _
        // Predicated region
        $region25: #{tpu_custom_call.1} parent=11 // pred_check
          %p369 = pneg %p180
        $region26: #{tpu_custom_call.1} parent=11 // pred_check_branch
          %371 = sbr.rel (%p369) target = $region28
        $region27: #{tpu_custom_call.1} parent=11 // pred_region
          _
        $region28: #{tpu_custom_call.1} parent=11 // pred_fallthru
          _
        // Predicated region
        $region29: #{tpu_custom_call.1} parent=11 // pred_check
          %p372 = pneg %p201
        $region30: #{tpu_custom_call.1} parent=11 // pred_check_branch
          %374 = sbr.rel (%p372) target = $region32
        $region31: #{tpu_custom_call.1} parent=11 // pred_region
          _
        $region32: #{tpu_custom_call.1} parent=11 // pred_fallthru
          _
        // Predicated region
        $region33: #{tpu_custom_call.1} parent=11 // pred_check
          %p375 = pneg %p222
        $region34: #{tpu_custom_call.1} parent=11 // pred_check_branch
          %377 = sbr.rel (%p375) target = $region36
        $region35: #{tpu_custom_call.1} parent=11 // pred_region
          _
        $region36: #{tpu_custom_call.1} parent=11 // pred_fallthru
          _
        // Predicated region
        $region37: #{tpu_custom_call.1} parent=11 // pred_check
          %p378 = pneg %p243
        $region38: #{tpu_custom_call.1} parent=11 // pred_check_branch
          %380 = sbr.rel (%p378) target = $region40
        $region39: #{tpu_custom_call.1} parent=11 // pred_region
          _
        $region40: #{tpu_custom_call.1} parent=11 // pred_fallthru
          _
        // Predicated region
        $region41: #{tpu_custom_call.1} parent=11 // pred_check
          %p381 = pneg %p264
        $region42: #{tpu_custom_call.1} parent=11 // pred_check_branch
          %383 = sbr.rel (%p381) target = $region44
        $region43: #{tpu_custom_call.1} parent=11 // pred_region
          _
        $region44: #{tpu_custom_call.1} parent=11 // pred_fallthru
          _
        // Predicated region
        $region45: #{tpu_custom_call.1} parent=11 // pred_check
          %p384 = pneg %p285
        $region46: #{tpu_custom_call.1} parent=11 // pred_check_branch
          %386 = sbr.rel (%p384) target = $region48
        $region47: #{tpu_custom_call.1} parent=11 // pred_region
          _
        $region48: #{tpu_custom_call.1} parent=11 // pred_fallthru
          _
      $region12: #{tpu_custom_call.1} parent=5 // pred_fallthru
        _
      %p387 = scmp.lt.s32.totalorder %s25, 2
      // Predicated region
      $region49: #{tpu_custom_call.1} parent=5 // pred_check
        %p388 = pneg %p387
      $region50: #{tpu_custom_call.1} parent=5 // pred_check_branch
        %390 = sbr.rel (%p388) target = $region52
      $region51: #{tpu_custom_call.1} parent=5 // pred_region
        // Predicated region
        $region53: #{tpu_custom_call.1} parent=51 // pred_check
          %p391 = pneg %p57
        $region54: #{tpu_custom_call.1} parent=51 // pred_check_branch
          %393 = sbr.rel (%p391) target = $region56
        $region55: #{tpu_custom_call.1} parent=51 // pred_region
          %p394 = scmp.lt.s32.totalorder %s32, 1
          %s395 = scalar_select %p394, %s32, 1
          %s396 = smul.addr %s395, 4
          %s397 = scalar_lea.vmem %s0, %s396
        $region56: #{tpu_custom_call.1} parent=51 // pred_fallthru
          _
        // Predicated region
        $region57: #{tpu_custom_call.1} parent=51 // pred_check
          %p398 = pneg %p85
        $region58: #{tpu_custom_call.1} parent=51 // pred_check_branch
          %400 = sbr.rel (%p398) target = $region60
        $region59: #{tpu_custom_call.1} parent=51 // pred_region
          %p401 = scmp.lt.s32.totalorder %s32, 1
          %s402 = scalar_select %p401, %s32, 1
          %p403 = scmp.lt.s32.totalorder %s33, 0
          %s404 = scalar_select %p403, %s33, 0
          %s405 = sadd.s32 %s404, %s402
          %s406 = smul.addr %s405, 4
          %s407 = scalar_lea.vmem %s1, %s406
        $region60: #{tpu_custom_call.1} parent=51 // pred_fallthru
          _
      $region52: #{tpu_custom_call.1} parent=5 // pred_fallthru
        _
      %p408 = scmp.le.s32.totalorder 1, %s25
      %p409 = scmp.lt.s32.totalorder %s25, 3
      %p410 = pnand %p408, %p409
      %p411 = pneg %p410
      // Predicated region
      $region61: #{tpu_custom_call.1} parent=5 // pred_check
        _
      $region62: #{tpu_custom_call.1} parent=5 // pred_check_branch
        %413 = sbr.rel (%p410) target = $region64
      $region63: #{tpu_custom_call.1} parent=5 // pred_region
        %s414 = ssub.s32 %s25, 1
        %p415 = scmp.lt.s32.totalorder %s34, 1
        %s416 = scalar_select %p415, %s34, 1
        %s417 = smul.addr %s416, 4
        %s418 = scalar_lea.vmem %s0, %s417
        %p419 = pneg %p63
        %p420 = pneg %p60
        %p421 = scmp.lt.s32.totalorder %s34, 1
        %s422 = scalar_select %p421, %s34, 1
        %p423 = scmp.lt.s32.totalorder %s35, 0
        %s424 = scalar_select %p423, %s35, 0
        %s425 = sadd.s32 %s424, %s422
        %s426 = smul.addr %s425, 4
        %s427 = scalar_lea.vmem %s1, %s426
        %p428 = pneg %p91
        %p429 = pneg %p88
        %p430 = scmp.lt.s32.totalorder %s35, 0
        %s431 = scalar_select %p430, %s35, 0
        %s432 = smul.addr %s431, 8
        %s433 = scalar_lea.vmem %s2, %s432
        %p434 = pneg %p117
        %p435 = pneg %p114
        %p436 = pneg %p138
        %p437 = pneg %p135
        %p438 = pneg %p159
        %p439 = pneg %p156
        %p440 = pneg %p180
        %p441 = pneg %p177
        %p442 = pneg %p201
        %p443 = pneg %p198
        %p444 = pneg %p222
        %p445 = pneg %p219
        %p446 = pneg %p243
        %p447 = pneg %p240
        %p448 = pneg %p264
        %p449 = pneg %p261
        %p450 = pneg %p285
        %p451 = pneg %p282
        %p452 = pneg %p313
        %p453 = pneg %p310
        %s454 = sand.u32 %s300, 1
        %s455 = scalar_lea.sflag [#allocation5], %s454
        %s456 = sand.u32 %s300, 1
        %s457 = smul.addr %s456, 32
        %s458 = scalar_lea.vmem [#allocation4], %s457
        %p459 = pneg %p341
        %p460 = pneg %p338
        %s461 = sand.u32 %s328, 1
        %s462 = scalar_lea.sflag [#allocation7], %s461
        %s463 = sand.u32 %s328, 1
        %s464 = smul.addr %s463, 8
        %s465 = scalar_lea.vmem [#allocation6], %s464
        %p466 = scmp.lt.s32.totalorder %s34, 1
        %s467 = scalar_select %p466, %s34, 1
        %s468 = smul.addr %s467, 4
        %s469 = scalar_lea.vmem %s0, %s468
        %p470 = scmp.lt.s32.totalorder %s34, 1
        %s471 = scalar_select %p470, %s34, 1
        %p472 = scmp.lt.s32.totalorder %s35, 0
        %s473 = scalar_select %p472, %s35, 0
        %s474 = sadd.s32 %s473, %s471
        %s475 = smul.addr %s474, 4
        %s476 = scalar_lea.vmem %s1, %s475
        %p477 = scmp.lt.s32.totalorder %s35, 0
        %s478 = scalar_select %p477, %s35, 0
        %s479 = smul.addr %s478, 8
        %s480 = scalar_lea.vmem %s2, %s479
        %p482 = scmp.eq.s32.totalorder %s35, 0
        // Predicated region
        $region65: #{tpu_custom_call.1} parent=63 // pred_check
          %p483 = pneg %p482
        $region66: #{tpu_custom_call.1} parent=63 // pred_check_branch
          %485 = sbr.rel (%p483) target = $region68
        $region67: #{tpu_custom_call.1} parent=63 // pred_region
          %v486 = vld [vmem:[%s469] sm:$0xf]
          %v487 = vld [vmem:[%s5] sm:$0xf]
          %v488 = vld [vmem:[%s5 + $0x4] sm:$0xf]
          %v489 = vld [vmem:[%s5 + $0x8] sm:$0xf]
          %v490 = vld [vmem:[%s5 + $0xc] sm:$0xf]
          %v491 = vld [vmem:[%s6] sm:$0x1]
          %v493 = vlaneseq
          %v494 = vshrl.u32 %v493, 7
          %v495 = vsub.s32 0, %v494
          %v496 = vrot.slane %v491, %v495
          %v502 = vunpack.c.l.b16 %v487
          %v503 = vunpack.c.l.b16 %v488
          %v504 = vunpack.c.l.b16 %v489
          %v505 = vunpack.c.l.b16 %v490
          %v506 = vpack.c.b16 %v503, %v502
          %v507 = vpack.c.b16 %v505, %v504
          %vm510 = vcmask 261120
          %v512 = vsel %vm510, %v486, 0
          %514 = vmatprep.subr.bf16.mxu0 0
          %515 = vmatpush1.bf16.msra.mxu0 0
          %516 = vmatprep.subr.bf16.mxu0 0
          %517 = vmatpush1.bf16.msra.mxu0 0
          %518 = vmatprep.subr.bf16.mxu0 0
          %519 = vmatpush1.bf16.msra.mxu0 0
          %520 = vmatprep.subr.bf16.mxu0 0
          %521 = vmatpush1.bf16.msra.mxu0 0
          %522 = vmatprep.subr.bf16.mxu0 0
          %523 = vmatpush1.bf16.msra.mxu0 0
          %524 = vmatprep.subr.bf16.mxu0 0
          %525 = vmatpush1.bf16.msra.mxu0 0
          %526 = vmatprep.subr.bf16.mxu0 0
          %527 = vmatpush1.bf16.msra.mxu0 %v507
          %528 = vmatprep.subr.bf16.mxu0 0
          %529 = vmatpush1.bf16.msra.mxu0 %v506
          %530 = vmatprep.subr.bf16.mxu0 0
          %531 = vmatpush2.bf16.msra.mxu0 0
          %532 = vmatprep.subr.bf16.mxu0 0
          %533 = vmatpush2.bf16.msra.mxu0 0
          %534 = vmatprep.subr.bf16.mxu0 0
          %535 = vmatpush2.bf16.msra.mxu0 0
          %536 = vmatprep.subr.bf16.mxu0 0
          %537 = vmatpush2.bf16.msra.mxu0 0
          %538 = vmatprep.subr.bf16.mxu0 0
          %539 = vmatpush2.bf16.msra.mxu0 0
          %540 = vmatprep.subr.bf16.mxu0 0
          %541 = vmatpush2.bf16.msra.mxu0 0
          %542 = vmatprep.subr.bf16.mxu0 0
          %543 = vmatpush2.bf16.msra.mxu0 0
          %544 = vmatprep.subr.bf16.mxu0 0
          %545 = vmatpush2.bf16.msra.mxu0 0
          %546 = vmatprep.mubr.bf16.mxu0 0
          %547 = vmatmul.mubr.bf16.gmra.mxu0 %v512
          %v548 = vpop.f32.mrf.mxu0
          %v549 = vadd.f32 %v496, %v548
          %v550 = vpop.f32.mrf.mxu0
          %v551 = vpop.f32.mrf.mxu0
          %v552 = vpop.f32.mrf.mxu0
          %553 = vdwg.mxu0
          %v554 = vpack.c.bf16 %v549, %v549
          %555 = vst [vmem:[#allocation2] sm:$0xf] %v554
          %v556 = vld [vmem:[%s7] sm:$0xf]
          %v557 = vld [vmem:[%s7 + $0x4] sm:$0xf]
          %v558 = vld [vmem:[%s7 + $0x8] sm:$0xf]
          %v559 = vld [vmem:[%s7 + $0xc] sm:$0xf]
          %v560 = vld [vmem:[%s8] sm:$0x1]
          %v562 = vlaneseq
          %v563 = vshrl.u32 %v562, 7
          %v564 = vsub.s32 0, %v563
          %v565 = vrot.slane %v560, %v564
          %v571 = vunpack.c.l.b16 %v556
          %v572 = vunpack.c.l.b16 %v557
          %v573 = vunpack.c.l.b16 %v558
          %v574 = vunpack.c.l.b16 %v559
          %v575 = vpack.c.b16 %v572, %v571
          %v576 = vpack.c.b16 %v574, %v573
          %579 = vmatprep.subr.bf16.mxu0 0
          %580 = vmatpush1.bf16.msra.mxu0 0
          %581 = vmatprep.subr.bf16.mxu0 0
          %582 = vmatpush1.bf16.msra.mxu0 0
          %583 = vmatprep.subr.bf16.mxu0 0
          %584 = vmatpush1.bf16.msra.mxu0 0
          %585 = vmatprep.subr.bf16.mxu0 0
          %586 = vmatpush1.bf16.msra.mxu0 0
          %587 = vmatprep.subr.bf16.mxu0 0
          %588 = vmatpush1.bf16.msra.mxu0 0
          %589 = vmatprep.subr.bf16.mxu0 0
          %590 = vmatpush1.bf16.msra.mxu0 0
          %591 = vmatprep.subr.bf16.mxu0 0
          %592 = vmatpush1.bf16.msra.mxu0 %v576
          %593 = vmatprep.subr.bf16.mxu0 0
          %594 = vmatpush1.bf16.msra.mxu0 %v575
          %595 = vmatprep.subr.bf16.mxu0 0
          %596 = vmatpush2.bf16.msra.mxu0 0
          %597 = vmatprep.subr.bf16.mxu0 0
          %598 = vmatpush2.bf16.msra.mxu0 0
          %599 = vmatprep.subr.bf16.mxu0 0
          %600 = vmatpush2.bf16.msra.mxu0 0
          %601 = vmatprep.subr.bf16.mxu0 0
          %602 = vmatpush2.bf16.msra.mxu0 0
          %603 = vmatprep.subr.bf16.mxu0 0
          %604 = vmatpush2.bf16.msra.mxu0 0
          %605 = vmatprep.subr.bf16.mxu0 0
          %606 = vmatpush2.bf16.msra.mxu0 0
          %607 = vmatprep.subr.bf16.mxu0 0
          %608 = vmatpush2.bf16.msra.mxu0 0
          %609 = vmatprep.subr.bf16.mxu0 0
          %610 = vmatpush2.bf16.msra.mxu0 0
          %611 = vmatprep.mubr.bf16.mxu0 0
          %612 = vmatmul.mubr.bf16.gmra.mxu0 %v512
          %v613 = vpop.f32.mrf.mxu0
          %v614 = vadd.f32 %v565, %v613
          %v615 = vpop.f32.mrf.mxu0
          %v616 = vpop.f32.mrf.mxu0
          %v617 = vpop.f32.mrf.mxu0
          %618 = vdwg.mxu0
          %v619 = vpack.c.bf16 %v614, %v614
          %620 = vst [vmem:[#allocation3] sm:$0xf] %v619
          %s621 = scalar_lea.vmem %s5, 16
          %v622 = vld [vmem:[%s621] sm:$0xf]
          %v623 = vld [vmem:[%s621 + $0x4] sm:$0xf]
          %v624 = vld [vmem:[%s621 + $0x8] sm:$0xf]
          %v625 = vld [vmem:[%s621 + $0xc] sm:$0xf]
          %s626 = scalar_lea.vmem %s6, 1
          %v627 = vld [vmem:[%s626] sm:$0x1]
          %v629 = vlaneseq
          %v630 = vshrl.u32 %v629, 7
          %v631 = vsub.s32 0, %v630
          %v632 = vrot.slane %v627, %v631
          %v638 = vunpack.c.l.b16 %v622
          %v639 = vunpack.c.l.b16 %v623
          %v640 = vunpack.c.l.b16 %v624
          %v641 = vunpack.c.l.b16 %v625
          %v642 = vpack.c.b16 %v639, %v638
          %v643 = vpack.c.b16 %v641, %v640
          %646 = vmatprep.subr.bf16.mxu0 0
          %647 = vmatpush1.bf16.msra.mxu0 0
          %648 = vmatprep.subr.bf16.mxu0 0
          %649 = vmatpush1.bf16.msra.mxu0 0
          %650 = vmatprep.subr.bf16.mxu0 0
          %651 = vmatpush1.bf16.msra.mxu0 0
          %652 = vmatprep.subr.bf16.mxu0 0
          %653 = vmatpush1.bf16.msra.mxu0 0
          %654 = vmatprep.subr.bf16.mxu0 0
          %655 = vmatpush1.bf16.msra.mxu0 0
          %656 = vmatprep.subr.bf16.mxu0 0
          %657 = vmatpush1.bf16.msra.mxu0 0
          %658 = vmatprep.subr.bf16.mxu0 0
          %659 = vmatpush1.bf16.msra.mxu0 %v643
          %660 = vmatprep.subr.bf16.mxu0 0
          %661 = vmatpush1.bf16.msra.mxu0 %v642
          %662 = vmatprep.subr.bf16.mxu0 0
          %663 = vmatpush2.bf16.msra.mxu0 0
          %664 = vmatprep.subr.bf16.mxu0 0
          %665 = vmatpush2.bf16.msra.mxu0 0
          %666 = vmatprep.subr.bf16.mxu0 0
          %667 = vmatpush2.bf16.msra.mxu0 0
          %668 = vmatprep.subr.bf16.mxu0 0
          %669 = vmatpush2.bf16.msra.mxu0 0
          %670 = vmatprep.subr.bf16.mxu0 0
          %671 = vmatpush2.bf16.msra.mxu0 0
          %672 = vmatprep.subr.bf16.mxu0 0
          %673 = vmatpush2.bf16.msra.mxu0 0
          %674 = vmatprep.subr.bf16.mxu0 0
          %675 = vmatpush2.bf16.msra.mxu0 0
          %676 = vmatprep.subr.bf16.mxu0 0
          %677 = vmatpush2.bf16.msra.mxu0 0
          %678 = vmatprep.mubr.bf16.mxu0 0
          %679 = vmatmul.mubr.bf16.gmra.mxu0 %v512
          %v680 = vpop.f32.mrf.mxu0
          %v681 = vadd.f32 %v632, %v680
          %v682 = vpop.f32.mrf.mxu0
          %v683 = vpop.f32.mrf.mxu0
          %v684 = vpop.f32.mrf.mxu0
          %685 = vdwg.mxu0
          %v686 = vpack.c.bf16 %v681, %v681
          %s687 = scalar_lea.vmem [#allocation2], 4
          %688 = vst [vmem:[%s687] sm:$0xf] %v686
          %s689 = scalar_lea.vmem %s7, 16
          %v690 = vld [vmem:[%s689] sm:$0xf]
          %v691 = vld [vmem:[%s689 + $0x4] sm:$0xf]
          %v692 = vld [vmem:[%s689 + $0x8] sm:$0xf]
          %v693 = vld [vmem:[%s689 + $0xc] sm:$0xf]
          %s694 = scalar_lea.vmem %s8, 1
          %v695 = vld [vmem:[%s694] sm:$0x1]
          %v697 = vlaneseq
          %v698 = vshrl.u32 %v697, 7
          %v699 = vsub.s32 0, %v698
          %v700 = vrot.slane %v695, %v699
          %v706 = vunpack.c.l.b16 %v690
          %v707 = vunpack.c.l.b16 %v691
          %v708 = vunpack.c.l.b16 %v692
          %v709 = vunpack.c.l.b16 %v693
          %v710 = vpack.c.b16 %v707, %v706
          %v711 = vpack.c.b16 %v709, %v708
          %714 = vmatprep.subr.bf16.mxu0 0
          %715 = vmatpush1.bf16.msra.mxu0 0
          %716 = vmatprep.subr.bf16.mxu0 0
          %717 = vmatpush1.bf16.msra.mxu0 0
          %718 = vmatprep.subr.bf16.mxu0 0
          %719 = vmatpush1.bf16.msra.mxu0 0
          %720 = vmatprep.subr.bf16.mxu0 0
          %721 = vmatpush1.bf16.msra.mxu0 0
          %722 = vmatprep.subr.bf16.mxu0 0
          %723 = vmatpush1.bf16.msra.mxu0 0
          %724 = vmatprep.subr.bf16.mxu0 0
          %725 = vmatpush1.bf16.msra.mxu0 0
          %726 = vmatprep.subr.bf16.mxu0 0
          %727 = vmatpush1.bf16.msra.mxu0 %v711
          %728 = vmatprep.subr.bf16.mxu0 0
          %729 = vmatpush1.bf16.msra.mxu0 %v710
          %730 = vmatprep.subr.bf16.mxu0 0
          %731 = vmatpush2.bf16.msra.mxu0 0
          %732 = vmatprep.subr.bf16.mxu0 0
          %733 = vmatpush2.bf16.msra.mxu0 0
          %734 = vmatprep.subr.bf16.mxu0 0
          %735 = vmatpush2.bf16.msra.mxu0 0
          %736 = vmatprep.subr.bf16.mxu0 0
          %737 = vmatpush2.bf16.msra.mxu0 0
          %738 = vmatprep.subr.bf16.mxu0 0
          %739 = vmatpush2.bf16.msra.mxu0 0
          %740 = vmatprep.subr.bf16.mxu0 0
          %741 = vmatpush2.bf16.msra.mxu0 0
          %742 = vmatprep.subr.bf16.mxu0 0
          %743 = vmatpush2.bf16.msra.mxu0 0
          %744 = vmatprep.subr.bf16.mxu0 0
          %745 = vmatpush2.bf16.msra.mxu0 0
          %746 = vmatprep.mubr.bf16.mxu0 0
          %747 = vmatmul.mubr.bf16.gmra.mxu0 %v512
          %v748 = vpop.f32.mrf.mxu0
          %v749 = vadd.f32 %v700, %v748
          %v750 = vpop.f32.mrf.mxu0
          %v751 = vpop.f32.mrf.mxu0
          %v752 = vpop.f32.mrf.mxu0
          %753 = vdwg.mxu0
          %v754 = vpack.c.bf16 %v749, %v749
          %s755 = scalar_lea.vmem [#allocation3], 4
          %756 = vst [vmem:[%s755] sm:$0xf] %v754
          %s757 = scalar_lea.vmem %s5, 32
          %v758 = vld [vmem:[%s757] sm:$0xf]
          %v759 = vld [vmem:[%s757 + $0x4] sm:$0xf]
          %v760 = vld [vmem:[%s757 + $0x8] sm:$0xf]
          %v761 = vld [vmem:[%s757 + $0xc] sm:$0xf]
          %s762 = scalar_lea.vmem %s6, 2
          %v763 = vld [vmem:[%s762] sm:$0x1]
          %v765 = vlaneseq
          %v766 = vshrl.u32 %v765, 7
          %v767 = vsub.s32 0, %v766
          %v768 = vrot.slane %v763, %v767
          %v774 = vunpack.c.l.b16 %v758
          %v775 = vunpack.c.l.b16 %v759
          %v776 = vunpack.c.l.b16 %v760
          %v777 = vunpack.c.l.b16 %v761
          %v778 = vpack.c.b16 %v775, %v774
          %v779 = vpack.c.b16 %v777, %v776
          %782 = vmatprep.subr.bf16.mxu0 0
          %783 = vmatpush1.bf16.msra.mxu0 0
          %784 = vmatprep.subr.bf16.mxu0 0
          %785 = vmatpush1.bf16.msra.mxu0 0
          %786 = vmatprep.subr.bf16.mxu0 0
          %787 = vmatpush1.bf16.msra.mxu0 0
          %788 = vmatprep.subr.bf16.mxu0 0
          %789 = vmatpush1.bf16.msra.mxu0 0
          %790 = vmatprep.subr.bf16.mxu0 0
          %791 = vmatpush1.bf16.msra.mxu0 0
          %792 = vmatprep.subr.bf16.mxu0 0
          %793 = vmatpush1.bf16.msra.mxu0 0
          %794 = vmatprep.subr.bf16.mxu0 0
          %795 = vmatpush1.bf16.msra.mxu0 %v779
          %796 = vmatprep.subr.bf16.mxu0 0
          %797 = vmatpush1.bf16.msra.mxu0 %v778
          %798 = vmatprep.subr.bf16.mxu0 0
          %799 = vmatpush2.bf16.msra.mxu0 0
          %800 = vmatprep.subr.bf16.mxu0 0
          %801 = vmatpush2.bf16.msra.mxu0 0
          %802 = vmatprep.subr.bf16.mxu0 0
          %803 = vmatpush2.bf16.msra.mxu0 0
          %804 = vmatprep.subr.bf16.mxu0 0
          %805 = vmatpush2.bf16.msra.mxu0 0
          %806 = vmatprep.subr.bf16.mxu0 0
          %807 = vmatpush2.bf16.msra.mxu0 0
          %808 = vmatprep.subr.bf16.mxu0 0
          %809 = vmatpush2.bf16.msra.mxu0 0
          %810 = vmatprep.subr.bf16.mxu0 0
          %811 = vmatpush2.bf16.msra.mxu0 0
          %812 = vmatprep.subr.bf16.mxu0 0
          %813 = vmatpush2.bf16.msra.mxu0 0
          %814 = vmatprep.mubr.bf16.mxu0 0
          %815 = vmatmul.mubr.bf16.gmra.mxu0 %v512
          %v816 = vpop.f32.mrf.mxu0
          %v817 = vadd.f32 %v768, %v816
          %v818 = vpop.f32.mrf.mxu0
          %v819 = vpop.f32.mrf.mxu0
          %v820 = vpop.f32.mrf.mxu0
          %821 = vdwg.mxu0
          %v822 = vpack.c.bf16 %v817, %v817
          %s823 = scalar_lea.vmem [#allocation2], 8
          %824 = vst [vmem:[%s823] sm:$0xf] %v822
          %s825 = scalar_lea.vmem %s7, 32
          %v826 = vld [vmem:[%s825] sm:$0xf]
          %v827 = vld [vmem:[%s825 + $0x4] sm:$0xf]
          %v828 = vld [vmem:[%s825 + $0x8] sm:$0xf]
          %v829 = vld [vmem:[%s825 + $0xc] sm:$0xf]
          %s830 = scalar_lea.vmem %s8, 2
          %v831 = vld [vmem:[%s830] sm:$0x1]
          %v833 = vlaneseq
          %v834 = vshrl.u32 %v833, 7
          %v835 = vsub.s32 0, %v834
          %v836 = vrot.slane %v831, %v835
          %v842 = vunpack.c.l.b16 %v826
          %v843 = vunpack.c.l.b16 %v827
          %v844 = vunpack.c.l.b16 %v828
          %v845 = vunpack.c.l.b16 %v829
          %v846 = vpack.c.b16 %v843, %v842
          %v847 = vpack.c.b16 %v845, %v844
          %850 = vmatprep.subr.bf16.mxu0 0
          %851 = vmatpush1.bf16.msra.mxu0 0
          %852 = vmatprep.subr.bf16.mxu0 0
          %853 = vmatpush1.bf16.msra.mxu0 0
          %854 = vmatprep.subr.bf16.mxu0 0
          %855 = vmatpush1.bf16.msra.mxu0 0
          %856 = vmatprep.subr.bf16.mxu0 0
          %857 = vmatpush1.bf16.msra.mxu0 0
          %858 = vmatprep.subr.bf16.mxu0 0
          %859 = vmatpush1.bf16.msra.mxu0 0
          %860 = vmatprep.subr.bf16.mxu0 0
          %861 = vmatpush1.bf16.msra.mxu0 0
          %862 = vmatprep.subr.bf16.mxu0 0
          %863 = vmatpush1.bf16.msra.mxu0 %v847
          %864 = vmatprep.subr.bf16.mxu0 0
          %865 = vmatpush1.bf16.msra.mxu0 %v846
          %866 = vmatprep.subr.bf16.mxu0 0
          %867 = vmatpush2.bf16.msra.mxu0 0
          %868 = vmatprep.subr.bf16.mxu0 0
          %869 = vmatpush2.bf16.msra.mxu0 0
          %870 = vmatprep.subr.bf16.mxu0 0
          %871 = vmatpush2.bf16.msra.mxu0 0
          %872 = vmatprep.subr.bf16.mxu0 0
          %873 = vmatpush2.bf16.msra.mxu0 0
          %874 = vmatprep.subr.bf16.mxu0 0
          %875 = vmatpush2.bf16.msra.mxu0 0
          %876 = vmatprep.subr.bf16.mxu0 0
          %877 = vmatpush2.bf16.msra.mxu0 0
          %878 = vmatprep.subr.bf16.mxu0 0
          %879 = vmatpush2.bf16.msra.mxu0 0
          %880 = vmatprep.subr.bf16.mxu0 0
          %881 = vmatpush2.bf16.msra.mxu0 0
          %882 = vmatprep.mubr.bf16.mxu0 0
          %883 = vmatmul.mubr.bf16.gmra.mxu0 %v512
          %v884 = vpop.f32.mrf.mxu0
          %v885 = vadd.f32 %v836, %v884
          %v886 = vpop.f32.mrf.mxu0
          %v887 = vpop.f32.mrf.mxu0
          %v888 = vpop.f32.mrf.mxu0
          %889 = vdwg.mxu0
          %v890 = vpack.c.bf16 %v885, %v885
          %s891 = scalar_lea.vmem [#allocation3], 8
          %892 = vst [vmem:[%s891] sm:$0xf] %v890
          %s893 = scalar_lea.vmem %s5, 48
          %v894 = vld [vmem:[%s893] sm:$0xf]
          %v895 = vld [vmem:[%s893 + $0x4] sm:$0xf]
          %v896 = vld [vmem:[%s893 + $0x8] sm:$0xf]
          %v897 = vld [vmem:[%s893 + $0xc] sm:$0xf]
          %s898 = scalar_lea.vmem %s6, 3
          %v899 = vld [vmem:[%s898] sm:$0x1]
          %v901 = vlaneseq
          %v902 = vshrl.u32 %v901, 7
          %v903 = vsub.s32 0, %v902
          %v904 = vrot.slane %v899, %v903
          %v910 = vunpack.c.l.b16 %v894
          %v911 = vunpack.c.l.b16 %v895
          %v912 = vunpack.c.l.b16 %v896
          %v913 = vunpack.c.l.b16 %v897
          %v914 = vpack.c.b16 %v911, %v910
          %v915 = vpack.c.b16 %v913, %v912
          %918 = vmatprep.subr.bf16.mxu0 0
          %919 = vmatpush1.bf16.msra.mxu0 0
          %920 = vmatprep.subr.bf16.mxu0 0
          %921 = vmatpush1.bf16.msra.mxu0 0
          %922 = vmatprep.subr.bf16.mxu0 0
          %923 = vmatpush1.bf16.msra.mxu0 0
          %924 = vmatprep.subr.bf16.mxu0 0
          %925 = vmatpush1.bf16.msra.mxu0 0
          %926 = vmatprep.subr.bf16.mxu0 0
          %927 = vmatpush1.bf16.msra.mxu0 0
          %928 = vmatprep.subr.bf16.mxu0 0
          %929 = vmatpush1.bf16.msra.mxu0 0
          %930 = vmatprep.subr.bf16.mxu0 0
          %931 = vmatpush1.bf16.msra.mxu0 %v915
          %932 = vmatprep.subr.bf16.mxu0 0
          %933 = vmatpush1.bf16.msra.mxu0 %v914
          %934 = vmatprep.subr.bf16.mxu0 0
          %935 = vmatpush2.bf16.msra.mxu0 0
          %936 = vmatprep.subr.bf16.mxu0 0
          %937 = vmatpush2.bf16.msra.mxu0 0
          %938 = vmatprep.subr.bf16.mxu0 0
          %939 = vmatpush2.bf16.msra.mxu0 0
          %940 = vmatprep.subr.bf16.mxu0 0
          %941 = vmatpush2.bf16.msra.mxu0 0
          %942 = vmatprep.subr.bf16.mxu0 0
          %943 = vmatpush2.bf16.msra.mxu0 0
          %944 = vmatprep.subr.bf16.mxu0 0
          %945 = vmatpush2.bf16.msra.mxu0 0
          %946 = vmatprep.subr.bf16.mxu0 0
          %947 = vmatpush2.bf16.msra.mxu0 0
          %948 = vmatprep.subr.bf16.mxu0 0
          %949 = vmatpush2.bf16.msra.mxu0 0
          %950 = vmatprep.mubr.bf16.mxu0 0
          %951 = vmatmul.mubr.bf16.gmra.mxu0 %v512
          %v952 = vpop.f32.mrf.mxu0
          %v953 = vadd.f32 %v904, %v952
          %v954 = vpop.f32.mrf.mxu0
          %v955 = vpop.f32.mrf.mxu0
          %v956 = vpop.f32.mrf.mxu0
          %957 = vdwg.mxu0
          %v958 = vpack.c.bf16 %v953, %v953
          %s959 = scalar_lea.vmem [#allocation2], 12
          %960 = vst [vmem:[%s959] sm:$0xf] %v958
          %s961 = scalar_lea.vmem %s7, 48
          %v962 = vld [vmem:[%s961] sm:$0xf]
          %v963 = vld [vmem:[%s961 + $0x4] sm:$0xf]
          %v964 = vld [vmem:[%s961 + $0x8] sm:$0xf]
          %v965 = vld [vmem:[%s961 + $0xc] sm:$0xf]
          %s966 = scalar_lea.vmem %s8, 3
          %v967 = vld [vmem:[%s966] sm:$0x1]
          %v969 = vlaneseq
          %v970 = vshrl.u32 %v969, 7
          %v971 = vsub.s32 0, %v970
          %v972 = vrot.slane %v967, %v971
          %v978 = vunpack.c.l.b16 %v962
          %v979 = vunpack.c.l.b16 %v963
          %v980 = vunpack.c.l.b16 %v964
          %v981 = vunpack.c.l.b16 %v965
          %v982 = vpack.c.b16 %v979, %v978
          %v983 = vpack.c.b16 %v981, %v980
          %986 = vmatprep.subr.bf16.mxu0 0
          %987 = vmatpush1.bf16.msra.mxu0 0
          %988 = vmatprep.subr.bf16.mxu0 0
          %989 = vmatpush1.bf16.msra.mxu0 0
          %990 = vmatprep.subr.bf16.mxu0 0
          %991 = vmatpush1.bf16.msra.mxu0 0
          %992 = vmatprep.subr.bf16.mxu0 0
          %993 = vmatpush1.bf16.msra.mxu0 0
          %994 = vmatprep.subr.bf16.mxu0 0
          %995 = vmatpush1.bf16.msra.mxu0 0
          %996 = vmatprep.subr.bf16.mxu0 0
          %997 = vmatpush1.bf16.msra.mxu0 0
          %998 = vmatprep.subr.bf16.mxu0 0
          %999 = vmatpush1.bf16.msra.mxu0 %v983
          %1000 = vmatprep.subr.bf16.mxu0 0
          %1001 = vmatpush1.bf16.msra.mxu0 %v982
          %1002 = vmatprep.subr.bf16.mxu0 0
          %1003 = vmatpush2.bf16.msra.mxu0 0
          %1004 = vmatprep.subr.bf16.mxu0 0
          %1005 = vmatpush2.bf16.msra.mxu0 0
          %1006 = vmatprep.subr.bf16.mxu0 0
          %1007 = vmatpush2.bf16.msra.mxu0 0
          %1008 = vmatprep.subr.bf16.mxu0 0
          %1009 = vmatpush2.bf16.msra.mxu0 0
          %1010 = vmatprep.subr.bf16.mxu0 0
          %1011 = vmatpush2.bf16.msra.mxu0 0
          %1012 = vmatprep.subr.bf16.mxu0 0
          %1013 = vmatpush2.bf16.msra.mxu0 0
          %1014 = vmatprep.subr.bf16.mxu0 0
          %1015 = vmatpush2.bf16.msra.mxu0 0
          %1016 = vmatprep.subr.bf16.mxu0 0
          %1017 = vmatpush2.bf16.msra.mxu0 0
          %1018 = vmatprep.mubr.bf16.mxu0 0
          %1019 = vmatmul.mubr.bf16.gmra.mxu0 %v512
          %v1020 = vpop.f32.mrf.mxu0
          %v1021 = vadd.f32 %v972, %v1020
          %v1022 = vpop.f32.mrf.mxu0
          %v1023 = vpop.f32.mrf.mxu0
          %v1024 = vpop.f32.mrf.mxu0
          %1025 = vdwg.mxu0
          %v1026 = vpack.c.bf16 %v1021, %v1021
          %s1027 = scalar_lea.vmem [#allocation3], 12
          %1028 = vst [vmem:[%s1027] sm:$0xf] %v1026
        $region68: #{tpu_custom_call.1} parent=63 // pred_fallthru
          _
        %v1029 = vld [vmem:[%s476] sm:$0xf]
        %v1030 = vld [vmem:[%s480] sm:$0xff]
        %v1031 = vld [vmem:[%s10] sm:$0x1]
        %v1032 = vld [vmem:[%s3] sm:$0xf]
        %v1033 = vld [vmem:[%s3 + $0x4] sm:$0xf]
        %v1034 = vld [vmem:[%s3 + $0x8] sm:$0xf]
        %v1035 = vld [vmem:[%s3 + $0xc] sm:$0xf]
        %v1036 = vld [vmem:[%s4] sm:$0x1]
        %v1038 = vlaneseq
        %v1039 = vshrl.u32 %v1038, 7
        %v1040 = vsub.s32 0, %v1039
        %v1041 = vrot.slane %v1036, %v1040
        %v1047 = vunpack.c.l.b16 %v1032
        %v1048 = vunpack.c.l.b16 %v1033
        %v1049 = vunpack.c.l.b16 %v1034
        %v1050 = vunpack.c.l.b16 %v1035
        %v1051 = vpack.c.b16 %v1048, %v1047
        %v1052 = vpack.c.b16 %v1050, %v1049
        %vm1055 = vcmask 261120
        %v1057 = vsel %vm1055, %v1029, 0
        %1059 = vmatprep.subr.bf16.mxu0 0
        %1060 = vmatpush1.bf16.msra.mxu0 0
        %1061 = vmatprep.subr.bf16.mxu0 0
        %1062 = vmatpush1.bf16.msra.mxu0 0
        %1063 = vmatprep.subr.bf16.mxu0 0
        %1064 = vmatpush1.bf16.msra.mxu0 0
        %1065 = vmatprep.subr.bf16.mxu0 0
        %1066 = vmatpush1.bf16.msra.mxu0 0
        %1067 = vmatprep.subr.bf16.mxu0 0
        %1068 = vmatpush1.bf16.msra.mxu0 0
        %1069 = vmatprep.subr.bf16.mxu0 0
        %1070 = vmatpush1.bf16.msra.mxu0 0
        %1071 = vmatprep.subr.bf16.mxu0 0
        %1072 = vmatpush1.bf16.msra.mxu0 %v1052
        %1073 = vmatprep.subr.bf16.mxu0 0
        %1074 = vmatpush1.bf16.msra.mxu0 %v1051
        %1075 = vmatprep.subr.bf16.mxu0 0
        %1076 = vmatpush2.bf16.msra.mxu0 0
        %1077 = vmatprep.subr.bf16.mxu0 0
        %1078 = vmatpush2.bf16.msra.mxu0 0
        %1079 = vmatprep.subr.bf16.mxu0 0
        %1080 = vmatpush2.bf16.msra.mxu0 0
        %1081 = vmatprep.subr.bf16.mxu0 0
        %1082 = vmatpush2.bf16.msra.mxu0 0
        %1083 = vmatprep.subr.bf16.mxu0 0
        %1084 = vmatpush2.bf16.msra.mxu0 0
        %1085 = vmatprep.subr.bf16.mxu0 0
        %1086 = vmatpush2.bf16.msra.mxu0 0
        %1087 = vmatprep.subr.bf16.mxu0 0
        %1088 = vmatpush2.bf16.msra.mxu0 0
        %1089 = vmatprep.subr.bf16.mxu0 0
        %1090 = vmatpush2.bf16.msra.mxu0 0
        %1091 = vmatprep.mubr.bf16.mxu0 0
        %1092 = vmatmul.mubr.bf16.gmra.mxu0 %v1057
        %v1093 = vpop.f32.mrf.mxu0
        %v1094 = vadd.f32 %v1041, %v1093
        %v1095 = vpop.f32.mrf.mxu0
        %v1096 = vpop.f32.mrf.mxu0
        %v1097 = vpop.f32.mrf.mxu0
        %1098 = vdwg.mxu0
        %v1099 = vpack.c.bf16 %v1094, %v1094
        %v1100 = vld [vmem:[#allocation2] sm:$0xf]
        %1101 = vmatprep.subr.bf16.mxu0 0
        %1102 = vmatpush1.bf16.xpose.msra.mxu0 0
        %1103 = vmatprep.subr.bf16.mxu0 0
        %1104 = vmatpush1.bf16.xpose.msra.mxu0 0
        %1105 = vmatprep.subr.bf16.mxu0 0
        %1106 = vmatpush1.bf16.xpose.msra.mxu0 0
        %1107 = vmatprep.subr.bf16.mxu0 0
        %1108 = vmatpush1.bf16.xpose.msra.mxu0 0
        %1109 = vmatprep.subr.bf16.mxu0 0
        %1110 = vmatpush1.bf16.xpose.msra.mxu0 0
        %1111 = vmatprep.subr.bf16.mxu0 0
        %1112 = vmatpush1.bf16.xpose.msra.mxu0 0
        %1113 = vmatprep.subr.bf16.mxu0 0
        %1114 = vmatpush1.bf16.xpose.msra.mxu0 0
        %1115 = vmatprep.subr.bf16.mxu0 0
        %1116 = vmatpush1.bf16.xpose.msra.mxu0 %v1100
        %1117 = vmatprep.subr.bf16.mxu0 0
        %1118 = vmatpush2.bf16.xpose.msra.mxu0 0
        %1119 = vmatprep.subr.bf16.mxu0 0
        %1120 = vmatpush2.bf16.xpose.msra.mxu0 0
        %1121 = vmatprep.subr.bf16.mxu0 0
        %1122 = vmatpush2.bf16.xpose.msra.mxu0 0
        %1123 = vmatprep.subr.bf16.mxu0 0
        %1124 = vmatpush2.bf16.xpose.msra.mxu0 0
        %1125 = vmatprep.subr.bf16.mxu0 0
        %1126 = vmatpush2.bf16.xpose.msra.mxu0 0
        %1127 = vmatprep.subr.bf16.mxu0 0
        %1128 = vmatpush2.bf16.xpose.msra.mxu0 0
        %1129 = vmatprep.subr.bf16.mxu0 0
        %1130 = vmatpush2.bf16.xpose.msra.mxu0 0
        %1131 = vmatprep.subr.bf16.mxu0 0
        %1132 = vmatpush2.bf16.xpose.msra.mxu0 0
        %1133 = vmatprep.mubr.bf16.mxu0 0
        %1134 = vmatmul.mubr.bf16.gmra.mxu0 %v1099
        %v1135 = vpop.f32.mrf.mxu0
        %v1136 = vadd.f32 %v1030, %v1135
        %v1137 = vpop.f32.mrf.mxu0
        %v1138 = vpop.f32.mrf.mxu0
        %v1139 = vpop.f32.mrf.mxu0
        %1140 = vdwg.mxu0
        %vm1141 = vcmask 64512
        %v1142 = vsel %vm1141, %v1136, -inf
        %1143 = vmax.xlane.f32.xlu0 %v1142
        %v1144 = vpop.xlane.xlu0 %1143
        %v1145 = vsub.f32 %v1136, %v1144
        %v1146 = vmul.f32 %v1145, 1.442695
        %v1147 = vpow.pop %v1146
        %v1148 = vsel %vm1141, %v1147, 0.0
        %1149 = vadd.xlane.f32.xlu0 %v1148
        %v1150 = vpop.xlane.xlu0 %1149
        %v1151 = vrcp.pop %v1150
        %v1152 = vmul.f32 %v1147, %v1151
        %1153 = vst.msk [vmem:[%s458] sm:$0xff] %vm1141, %v1152
        %v1154 = vpack.c.bf16 %v1152, %v1152
        %v1155 = vld [vmem:[#allocation3] sm:$0xf]
        %v1157 = vsel %vm1141, %v1154, 0
        %vm1159 = vcmask 1043456
        %v1161 = vsel %vm1159, %v1155, 0
        %1163 = vmatprep.subr.bf16.mxu0 0
        %1164 = vmatpush1.bf16.msra.mxu0 0
        %1165 = vmatprep.subr.bf16.mxu0 0
        %1166 = vmatpush1.bf16.msra.mxu0 0
        %1167 = vmatprep.subr.bf16.mxu0 0
        %1168 = vmatpush1.bf16.msra.mxu0 0
        %1169 = vmatprep.subr.bf16.mxu0 0
        %1170 = vmatpush1.bf16.msra.mxu0 0
        %1171 = vmatprep.subr.bf16.mxu0 0
        %1172 = vmatpush1.bf16.msra.mxu0 0
        %1173 = vmatprep.subr.bf16.mxu0 0
        %1174 = vmatpush1.bf16.msra.mxu0 0
        %1175 = vmatprep.subr.bf16.mxu0 0
        %1176 = vmatpush1.bf16.msra.mxu0 0
        %1177 = vmatprep.subr.bf16.mxu0 0
        %1178 = vmatpush1.bf16.msra.mxu0 %v1161
        %1179 = vmatprep.subr.bf16.mxu0 0
        %1180 = vmatpush2.bf16.msra.mxu0 0
        %1181 = vmatprep.subr.bf16.mxu0 0
        %1182 = vmatpush2.bf16.msra.mxu0 0
        %1183 = vmatprep.subr.bf16.mxu0 0
        %1184 = vmatpush2.bf16.msra.mxu0 0
        %1185 = vmatprep.subr.bf16.mxu0 0
        %1186 = vmatpush2.bf16.msra.mxu0 0
        %1187 = vmatprep.subr.bf16.mxu0 0
        %1188 = vmatpush2.bf16.msra.mxu0 0
        %1189 = vmatprep.subr.bf16.mxu0 0
        %1190 = vmatpush2.bf16.msra.mxu0 0
        %1191 = vmatprep.subr.bf16.mxu0 0
        %1192 = vmatpush2.bf16.msra.mxu0 0
        %1193 = vmatprep.subr.bf16.mxu0 0
        %1194 = vmatpush2.bf16.msra.mxu0 0
        %1195 = vmatprep.mubr.bf16.mxu0 0
        %1196 = vmatmul.mubr.bf16.gmra.mxu0 %v1157
        %v1197 = vpop.f32.mrf.mxu0
        %v1198 = vadd.f32 0.0, %v1197
        %v1199 = vpop.f32.mrf.mxu0
        %v1200 = vpop.f32.mrf.mxu0
        %v1201 = vpop.f32.mrf.mxu0
        %1202 = vdwg.mxu0
        %v1203 = vpack.c.bf16 %v1198, %v1198
        %v1204 = vld [vmem:[%s9] sm:$0xf]
        %v1205 = vld [vmem:[%s9 + $0x4] sm:$0xf]
        %v1206 = vld [vmem:[%s9 + $0x8] sm:$0xf]
        %v1207 = vld [vmem:[%s9 + $0xc] sm:$0xf]
        %v1208 = vld [vmem:[%s9 + $0x10] sm:$0xf]
        %v1209 = vld [vmem:[%s9 + $0x14] sm:$0xf]
        %v1210 = vld [vmem:[%s9 + $0x18] sm:$0xf]
        %v1211 = vld [vmem:[%s9 + $0x1c] sm:$0xf]
        %v1212 = vld [vmem:[%s9 + $0x20] sm:$0xf]
        %v1213 = vld [vmem:[%s9 + $0x24] sm:$0xf]
        %v1214 = vld [vmem:[%s9 + $0x28] sm:$0xf]
        %v1215 = vld [vmem:[%s9 + $0x2c] sm:$0xf]
        %v1216 = vld [vmem:[%s9 + $0x30] sm:$0xf]
        %v1217 = vld [vmem:[%s9 + $0x34] sm:$0xf]
        %v1218 = vld [vmem:[%s9 + $0x38] sm:$0xf]
        %v1219 = vld [vmem:[%s9 + $0x3c] sm:$0xf]
        %s1220 = scalar_lea.vmem %s3, 16
        %v1221 = vld [vmem:[%s1220] sm:$0xf]
        %v1222 = vld [vmem:[%s1220 + $0x4] sm:$0xf]
        %v1223 = vld [vmem:[%s1220 + $0x8] sm:$0xf]
        %v1224 = vld [vmem:[%s1220 + $0xc] sm:$0xf]
        %s1225 = scalar_lea.vmem %s4, 1
        %v1226 = vld [vmem:[%s1225] sm:$0x1]
        %v1228 = vlaneseq
        %v1229 = vshrl.u32 %v1228, 7
        %v1230 = vsub.s32 0, %v1229
        %v1231 = vrot.slane %v1226, %v1230
        %v1237 = vunpack.c.l.b16 %v1221
        %v1238 = vunpack.c.l.b16 %v1222
        %v1239 = vunpack.c.l.b16 %v1223
        %v1240 = vunpack.c.l.b16 %v1224
        %v1241 = vpack.c.b16 %v1238, %v1237
        %v1242 = vpack.c.b16 %v1240, %v1239
        %1245 = vmatprep.subr.bf16.mxu0 0
        %1246 = vmatpush1.bf16.msra.mxu0 0
        %1247 = vmatprep.subr.bf16.mxu0 0
        %1248 = vmatpush1.bf16.msra.mxu0 0
        %1249 = vmatprep.subr.bf16.mxu0 0
        %1250 = vmatpush1.bf16.msra.mxu0 0
        %1251 = vmatprep.subr.bf16.mxu0 0
        %1252 = vmatpush1.bf16.msra.mxu0 0
        %1253 = vmatprep.subr.bf16.mxu0 0
        %1254 = vmatpush1.bf16.msra.mxu0 0
        %1255 = vmatprep.subr.bf16.mxu0 0
        %1256 = vmatpush1.bf16.msra.mxu0 0
        %1257 = vmatprep.subr.bf16.mxu0 0
        %1258 = vmatpush1.bf16.msra.mxu0 %v1242
        %1259 = vmatprep.subr.bf16.mxu0 0
        %1260 = vmatpush1.bf16.msra.mxu0 %v1241
        %1261 = vmatprep.subr.bf16.mxu0 0
        %1262 = vmatpush2.bf16.msra.mxu0 0
        %1263 = vmatprep.subr.bf16.mxu0 0
        %1264 = vmatpush2.bf16.msra.mxu0 0
        %1265 = vmatprep.subr.bf16.mxu0 0
        %1266 = vmatpush2.bf16.msra.mxu0 0
        %1267 = vmatprep.subr.bf16.mxu0 0
        %1268 = vmatpush2.bf16.msra.mxu0 0
        %1269 = vmatprep.subr.bf16.mxu0 0
        %1270 = vmatpush2.bf16.msra.mxu0 0
        %1271 = vmatprep.subr.bf16.mxu0 0
        %1272 = vmatpush2.bf16.msra.mxu0 0
        %1273 = vmatprep.subr.bf16.mxu0 0
        %1274 = vmatpush2.bf16.msra.mxu0 0
        %1275 = vmatprep.subr.bf16.mxu0 0
        %1276 = vmatpush2.bf16.msra.mxu0 0
        %1277 = vmatprep.mubr.bf16.mxu0 0
        %1278 = vmatmul.mubr.bf16.gmra.mxu0 %v1057
        %v1279 = vpop.f32.mrf.mxu0
        %v1280 = vadd.f32 %v1231, %v1279
        %v1281 = vpop.f32.mrf.mxu0
        %v1282 = vpop.f32.mrf.mxu0
        %v1283 = vpop.f32.mrf.mxu0
        %1284 = vdwg.mxu0
        %v1285 = vpack.c.bf16 %v1280, %v1280
        %s1286 = scalar_lea.vmem [#allocation2], 4
        %v1287 = vld [vmem:[%s1286] sm:$0xf]
        %1288 = vmatprep.subr.bf16.mxu0 0
        %1289 = vmatpush1.bf16.xpose.msra.mxu0 0
        %1290 = vmatprep.subr.bf16.mxu0 0
        %1291 = vmatpush1.bf16.xpose.msra.mxu0 0
        %1292 = vmatprep.subr.bf16.mxu0 0
        %1293 = vmatpush1.bf16.xpose.msra.mxu0 0
        %1294 = vmatprep.subr.bf16.mxu0 0
        %1295 = vmatpush1.bf16.xpose.msra.mxu0 0
        %1296 = vmatprep.subr.bf16.mxu0 0
        %1297 = vmatpush1.bf16.xpose.msra.mxu0 0
        %1298 = vmatprep.subr.bf16.mxu0 0
        %1299 = vmatpush1.bf16.xpose.msra.mxu0 0
        %1300 = vmatprep.subr.bf16.mxu0 0
        %1301 = vmatpush1.bf16.xpose.msra.mxu0 0
        %1302 = vmatprep.subr.bf16.mxu0 0
        %1303 = vmatpush1.bf16.xpose.msra.mxu0 %v1287
        %1304 = vmatprep.subr.bf16.mxu0 0
        %1305 = vmatpush2.bf16.xpose.msra.mxu0 0
        %1306 = vmatprep.subr.bf16.mxu0 0
        %1307 = vmatpush2.bf16.xpose.msra.mxu0 0
        %1308 = vmatprep.subr.bf16.mxu0 0
        %1309 = vmatpush2.bf16.xpose.msra.mxu0 0
        %1310 = vmatprep.subr.bf16.mxu0 0
        %1311 = vmatpush2.bf16.xpose.msra.mxu0 0
        %1312 = vmatprep.subr.bf16.mxu0 0
        %1313 = vmatpush2.bf16.xpose.msra.mxu0 0
        %1314 = vmatprep.subr.bf16.mxu0 0
        %1315 = vmatpush2.bf16.xpose.msra.mxu0 0
        %1316 = vmatprep.subr.bf16.mxu0 0
        %1317 = vmatpush2.bf16.xpose.msra.mxu0 0
        %1318 = vmatprep.subr.bf16.mxu0 0
        %1319 = vmatpush2.bf16.xpose.msra.mxu0 0
        %1320 = vmatprep.mubr.bf16.mxu0 0
        %1321 = vmatmul.mubr.bf16.gmra.mxu0 %v1285
        %v1322 = vpop.f32.mrf.mxu0
        %v1323 = vadd.f32 %v1030, %v1322
        %v1324 = vpop.f32.mrf.mxu0
        %v1325 = vpop.f32.mrf.mxu0
        %v1326 = vpop.f32.mrf.mxu0
        %1327 = vdwg.mxu0
        %v1328 = vsel %vm1141, %v1323, -inf
        %1329 = vmax.xlane.f32.xlu0 %v1328
        %v1330 = vpop.xlane.xlu0 %1329
        %v1331 = vsub.f32 %v1323, %v1330
        %v1332 = vmul.f32 %v1331, 1.442695
        %v1333 = vpow.pop %v1332
        %v1334 = vsel %vm1141, %v1333, 0.0
        %1335 = vadd.xlane.f32.xlu0 %v1334
        %v1336 = vpop.xlane.xlu0 %1335
        %v1337 = vrcp.pop %v1336
        %v1338 = vmul.f32 %v1333, %v1337
        %s1339 = scalar_lea.vmem %s458, 8 [#allocation4]
        %1340 = vst.msk [vmem:[%s1339] sm:$0xff] %vm1141, %v1338
        %v1341 = vpack.c.bf16 %v1338, %v1338
        %s1342 = scalar_lea.vmem [#allocation3], 4
        %v1343 = vld [vmem:[%s1342] sm:$0xf]
        %v1345 = vsel %vm1141, %v1341, 0
        %v1348 = vsel %vm1159, %v1343, 0
        %1350 = vmatprep.subr.bf16.mxu0 0
        %1351 = vmatpush1.bf16.msra.mxu0 0
        %1352 = vmatprep.subr.bf16.mxu0 0
        %1353 = vmatpush1.bf16.msra.mxu0 0
        %1354 = vmatprep.subr.bf16.mxu0 0
        %1355 = vmatpush1.bf16.msra.mxu0 0
        %1356 = vmatprep.subr.bf16.mxu0 0
        %1357 = vmatpush1.bf16.msra.mxu0 0
        %1358 = vmatprep.subr.bf16.mxu0 0
        %1359 = vmatpush1.bf16.msra.mxu0 0
        %1360 = vmatprep.subr.bf16.mxu0 0
        %1361 = vmatpush1.bf16.msra.mxu0 0
        %1362 = vmatprep.subr.bf16.mxu0 0
        %1363 = vmatpush1.bf16.msra.mxu0 0
        %1364 = vmatprep.subr.bf16.mxu0 0
        %1365 = vmatpush1.bf16.msra.mxu0 %v1348
        %1366 = vmatprep.subr.bf16.mxu0 0
        %1367 = vmatpush2.bf16.msra.mxu0 0
        %1368 = vmatprep.subr.bf16.mxu0 0
        %1369 = vmatpush2.bf16.msra.mxu0 0
        %1370 = vmatprep.subr.bf16.mxu0 0
        %1371 = vmatpush2.bf16.msra.mxu0 0
        %1372 = vmatprep.subr.bf16.mxu0 0
        %1373 = vmatpush2.bf16.msra.mxu0 0
        %1374 = vmatprep.subr.bf16.mxu0 0
        %1375 = vmatpush2.bf16.msra.mxu0 0
        %1376 = vmatprep.subr.bf16.mxu0 0
        %1377 = vmatpush2.bf16.msra.mxu0 0
        %1378 = vmatprep.subr.bf16.mxu0 0
        %1379 = vmatpush2.bf16.msra.mxu0 0
        %1380 = vmatprep.subr.bf16.mxu0 0
        %1381 = vmatpush2.bf16.msra.mxu0 0
        %1382 = vmatprep.mubr.bf16.mxu0 0
        %1383 = vmatmul.mubr.bf16.gmra.mxu0 %v1345
        %v1384 = vpop.f32.mrf.mxu0
        %v1385 = vadd.f32 0.0, %v1384
        %v1386 = vpop.f32.mrf.mxu0
        %v1387 = vpop.f32.mrf.mxu0
        %v1388 = vpop.f32.mrf.mxu0
        %1389 = vdwg.mxu0
        %v1390 = vpack.c.bf16 %v1385, %v1385
        %s1391 = scalar_lea.vmem %s9, 64
        %v1392 = vld [vmem:[%s1391] sm:$0xf]
        %v1393 = vld [vmem:[%s1391 + $0x4] sm:$0xf]
        %v1394 = vld [vmem:[%s1391 + $0x8] sm:$0xf]
        %v1395 = vld [vmem:[%s1391 + $0xc] sm:$0xf]
        %v1396 = vld [vmem:[%s1391 + $0x10] sm:$0xf]
        %v1397 = vld [vmem:[%s1391 + $0x14] sm:$0xf]
        %v1398 = vld [vmem:[%s1391 + $0x18] sm:$0xf]
        %v1399 = vld [vmem:[%s1391 + $0x1c] sm:$0xf]
        %v1400 = vld [vmem:[%s1391 + $0x20] sm:$0xf]
        %v1401 = vld [vmem:[%s1391 + $0x24] sm:$0xf]
        %v1402 = vld [vmem:[%s1391 + $0x28] sm:$0xf]
        %v1403 = vld [vmem:[%s1391 + $0x2c] sm:$0xf]
        %v1404 = vld [vmem:[%s1391 + $0x30] sm:$0xf]
        %v1405 = vld [vmem:[%s1391 + $0x34] sm:$0xf]
        %v1406 = vld [vmem:[%s1391 + $0x38] sm:$0xf]
        %v1407 = vld [vmem:[%s1391 + $0x3c] sm:$0xf]
        %v1424 = vunpack.c.l.b16 %v1392
        %v1425 = vunpack.c.l.b16 %v1393
        %v1426 = vunpack.c.l.b16 %v1394
        %v1427 = vunpack.c.l.b16 %v1395
        %v1428 = vunpack.c.l.b16 %v1396
        %v1429 = vunpack.c.l.b16 %v1397
        %v1430 = vunpack.c.l.b16 %v1398
        %v1431 = vunpack.c.l.b16 %v1399
        %v1432 = vunpack.c.l.b16 %v1400
        %v1433 = vunpack.c.l.b16 %v1401
        %v1434 = vunpack.c.l.b16 %v1402
        %v1435 = vunpack.c.l.b16 %v1403
        %v1436 = vunpack.c.l.b16 %v1404
        %v1437 = vunpack.c.l.b16 %v1405
        %v1438 = vunpack.c.l.b16 %v1406
        %v1439 = vunpack.c.l.b16 %v1407
        %v1440 = vpack.c.b16 %v1425, %v1424
        %v1441 = vpack.c.b16 %v1427, %v1426
        %v1442 = vpack.c.b16 %v1429, %v1428
        %v1443 = vpack.c.b16 %v1431, %v1430
        %v1444 = vpack.c.b16 %v1433, %v1432
        %v1445 = vpack.c.b16 %v1435, %v1434
        %v1446 = vpack.c.b16 %v1437, %v1436
        %v1447 = vpack.c.b16 %v1439, %v1438
        %1456 = vmatprep.subr.bf16.mxu0 0
        %1457 = vmatpush1.bf16.msra.mxu0 %v1447
        %1458 = vmatprep.subr.bf16.mxu0 0
        %1459 = vmatpush1.bf16.msra.mxu0 %v1446
        %1460 = vmatprep.subr.bf16.mxu0 0
        %1461 = vmatpush1.bf16.msra.mxu0 %v1445
        %1462 = vmatprep.subr.bf16.mxu0 0
        %1463 = vmatpush1.bf16.msra.mxu0 %v1444
        %1464 = vmatprep.subr.bf16.mxu0 0
        %1465 = vmatpush1.bf16.msra.mxu0 %v1443
        %1466 = vmatprep.subr.bf16.mxu0 0
        %1467 = vmatpush1.bf16.msra.mxu0 %v1442
        %1468 = vmatprep.subr.bf16.mxu0 0
        %1469 = vmatpush1.bf16.msra.mxu0 %v1441
        %1470 = vmatprep.subr.bf16.mxu0 0
        %1471 = vmatpush1.bf16.msra.mxu0 %v1440
        %1472 = vmatprep.subr.bf16.mxu0 0
        %1473 = vmatpush2.bf16.msra.mxu0 0
        %1474 = vmatprep.subr.bf16.mxu0 0
        %1475 = vmatpush2.bf16.msra.mxu0 0
        %1476 = vmatprep.subr.bf16.mxu0 0
        %1477 = vmatpush2.bf16.msra.mxu0 0
        %1478 = vmatprep.subr.bf16.mxu0 0
        %1479 = vmatpush2.bf16.msra.mxu0 0
        %1480 = vmatprep.subr.bf16.mxu0 0
        %1481 = vmatpush2.bf16.msra.mxu0 0
        %1482 = vmatprep.subr.bf16.mxu0 0
        %1483 = vmatpush2.bf16.msra.mxu0 0
        %1484 = vmatprep.subr.bf16.mxu0 0
        %1485 = vmatpush2.bf16.msra.mxu0 0
        %1486 = vmatprep.subr.bf16.mxu0 0
        %1487 = vmatpush2.bf16.msra.mxu0 0
        %1488 = vmatprep.mubr.bf16.mxu0 0
        %1489 = vmatmul.mubr.bf16.gmra.mxu0 %v1390
        %v1490 = vpop.f32.mrf.mxu0
        %v1491 = vadd.f32 0.0, %v1490
        %v1492 = vpop.f32.mrf.mxu0
        %v1493 = vpop.f32.mrf.mxu0
        %v1494 = vpop.f32.mrf.mxu0
        %1495 = vdwg.mxu0
        %v1512 = vunpack.c.l.b16 %v1204
        %v1513 = vunpack.c.l.b16 %v1205
        %v1514 = vunpack.c.l.b16 %v1206
        %v1515 = vunpack.c.l.b16 %v1207
        %v1516 = vunpack.c.l.b16 %v1208
        %v1517 = vunpack.c.l.b16 %v1209
        %v1518 = vunpack.c.l.b16 %v1210
        %v1519 = vunpack.c.l.b16 %v1211
        %v1520 = vunpack.c.l.b16 %v1212
        %v1521 = vunpack.c.l.b16 %v1213
        %v1522 = vunpack.c.l.b16 %v1214
        %v1523 = vunpack.c.l.b16 %v1215
        %v1524 = vunpack.c.l.b16 %v1216
        %v1525 = vunpack.c.l.b16 %v1217
        %v1526 = vunpack.c.l.b16 %v1218
        %v1527 = vunpack.c.l.b16 %v1219
        %v1528 = vpack.c.b16 %v1513, %v1512
        %v1529 = vpack.c.b16 %v1515, %v1514
        %v1530 = vpack.c.b16 %v1517, %v1516
        %v1531 = vpack.c.b16 %v1519, %v1518
        %v1532 = vpack.c.b16 %v1521, %v1520
        %v1533 = vpack.c.b16 %v1523, %v1522
        %v1534 = vpack.c.b16 %v1525, %v1524
        %v1535 = vpack.c.b16 %v1527, %v1526
        %1544 = vmatprep.subr.bf16.mxu0 0
        %1545 = vmatpush1.bf16.msra.mxu0 %v1535
        %1546 = vmatprep.subr.bf16.mxu0 0
        %1547 = vmatpush1.bf16.msra.mxu0 %v1534
        %1548 = vmatprep.subr.bf16.mxu0 0
        %1549 = vmatpush1.bf16.msra.mxu0 %v1533
        %1550 = vmatprep.subr.bf16.mxu0 0
        %1551 = vmatpush1.bf16.msra.mxu0 %v1532
        %1552 = vmatprep.subr.bf16.mxu0 0
        %1553 = vmatpush1.bf16.msra.mxu0 %v1531
        %1554 = vmatprep.subr.bf16.mxu0 0
        %1555 = vmatpush1.bf16.msra.mxu0 %v1530
        %1556 = vmatprep.subr.bf16.mxu0 0
        %1557 = vmatpush1.bf16.msra.mxu0 %v1529
        %1558 = vmatprep.subr.bf16.mxu0 0
        %1559 = vmatpush1.bf16.msra.mxu0 %v1528
        %1560 = vmatprep.subr.bf16.mxu0 0
        %1561 = vmatpush2.bf16.msra.mxu0 0
        %1562 = vmatprep.subr.bf16.mxu0 0
        %1563 = vmatpush2.bf16.msra.mxu0 0
        %1564 = vmatprep.subr.bf16.mxu0 0
        %1565 = vmatpush2.bf16.msra.mxu0 0
        %1566 = vmatprep.subr.bf16.mxu0 0
        %1567 = vmatpush2.bf16.msra.mxu0 0
        %1568 = vmatprep.subr.bf16.mxu0 0
        %1569 = vmatpush2.bf16.msra.mxu0 0
        %1570 = vmatprep.subr.bf16.mxu0 0
        %1571 = vmatpush2.bf16.msra.mxu0 0
        %1572 = vmatprep.subr.bf16.mxu0 0
        %1573 = vmatpush2.bf16.msra.mxu0 0
        %1574 = vmatprep.subr.bf16.mxu0 0
        %1575 = vmatpush2.bf16.msra.mxu0 0
        %1576 = vmatprep.mubr.bf16.mxu0 0
        %1577 = vmatmul.mubr.bf16.gmra.mxu0 %v1203
        %v1578 = vpop.f32.mrf.mxu0
        %v1579 = vadd.f32 %v1491, %v1578
        %v1580 = vpop.f32.mrf.mxu0
        %v1581 = vpop.f32.mrf.mxu0
        %v1582 = vpop.f32.mrf.mxu0
        %1583 = vdwg.mxu0
        %s1584 = scalar_lea.vmem %s3, 32
        %v1585 = vld [vmem:[%s1584] sm:$0xf]
        %v1586 = vld [vmem:[%s1584 + $0x4] sm:$0xf]
        %v1587 = vld [vmem:[%s1584 + $0x8] sm:$0xf]
        %v1588 = vld [vmem:[%s1584 + $0xc] sm:$0xf]
        %s1589 = scalar_lea.vmem %s4, 2
        %v1590 = vld [vmem:[%s1589] sm:$0x1]
        %v1592 = vlaneseq
        %v1593 = vshrl.u32 %v1592, 7
        %v1594 = vsub.s32 0, %v1593
        %v1595 = vrot.slane %v1590, %v1594
        %v1601 = vunpack.c.l.b16 %v1585
        %v1602 = vunpack.c.l.b16 %v1586
        %v1603 = vunpack.c.l.b16 %v1587
        %v1604 = vunpack.c.l.b16 %v1588
        %v1605 = vpack.c.b16 %v1602, %v1601
        %v1606 = vpack.c.b16 %v1604, %v1603
        %1609 = vmatprep.subr.bf16.mxu0 0
        %1610 = vmatpush1.bf16.msra.mxu0 0
        %1611 = vmatprep.subr.bf16.mxu0 0
        %1612 = vmatpush1.bf16.msra.mxu0 0
        %1613 = vmatprep.subr.bf16.mxu0 0
        %1614 = vmatpush1.bf16.msra.mxu0 0
        %1615 = vmatprep.subr.bf16.mxu0 0
        %1616 = vmatpush1.bf16.msra.mxu0 0
        %1617 = vmatprep.subr.bf16.mxu0 0
        %1618 = vmatpush1.bf16.msra.mxu0 0
        %1619 = vmatprep.subr.bf16.mxu0 0
        %1620 = vmatpush1.bf16.msra.mxu0 0
        %1621 = vmatprep.subr.bf16.mxu0 0
        %1622 = vmatpush1.bf16.msra.mxu0 %v1606
        %1623 = vmatprep.subr.bf16.mxu0 0
        %1624 = vmatpush1.bf16.msra.mxu0 %v1605
        %1625 = vmatprep.subr.bf16.mxu0 0
        %1626 = vmatpush2.bf16.msra.mxu0 0
        %1627 = vmatprep.subr.bf16.mxu0 0
        %1628 = vmatpush2.bf16.msra.mxu0 0
        %1629 = vmatprep.subr.bf16.mxu0 0
        %1630 = vmatpush2.bf16.msra.mxu0 0
        %1631 = vmatprep.subr.bf16.mxu0 0
        %1632 = vmatpush2.bf16.msra.mxu0 0
        %1633 = vmatprep.subr.bf16.mxu0 0
        %1634 = vmatpush2.bf16.msra.mxu0 0
        %1635 = vmatprep.subr.bf16.mxu0 0
        %1636 = vmatpush2.bf16.msra.mxu0 0
        %1637 = vmatprep.subr.bf16.mxu0 0
        %1638 = vmatpush2.bf16.msra.mxu0 0
        %1639 = vmatprep.subr.bf16.mxu0 0
        %1640 = vmatpush2.bf16.msra.mxu0 0
        %1641 = vmatprep.mubr.bf16.mxu0 0
        %1642 = vmatmul.mubr.bf16.gmra.mxu0 %v1057
        %v1643 = vpop.f32.mrf.mxu0
        %v1644 = vadd.f32 %v1595, %v1643
        %v1645 = vpop.f32.mrf.mxu0
        %v1646 = vpop.f32.mrf.mxu0
        %v1647 = vpop.f32.mrf.mxu0
        %1648 = vdwg.mxu0
        %v1649 = vpack.c.bf16 %v1644, %v1644
        %s1650 = scalar_lea.vmem [#allocation2], 8
        %v1651 = vld [vmem:[%s1650] sm:$0xf]
        %1652 = vmatprep.subr.bf16.mxu0 0
        %1653 = vmatpush1.bf16.xpose.msra.mxu0 0
        %1654 = vmatprep.subr.bf16.mxu0 0
        %1655 = vmatpush1.bf16.xpose.msra.mxu0 0
        %1656 = vmatprep.subr.bf16.mxu0 0
        %1657 = vmatpush1.bf16.xpose.msra.mxu0 0
        %1658 = vmatprep.subr.bf16.mxu0 0
        %1659 = vmatpush1.bf16.xpose.msra.mxu0 0
        %1660 = vmatprep.subr.bf16.mxu0 0
        %1661 = vmatpush1.bf16.xpose.msra.mxu0 0
        %1662 = vmatprep.subr.bf16.mxu0 0
        %1663 = vmatpush1.bf16.xpose.msra.mxu0 0
        %1664 = vmatprep.subr.bf16.mxu0 0
        %1665 = vmatpush1.bf16.xpose.msra.mxu0 0
        %1666 = vmatprep.subr.bf16.mxu0 0
        %1667 = vmatpush1.bf16.xpose.msra.mxu0 %v1651
        %1668 = vmatprep.subr.bf16.mxu0 0
        %1669 = vmatpush2.bf16.xpose.msra.mxu0 0
        %1670 = vmatprep.subr.bf16.mxu0 0
        %1671 = vmatpush2.bf16.xpose.msra.mxu0 0
        %1672 = vmatprep.subr.bf16.mxu0 0
        %1673 = vmatpush2.bf16.xpose.msra.mxu0 0
        %1674 = vmatprep.subr.bf16.mxu0 0
        %1675 = vmatpush2.bf16.xpose.msra.mxu0 0
        %1676 = vmatprep.subr.bf16.mxu0 0
        %1677 = vmatpush2.bf16.xpose.msra.mxu0 0
        %1678 = vmatprep.subr.bf16.mxu0 0
        %1679 = vmatpush2.bf16.xpose.msra.mxu0 0
        %1680 = vmatprep.subr.bf16.mxu0 0
        %1681 = vmatpush2.bf16.xpose.msra.mxu0 0
        %1682 = vmatprep.subr.bf16.mxu0 0
        %1683 = vmatpush2.bf16.xpose.msra.mxu0 0
        %1684 = vmatprep.mubr.bf16.mxu0 0
        %1685 = vmatmul.mubr.bf16.gmra.mxu0 %v1649
        %v1686 = vpop.f32.mrf.mxu0
        %v1687 = vadd.f32 %v1030, %v1686
        %v1688 = vpop.f32.mrf.mxu0
        %v1689 = vpop.f32.mrf.mxu0
        %v1690 = vpop.f32.mrf.mxu0
        %1691 = vdwg.mxu0
        %v1692 = vsel %vm1141, %v1687, -inf
        %1693 = vmax.xlane.f32.xlu0 %v1692
        %v1694 = vpop.xlane.xlu0 %1693
        %v1695 = vsub.f32 %v1687, %v1694
        %v1696 = vmul.f32 %v1695, 1.442695
        %v1697 = vpow.pop %v1696
        %v1698 = vsel %vm1141, %v1697, 0.0
        %1699 = vadd.xlane.f32.xlu0 %v1698
        %v1700 = vpop.xlane.xlu0 %1699
        %v1701 = vrcp.pop %v1700
        %v1702 = vmul.f32 %v1697, %v1701
        %s1703 = scalar_lea.vmem %s458, 16 [#allocation4]
        %1704 = vst.msk [vmem:[%s1703] sm:$0xff] %vm1141, %v1702
        %v1705 = vpack.c.bf16 %v1702, %v1702
        %s1706 = scalar_lea.vmem [#allocation3], 8
        %v1707 = vld [vmem:[%s1706] sm:$0xf]
        %v1709 = vsel %vm1141, %v1705, 0
        %v1712 = vsel %vm1159, %v1707, 0
        %1714 = vmatprep.subr.bf16.mxu0 0
        %1715 = vmatpush1.bf16.msra.mxu0 0
        %1716 = vmatprep.subr.bf16.mxu0 0
        %1717 = vmatpush1.bf16.msra.mxu0 0
        %1718 = vmatprep.subr.bf16.mxu0 0
        %1719 = vmatpush1.bf16.msra.mxu0 0
        %1720 = vmatprep.subr.bf16.mxu0 0
        %1721 = vmatpush1.bf16.msra.mxu0 0
        %1722 = vmatprep.subr.bf16.mxu0 0
        %1723 = vmatpush1.bf16.msra.mxu0 0
        %1724 = vmatprep.subr.bf16.mxu0 0
        %1725 = vmatpush1.bf16.msra.mxu0 0
        %1726 = vmatprep.subr.bf16.mxu0 0
        %1727 = vmatpush1.bf16.msra.mxu0 0
        %1728 = vmatprep.subr.bf16.mxu0 0
        %1729 = vmatpush1.bf16.msra.mxu0 %v1712
        %1730 = vmatprep.subr.bf16.mxu0 0
        %1731 = vmatpush2.bf16.msra.mxu0 0
        %1732 = vmatprep.subr.bf16.mxu0 0
        %1733 = vmatpush2.bf16.msra.mxu0 0
        %1734 = vmatprep.subr.bf16.mxu0 0
        %1735 = vmatpush2.bf16.msra.mxu0 0
        %1736 = vmatprep.subr.bf16.mxu0 0
        %1737 = vmatpush2.bf16.msra.mxu0 0
        %1738 = vmatprep.subr.bf16.mxu0 0
        %1739 = vmatpush2.bf16.msra.mxu0 0
        %1740 = vmatprep.subr.bf16.mxu0 0
        %1741 = vmatpush2.bf16.msra.mxu0 0
        %1742 = vmatprep.subr.bf16.mxu0 0
        %1743 = vmatpush2.bf16.msra.mxu0 0
        %1744 = vmatprep.subr.bf16.mxu0 0
        %1745 = vmatpush2.bf16.msra.mxu0 0
        %1746 = vmatprep.mubr.bf16.mxu0 0
        %1747 = vmatmul.mubr.bf16.gmra.mxu0 %v1709
        %v1748 = vpop.f32.mrf.mxu0
        %v1749 = vadd.f32 0.0, %v1748
        %v1750 = vpop.f32.mrf.mxu0
        %v1751 = vpop.f32.mrf.mxu0
        %v1752 = vpop.f32.mrf.mxu0
        %1753 = vdwg.mxu0
        %v1754 = vpack.c.bf16 %v1749, %v1749
        %s1755 = scalar_lea.vmem %s9, 128
        %v1756 = vld [vmem:[%s1755] sm:$0xf]
        %v1757 = vld [vmem:[%s1755 + $0x4] sm:$0xf]
        %v1758 = vld [vmem:[%s1755 + $0x8] sm:$0xf]
        %v1759 = vld [vmem:[%s1755 + $0xc] sm:$0xf]
        %v1760 = vld [vmem:[%s1755 + $0x10] sm:$0xf]
        %v1761 = vld [vmem:[%s1755 + $0x14] sm:$0xf]
        %v1762 = vld [vmem:[%s1755 + $0x18] sm:$0xf]
        %v1763 = vld [vmem:[%s1755 + $0x1c] sm:$0xf]
        %v1764 = vld [vmem:[%s1755 + $0x20] sm:$0xf]
        %v1765 = vld [vmem:[%s1755 + $0x24] sm:$0xf]
        %v1766 = vld [vmem:[%s1755 + $0x28] sm:$0xf]
        %v1767 = vld [vmem:[%s1755 + $0x2c] sm:$0xf]
        %v1768 = vld [vmem:[%s1755 + $0x30] sm:$0xf]
        %v1769 = vld [vmem:[%s1755 + $0x34] sm:$0xf]
        %v1770 = vld [vmem:[%s1755 + $0x38] sm:$0xf]
        %v1771 = vld [vmem:[%s1755 + $0x3c] sm:$0xf]
        %v1788 = vunpack.c.l.b16 %v1756
        %v1789 = vunpack.c.l.b16 %v1757
        %v1790 = vunpack.c.l.b16 %v1758
        %v1791 = vunpack.c.l.b16 %v1759
        %v1792 = vunpack.c.l.b16 %v1760
        %v1793 = vunpack.c.l.b16 %v1761
        %v1794 = vunpack.c.l.b16 %v1762
        %v1795 = vunpack.c.l.b16 %v1763
        %v1796 = vunpack.c.l.b16 %v1764
        %v1797 = vunpack.c.l.b16 %v1765
        %v1798 = vunpack.c.l.b16 %v1766
        %v1799 = vunpack.c.l.b16 %v1767
        %v1800 = vunpack.c.l.b16 %v1768
        %v1801 = vunpack.c.l.b16 %v1769
        %v1802 = vunpack.c.l.b16 %v1770
        %v1803 = vunpack.c.l.b16 %v1771
        %v1804 = vpack.c.b16 %v1789, %v1788
        %v1805 = vpack.c.b16 %v1791, %v1790
        %v1806 = vpack.c.b16 %v1793, %v1792
        %v1807 = vpack.c.b16 %v1795, %v1794
        %v1808 = vpack.c.b16 %v1797, %v1796
        %v1809 = vpack.c.b16 %v1799, %v1798
        %v1810 = vpack.c.b16 %v1801, %v1800
        %v1811 = vpack.c.b16 %v1803, %v1802
        %1820 = vmatprep.subr.bf16.mxu0 0
        %1821 = vmatpush1.bf16.msra.mxu0 %v1811
        %1822 = vmatprep.subr.bf16.mxu0 0
        %1823 = vmatpush1.bf16.msra.mxu0 %v1810
        %1824 = vmatprep.subr.bf16.mxu0 0
        %1825 = vmatpush1.bf16.msra.mxu0 %v1809
        %1826 = vmatprep.subr.bf16.mxu0 0
        %1827 = vmatpush1.bf16.msra.mxu0 %v1808
        %1828 = vmatprep.subr.bf16.mxu0 0
        %1829 = vmatpush1.bf16.msra.mxu0 %v1807
        %1830 = vmatprep.subr.bf16.mxu0 0
        %1831 = vmatpush1.bf16.msra.mxu0 %v1806
        %1832 = vmatprep.subr.bf16.mxu0 0
        %1833 = vmatpush1.bf16.msra.mxu0 %v1805
        %1834 = vmatprep.subr.bf16.mxu0 0
        %1835 = vmatpush1.bf16.msra.mxu0 %v1804
        %1836 = vmatprep.subr.bf16.mxu0 0
        %1837 = vmatpush2.bf16.msra.mxu0 0
        %1838 = vmatprep.subr.bf16.mxu0 0
        %1839 = vmatpush2.bf16.msra.mxu0 0
        %1840 = vmatprep.subr.bf16.mxu0 0
        %1841 = vmatpush2.bf16.msra.mxu0 0
        %1842 = vmatprep.subr.bf16.mxu0 0
        %1843 = vmatpush2.bf16.msra.mxu0 0
        %1844 = vmatprep.subr.bf16.mxu0 0
        %1845 = vmatpush2.bf16.msra.mxu0 0
        %1846 = vmatprep.subr.bf16.mxu0 0
        %1847 = vmatpush2.bf16.msra.mxu0 0
        %1848 = vmatprep.subr.bf16.mxu0 0
        %1849 = vmatpush2.bf16.msra.mxu0 0
        %1850 = vmatprep.subr.bf16.mxu0 0
        %1851 = vmatpush2.bf16.msra.mxu0 0
        %1852 = vmatprep.mubr.bf16.mxu0 0
        %1853 = vmatmul.mubr.bf16.gmra.mxu0 %v1754
        %v1854 = vpop.f32.mrf.mxu0
        %v1855 = vadd.f32 0.0, %v1854
        %v1856 = vpop.f32.mrf.mxu0
        %v1857 = vpop.f32.mrf.mxu0
        %v1858 = vpop.f32.mrf.mxu0
        %1859 = vdwg.mxu0
        %v1860 = vadd.f32 %v1579, %v1855
        %s1861 = scalar_lea.vmem %s3, 48
        %v1862 = vld [vmem:[%s1861] sm:$0xf]
        %v1863 = vld [vmem:[%s1861 + $0x4] sm:$0xf]
        %v1864 = vld [vmem:[%s1861 + $0x8] sm:$0xf]
        %v1865 = vld [vmem:[%s1861 + $0xc] sm:$0xf]
        %s1866 = scalar_lea.vmem %s4, 3
        %v1867 = vld [vmem:[%s1866] sm:$0x1]
        %v1869 = vlaneseq
        %v1870 = vshrl.u32 %v1869, 7
        %v1871 = vsub.s32 0, %v1870
        %v1872 = vrot.slane %v1867, %v1871
        %v1878 = vunpack.c.l.b16 %v1862
        %v1879 = vunpack.c.l.b16 %v1863
        %v1880 = vunpack.c.l.b16 %v1864
        %v1881 = vunpack.c.l.b16 %v1865
        %v1882 = vpack.c.b16 %v1879, %v1878
        %v1883 = vpack.c.b16 %v1881, %v1880
        %1886 = vmatprep.subr.bf16.mxu0 0
        %1887 = vmatpush1.bf16.msra.mxu0 0
        %1888 = vmatprep.subr.bf16.mxu0 0
        %1889 = vmatpush1.bf16.msra.mxu0 0
        %1890 = vmatprep.subr.bf16.mxu0 0
        %1891 = vmatpush1.bf16.msra.mxu0 0
        %1892 = vmatprep.subr.bf16.mxu0 0
        %1893 = vmatpush1.bf16.msra.mxu0 0
        %1894 = vmatprep.subr.bf16.mxu0 0
        %1895 = vmatpush1.bf16.msra.mxu0 0
        %1896 = vmatprep.subr.bf16.mxu0 0
        %1897 = vmatpush1.bf16.msra.mxu0 0
        %1898 = vmatprep.subr.bf16.mxu0 0
        %1899 = vmatpush1.bf16.msra.mxu0 %v1883
        %1900 = vmatprep.subr.bf16.mxu0 0
        %1901 = vmatpush1.bf16.msra.mxu0 %v1882
        %1902 = vmatprep.subr.bf16.mxu0 0
        %1903 = vmatpush2.bf16.msra.mxu0 0
        %1904 = vmatprep.subr.bf16.mxu0 0
        %1905 = vmatpush2.bf16.msra.mxu0 0
        %1906 = vmatprep.subr.bf16.mxu0 0
        %1907 = vmatpush2.bf16.msra.mxu0 0
        %1908 = vmatprep.subr.bf16.mxu0 0
        %1909 = vmatpush2.bf16.msra.mxu0 0
        %1910 = vmatprep.subr.bf16.mxu0 0
        %1911 = vmatpush2.bf16.msra.mxu0 0
        %1912 = vmatprep.subr.bf16.mxu0 0
        %1913 = vmatpush2.bf16.msra.mxu0 0
        %1914 = vmatprep.subr.bf16.mxu0 0
        %1915 = vmatpush2.bf16.msra.mxu0 0
        %1916 = vmatprep.subr.bf16.mxu0 0
        %1917 = vmatpush2.bf16.msra.mxu0 0
        %1918 = vmatprep.mubr.bf16.mxu0 0
        %1919 = vmatmul.mubr.bf16.gmra.mxu0 %v1057
        %v1920 = vpop.f32.mrf.mxu0
        %v1921 = vadd.f32 %v1872, %v1920
        %v1922 = vpop.f32.mrf.mxu0
        %v1923 = vpop.f32.mrf.mxu0
        %v1924 = vpop.f32.mrf.mxu0
        %1925 = vdwg.mxu0
        %v1926 = vpack.c.bf16 %v1921, %v1921
        %s1927 = scalar_lea.vmem [#allocation2], 12
        %v1928 = vld [vmem:[%s1927] sm:$0xf]
        %1929 = vmatprep.subr.bf16.mxu0 0
        %1930 = vmatpush1.bf16.xpose.msra.mxu0 0
        %1931 = vmatprep.subr.bf16.mxu0 0
        %1932 = vmatpush1.bf16.xpose.msra.mxu0 0
        %1933 = vmatprep.subr.bf16.mxu0 0
        %1934 = vmatpush1.bf16.xpose.msra.mxu0 0
        %1935 = vmatprep.subr.bf16.mxu0 0
        %1936 = vmatpush1.bf16.xpose.msra.mxu0 0
        %1937 = vmatprep.subr.bf16.mxu0 0
        %1938 = vmatpush1.bf16.xpose.msra.mxu0 0
        %1939 = vmatprep.subr.bf16.mxu0 0
        %1940 = vmatpush1.bf16.xpose.msra.mxu0 0
        %1941 = vmatprep.subr.bf16.mxu0 0
        %1942 = vmatpush1.bf16.xpose.msra.mxu0 0
        %1943 = vmatprep.subr.bf16.mxu0 0
        %1944 = vmatpush1.bf16.xpose.msra.mxu0 %v1928
        %1945 = vmatprep.subr.bf16.mxu0 0
        %1946 = vmatpush2.bf16.xpose.msra.mxu0 0
        %1947 = vmatprep.subr.bf16.mxu0 0
        %1948 = vmatpush2.bf16.xpose.msra.mxu0 0
        %1949 = vmatprep.subr.bf16.mxu0 0
        %1950 = vmatpush2.bf16.xpose.msra.mxu0 0
        %1951 = vmatprep.subr.bf16.mxu0 0
        %1952 = vmatpush2.bf16.xpose.msra.mxu0 0
        %1953 = vmatprep.subr.bf16.mxu0 0
        %1954 = vmatpush2.bf16.xpose.msra.mxu0 0
        %1955 = vmatprep.subr.bf16.mxu0 0
        %1956 = vmatpush2.bf16.xpose.msra.mxu0 0
        %1957 = vmatprep.subr.bf16.mxu0 0
        %1958 = vmatpush2.bf16.xpose.msra.mxu0 0
        %1959 = vmatprep.subr.bf16.mxu0 0
        %1960 = vmatpush2.bf16.xpose.msra.mxu0 0
        %1961 = vmatprep.mubr.bf16.mxu0 0
        %1962 = vmatmul.mubr.bf16.gmra.mxu0 %v1926
        %v1963 = vpop.f32.mrf.mxu0
        %v1964 = vadd.f32 %v1030, %v1963
        %v1965 = vpop.f32.mrf.mxu0
        %v1966 = vpop.f32.mrf.mxu0
        %v1967 = vpop.f32.mrf.mxu0
        %1968 = vdwg.mxu0
        %v1969 = vsel %vm1141, %v1964, -inf
        %1970 = vmax.xlane.f32.xlu0 %v1969
        %v1971 = vpop.xlane.xlu0 %1970
        %v1972 = vsub.f32 %v1964, %v1971
        %v1973 = vmul.f32 %v1972, 1.442695
        %v1974 = vpow.pop %v1973
        %v1975 = vsel %vm1141, %v1974, 0.0
        %1976 = vadd.xlane.f32.xlu0 %v1975
        %v1977 = vpop.xlane.xlu0 %1976
        %v1978 = vrcp.pop %v1977
        %v1979 = vmul.f32 %v1974, %v1978
        %s1980 = scalar_lea.vmem %s458, 24 [#allocation4]
        %1981 = vst.msk [vmem:[%s1980] sm:$0xff] %vm1141, %v1979
        %v1982 = vpack.c.bf16 %v1979, %v1979
        %s1983 = scalar_lea.vmem [#allocation3], 12
        %v1984 = vld [vmem:[%s1983] sm:$0xf]
        %v1986 = vsel %vm1141, %v1982, 0
        %v1989 = vsel %vm1159, %v1984, 0
        %1991 = vmatprep.subr.bf16.mxu0 0
        %1992 = vmatpush1.bf16.msra.mxu0 0
        %1993 = vmatprep.subr.bf16.mxu0 0
        %1994 = vmatpush1.bf16.msra.mxu0 0
        %1995 = vmatprep.subr.bf16.mxu0 0
        %1996 = vmatpush1.bf16.msra.mxu0 0
        %1997 = vmatprep.subr.bf16.mxu0 0
        %1998 = vmatpush1.bf16.msra.mxu0 0
        %1999 = vmatprep.subr.bf16.mxu0 0
        %2000 = vmatpush1.bf16.msra.mxu0 0
        %2001 = vmatprep.subr.bf16.mxu0 0
        %2002 = vmatpush1.bf16.msra.mxu0 0
        %2003 = vmatprep.subr.bf16.mxu0 0
        %2004 = vmatpush1.bf16.msra.mxu0 0
        %2005 = vmatprep.subr.bf16.mxu0 0
        %2006 = vmatpush1.bf16.msra.mxu0 %v1989
        %2007 = vmatprep.subr.bf16.mxu0 0
        %2008 = vmatpush2.bf16.msra.mxu0 0
        %2009 = vmatprep.subr.bf16.mxu0 0
        %2010 = vmatpush2.bf16.msra.mxu0 0
        %2011 = vmatprep.subr.bf16.mxu0 0
        %2012 = vmatpush2.bf16.msra.mxu0 0
        %2013 = vmatprep.subr.bf16.mxu0 0
        %2014 = vmatpush2.bf16.msra.mxu0 0
        %2015 = vmatprep.subr.bf16.mxu0 0
        %2016 = vmatpush2.bf16.msra.mxu0 0
        %2017 = vmatprep.subr.bf16.mxu0 0
        %2018 = vmatpush2.bf16.msra.mxu0 0
        %2019 = vmatprep.subr.bf16.mxu0 0
        %2020 = vmatpush2.bf16.msra.mxu0 0
        %2021 = vmatprep.subr.bf16.mxu0 0
        %2022 = vmatpush2.bf16.msra.mxu0 0
        %2023 = vmatprep.mubr.bf16.mxu0 0
        %2024 = vmatmul.mubr.bf16.gmra.mxu0 %v1986
        %v2025 = vpop.f32.mrf.mxu0
        %v2026 = vadd.f32 0.0, %v2025
        %v2027 = vpop.f32.mrf.mxu0
        %v2028 = vpop.f32.mrf.mxu0
        %v2029 = vpop.f32.mrf.mxu0
        %2030 = vdwg.mxu0
        %v2031 = vpack.c.bf16 %v2026, %v2026
        %s2032 = scalar_lea.vmem %s9, 192
        %v2033 = vld [vmem:[%s2032] sm:$0xf]
        %v2034 = vld [vmem:[%s2032 + $0x4] sm:$0xf]
        %v2035 = vld [vmem:[%s2032 + $0x8] sm:$0xf]
        %v2036 = vld [vmem:[%s2032 + $0xc] sm:$0xf]
        %v2037 = vld [vmem:[%s2032 + $0x10] sm:$0xf]
        %v2038 = vld [vmem:[%s2032 + $0x14] sm:$0xf]
        %v2039 = vld [vmem:[%s2032 + $0x18] sm:$0xf]
        %v2040 = vld [vmem:[%s2032 + $0x1c] sm:$0xf]
        %v2041 = vld [vmem:[%s2032 + $0x20] sm:$0xf]
        %v2042 = vld [vmem:[%s2032 + $0x24] sm:$0xf]
        %v2043 = vld [vmem:[%s2032 + $0x28] sm:$0xf]
        %v2044 = vld [vmem:[%s2032 + $0x2c] sm:$0xf]
        %v2045 = vld [vmem:[%s2032 + $0x30] sm:$0xf]
        %v2046 = vld [vmem:[%s2032 + $0x34] sm:$0xf]
        %v2047 = vld [vmem:[%s2032 + $0x38] sm:$0xf]
        %v2048 = vld [vmem:[%s2032 + $0x3c] sm:$0xf]
        %v2065 = vunpack.c.l.b16 %v2033
        %v2066 = vunpack.c.l.b16 %v2034
        %v2067 = vunpack.c.l.b16 %v2035
        %v2068 = vunpack.c.l.b16 %v2036
        %v2069 = vunpack.c.l.b16 %v2037
        %v2070 = vunpack.c.l.b16 %v2038
        %v2071 = vunpack.c.l.b16 %v2039
        %v2072 = vunpack.c.l.b16 %v2040
        %v2073 = vunpack.c.l.b16 %v2041
        %v2074 = vunpack.c.l.b16 %v2042
        %v2075 = vunpack.c.l.b16 %v2043
        %v2076 = vunpack.c.l.b16 %v2044
        %v2077 = vunpack.c.l.b16 %v2045
        %v2078 = vunpack.c.l.b16 %v2046
        %v2079 = vunpack.c.l.b16 %v2047
        %v2080 = vunpack.c.l.b16 %v2048
        %v2081 = vpack.c.b16 %v2066, %v2065
        %v2082 = vpack.c.b16 %v2068, %v2067
        %v2083 = vpack.c.b16 %v2070, %v2069
        %v2084 = vpack.c.b16 %v2072, %v2071
        %v2085 = vpack.c.b16 %v2074, %v2073
        %v2086 = vpack.c.b16 %v2076, %v2075
        %v2087 = vpack.c.b16 %v2078, %v2077
        %v2088 = vpack.c.b16 %v2080, %v2079
        %2097 = vmatprep.subr.bf16.mxu0 0
        %2098 = vmatpush1.bf16.msra.mxu0 %v2088
        %2099 = vmatprep.subr.bf16.mxu0 0
        %2100 = vmatpush1.bf16.msra.mxu0 %v2087
        %2101 = vmatprep.subr.bf16.mxu0 0
        %2102 = vmatpush1.bf16.msra.mxu0 %v2086
        %2103 = vmatprep.subr.bf16.mxu0 0
        %2104 = vmatpush1.bf16.msra.mxu0 %v2085
        %2105 = vmatprep.subr.bf16.mxu0 0
        %2106 = vmatpush1.bf16.msra.mxu0 %v2084
        %2107 = vmatprep.subr.bf16.mxu0 0
        %2108 = vmatpush1.bf16.msra.mxu0 %v2083
        %2109 = vmatprep.subr.bf16.mxu0 0
        %2110 = vmatpush1.bf16.msra.mxu0 %v2082
        %2111 = vmatprep.subr.bf16.mxu0 0
        %2112 = vmatpush1.bf16.msra.mxu0 %v2081
        %2113 = vmatprep.subr.bf16.mxu0 0
        %2114 = vmatpush2.bf16.msra.mxu0 0
        %2115 = vmatprep.subr.bf16.mxu0 0
        %2116 = vmatpush2.bf16.msra.mxu0 0
        %2117 = vmatprep.subr.bf16.mxu0 0
        %2118 = vmatpush2.bf16.msra.mxu0 0
        %2119 = vmatprep.subr.bf16.mxu0 0
        %2120 = vmatpush2.bf16.msra.mxu0 0
        %2121 = vmatprep.subr.bf16.mxu0 0
        %2122 = vmatpush2.bf16.msra.mxu0 0
        %2123 = vmatprep.subr.bf16.mxu0 0
        %2124 = vmatpush2.bf16.msra.mxu0 0
        %2125 = vmatprep.subr.bf16.mxu0 0
        %2126 = vmatpush2.bf16.msra.mxu0 0
        %2127 = vmatprep.subr.bf16.mxu0 0
        %2128 = vmatpush2.bf16.msra.mxu0 0
        %2129 = vmatprep.mubr.bf16.mxu0 0
        %2130 = vmatmul.mubr.bf16.gmra.mxu0 %v2031
        %v2131 = vpop.f32.mrf.mxu0
        %v2132 = vadd.f32 0.0, %v2131
        %v2133 = vpop.f32.mrf.mxu0
        %v2134 = vpop.f32.mrf.mxu0
        %v2135 = vpop.f32.mrf.mxu0
        %2136 = vdwg.mxu0
        %v2137 = vadd.f32 %v1860, %v2132
        %v2139 = vlaneseq
        %v2140 = vshrl.u32 %v2139, 7
        %v2141 = vsub.s32 0, %v2140
        %v2142 = vrot.slane %v1031, %v2141
        %v2144 = vadd.f32 %v2137, %v2142
        %2145 = vst.msk [vmem:[%s465] sm:$0xff] %vm1055, %v2144
        %s2146 = sand.u32 %s300, 1
        %s2147 = scalar_lea.sflag [#allocation5], %s2146
        %s2148 = sand.u32 %s300, 1
        %s2149 = smul.addr %s2148, 32
        %s2150 = scalar_lea.vmem [#allocation4], %s2149
        %s2151 = sand.u32 %s328, 1
        %s2152 = scalar_lea.sflag [#allocation7], %s2151
        %s2153 = sand.u32 %s328, 1
        %s2154 = smul.addr %s2153, 8
        %s2155 = scalar_lea.vmem [#allocation6], %s2154
        // Predicated region
        $region69: #{tpu_custom_call.1} parent=63 // pred_check
          %p2156 = pneg %p310
        $region70: #{tpu_custom_call.1} parent=63 // pred_check_branch
          %2158 = sbr.rel (%p2156) target = $region72
        $region71: #{tpu_custom_call.1} parent=63 // pred_region
          %s2160 = ssub.s32 512, 512
          %2161 = vsyncadd %s2147, %s2160
          %s2162 = smul.addr %s34, 4
          %s2163 = sadd.s32 %s35, %s2162
          %s2164 = smul.addr %s2163, 128
          %s2165 = scalar_lea.hbm %s11, %s2164
          %s2166 = sshll.u32 %s2150, 4
          %s2167 = int_to_ptr.vmem [resolvable:$true] %s2166
          %2172 = dma.vmem_to_hbm [thread:$0]  %s2167, 512, %s2165, %s2147, 128, 128, 8
        $region72: #{tpu_custom_call.1} parent=63 // pred_fallthru
          _
        // Predicated region
        $region73: #{tpu_custom_call.1} parent=63 // pred_check
          %p2173 = pneg %p338
        $region74: #{tpu_custom_call.1} parent=63 // pred_check_branch
          %2175 = sbr.rel (%p2173) target = $region76
        $region75: #{tpu_custom_call.1} parent=63 // pred_region
          %s2177 = ssub.s32 128, 128
          %2178 = vsyncadd %s2152, %s2177
          %s2179 = sadd.s32 %s35, %s34
          %s2180 = smul.addr %s2179, 128
          %s2181 = scalar_lea.hbm %s12, %s2180
          %s2183 = sshll.u32 %s2155, 4
          %s2184 = int_to_ptr.vmem [resolvable:$true] %s2183
          %2186 = dma.vmem_to_hbm [thread:$0]  %s2184, 128, %s2181, %s2152
        $region76: #{tpu_custom_call.1} parent=63 // pred_fallthru
          _
      $region64: #{tpu_custom_call.1} parent=5 // pred_fallthru
        _
      %p2187 = scmp.le.s32.totalorder 2, %s25
      // Predicated region
      $region77: #{tpu_custom_call.1} parent=5 // pred_check
        %p2188 = pneg %p2187
      $region78: #{tpu_custom_call.1} parent=5 // pred_check_branch
        %2190 = sbr.rel (%p2188) target = $region80
      $region79: #{tpu_custom_call.1} parent=5 // pred_region
        %s2191 = ssub.s32 %s25, 2
        // Predicated region
        $region81: #{tpu_custom_call.1} parent=79 // pred_check
          %p2192 = pneg %p316
        $region82: #{tpu_custom_call.1} parent=79 // pred_check_branch
          %2194 = sbr.rel (%p2192) target = $region84
        $region83: #{tpu_custom_call.1} parent=79 // pred_region
          %s2195 = sand.u32 %s301, 1
          %s2196 = scalar_lea.sflag [#allocation5], %s2195
          %s2197 = sand.u32 %s301, 1
          %s2198 = smul.addr %s2197, 32
          %s2199 = scalar_lea.vmem [#allocation4], %s2198
          %2200 = dma.done %s2196, 512
        $region84: #{tpu_custom_call.1} parent=79 // pred_fallthru
          _
        // Predicated region
        $region85: #{tpu_custom_call.1} parent=79 // pred_check
          %p2201 = pneg %p344
        $region86: #{tpu_custom_call.1} parent=79 // pred_check_branch
          %2203 = sbr.rel (%p2201) target = $region88
        $region87: #{tpu_custom_call.1} parent=79 // pred_region
          %s2204 = sand.u32 %s329, 1
          %s2205 = scalar_lea.sflag [#allocation7], %s2204
          %s2206 = sand.u32 %s329, 1
          %s2207 = smul.addr %s2206, 8
          %s2208 = scalar_lea.vmem [#allocation6], %s2207
          %2209 = dma.done %s2205, 128
        $region88: #{tpu_custom_call.1} parent=79 // pred_fallthru
          _
      $region80: #{tpu_custom_call.1} parent=5 // pred_fallthru
        _
    $region6: #{tpu_custom_call.1} parent=1 // loop_footer
      %s29 = sadd.s32 1, %s25
    $region7: #{tpu_custom_call.1} parent=1 // loop_footer_branch
      %24 = sbr.rel target = $region3
    $region8: #{tpu_custom_call.1} parent=1 // loop_exit
      _
    %2210 = vsyncpa [#allocation5], 1
    %s2211 = scalar_lea.sflag [#allocation5], 1
    %2212 = vsyncpa %s2211, 1
    %2213 = vsyncpa [#allocation7], 1
    %s2214 = scalar_lea.sflag [#allocation7], 1
    %2215 = vsyncpa %s2214, 1

// kernel: tpu_custom_call.1
$region0: #{tpu_custom_call.1}
  #allocation0 [shape = 'u32[]', space=smem, size = 0x4, offset = 0x4, fixed_abs, tag = 'smem constant byte address 0x4 - core index']
  #allocation1 [shape = 'u32[144,128]{1,0:T(1,128)}', space=vmem, size = 0x12000, scoped, tag = 'internal scratch']
  #allocation2 [shape = 'bf16[4,8,128]{2,1,0:T(8,128)(2,1)}', space=vmem, size = 0x2000, scoped, tag = 'scratch operand']
  #allocation3 [shape = 'bf16[4,8,128]{2,1,0:T(8,128)(2,1)}', space=vmem, size = 0x2000, scoped, tag = 'scratch operand']
  %s0 = inlined_call_operand.vmem [shape: bf16[2,8,32], index: 0, kind: input, shape index: {}]
  %s1 = inlined_call_operand.vmem [shape: bf16[2,8,32], index: 1, kind: input, shape index: {}]
  %s2 = inlined_call_operand.vmem [shape: f32[1,1,8,8], index: 2, kind: input, shape index: {}]
  %s3 = inlined_call_operand.vmem [shape: bf16[4,32,128], index: 3, kind: input, shape index: {}]
  %s4 = inlined_call_operand.vmem [shape: f32[4,1,128], index: 4, kind: input, shape index: {}]
  %s5 = inlined_call_operand.vmem [shape: bf16[4,32,128], index: 5, kind: input, shape index: {}]
  %s6 = inlined_call_operand.vmem [shape: f32[4,1,128], index: 6, kind: input, shape index: {}]
  %s7 = inlined_call_operand.vmem [shape: bf16[4,32,128], index: 7, kind: input, shape index: {}]
  %s8 = inlined_call_operand.vmem [shape: f32[4,1,128], index: 8, kind: input, shape index: {}]
  %s9 = inlined_call_operand.vmem [shape: bf16[4,128,32], index: 9, kind: input, shape index: {}]
  %s10 = inlined_call_operand.vmem [shape: f32[1,32], index: 10, kind: input, shape index: {}]
  %s11 = inlined_call_operand.hbm [shape: f32[2,4,8,8], index: 11, kind: output, shape index: {0}]
  %s12 = inlined_call_operand.hbm [shape: f32[2,8,32], index: 12, kind: output, shape index: {1}]
  %13 = xla_tuple %s11, %s12
  %s14 = sld [smem:[#allocation0]]
  $region89: #{tpu_custom_call.1} parent=0
    _
  %s16 = ssub.s32 1, %s14
  %s17 = scalar_select 0, %s16, %s14
  $region1: #{tpu_custom_call.1} parent=0
    #allocation4 [shape = 'u8[32768]{0}', space=vmem, size = 0x8000, scoped, tag = 'output window, operand 0']
    #allocation5 [shape = 's32[2]{0}', space=sflag, size = 0x8, scoped, tag = 'scoped memory for tpu_custom_call.1']
    #allocation6 [shape = 'u8[8192]{0}', space=vmem, size = 0x2000, scoped, tag = 'output window, operand 1']
    #allocation7 [shape = 's32[2]{0}', space=sflag, size = 0x8, scoped, tag = 'scoped memory for tpu_custom_call.1']
    %18 = vsyncpa [#allocation5], 0
    %s19 = scalar_lea.sflag [#allocation5], 1
    %20 = vsyncpa %s19, 0
    %21 = vsyncpa [#allocation7], 0
    %s22 = scalar_lea.sflag [#allocation7], 1
    %23 = vsyncpa %s22, 0
    loop: start=0, step=1, limit=4
    $region2: #{tpu_custom_call.1} parent=1 // loop_pre_header
      _
    $region3: #{tpu_custom_call.1} parent=1 // loop_header
      %s25 = sphi 0, %s29
      %p26 = scmp.ge.s32.totalorder %s25, 4
      %s32 = sphi 0, %s44
      %s33 = sphi 0, %s40
      %s34 = sphi 0, %s32
      %s35 = sphi 0, %s33
      %s36 = sphi 0, %s34
      %s37 = sphi 0, %s35
      %s47 = sphi 0, %s49
      %s50 = sphi 0, %s47
      %s51 = sphi 0, %s50
      %s67 = sphi 0, %s51
      %s75 = sphi 0, %s77
      %s78 = sphi 0, %s75
      %s79 = sphi 0, %s78
      %s95 = sphi 0, %s79
      %s101 = sphi 0, %s103
      %s104 = sphi 0, %s101
      %s105 = sphi 0, %s104
      %s121 = sphi 0, %s105
      %s125 = sphi 0, %s125
      %s127 = sphi 0, %s125
      %s128 = sphi 0, %s127
      %s142 = sphi 0, %s128
      %s146 = sphi 0, %s146
      %s148 = sphi 0, %s146
      %s149 = sphi 0, %s148
      %s163 = sphi 0, %s149
      %s167 = sphi 0, %s167
      %s169 = sphi 0, %s167
      %s170 = sphi 0, %s169
      %s184 = sphi 0, %s170
      %s188 = sphi 0, %s188
      %s190 = sphi 0, %s188
      %s191 = sphi 0, %s190
      %s205 = sphi 0, %s191
      %s209 = sphi 0, %s209
      %s211 = sphi 0, %s209
      %s212 = sphi 0, %s211
      %s226 = sphi 0, %s212
      %s230 = sphi 0, %s230
      %s232 = sphi 0, %s230
      %s233 = sphi 0, %s232
      %s247 = sphi 0, %s233
      %s251 = sphi 0, %s251
      %s253 = sphi 0, %s251
      %s254 = sphi 0, %s253
      %s268 = sphi 0, %s254
      %s272 = sphi 0, %s272
      %s274 = sphi 0, %s272
      %s275 = sphi 0, %s274
      %s289 = sphi 0, %s275
      %s297 = sphi 0, %s299
      %s300 = sphi 0, %s297
      %s301 = sphi 0, %s300
      %s317 = sphi 0, %s301
      %s325 = sphi 0, %s327
      %s328 = sphi 0, %s325
      %s329 = sphi 0, %s328
      %s345 = sphi 0, %s329
    $region4: #{tpu_custom_call.1} parent=1 // loop_header_branch
      %28 = sbr.rel (%p26) target = $region8
    $region5: #{tpu_custom_call.1} parent=1 // loop_body
      %s30 = ssub.s32 %s25, 1
      %s31 = ssub.s32 %s25, 2
      %s38 = sadd.s32 1, %s33
      %p39 = scmp.ge.s32.totalorder %s38, 1
      %s40 = scalar_select %p39, 0, %s38
      %s41 = sadd.s32 1, %s32
      %s42 = scalar_select %p39, %s41, %s32
      %p43 = scmp.ge.s32.totalorder %s42, 2
      %s44 = scalar_select %p43, 0, %s42
      %s45 = ssub.s32 %s32, %s44
      %p46 = scmp.eq.s32.totalorder %s45, 0
      %s48 = sadd.s32 %s47, 1
      %s49 = scalar_select %p46, %s47, %s48
      %p52 = pneg %p46
      %p53 = scmp.eq.s32.totalorder %s25, 1
      %p54 = por %p52, %p53
      %p55 = scmp.ne.s32.totalorder %s47, %s50
      %p56 = scmp.eq.s32.totalorder %s25, 0
      %p57 = por %p55, %p56
      %p58 = scmp.ne.s32.totalorder %s47, %s50
      %p59 = scmp.eq.s32.totalorder %s30, 1
      %p60 = por %p58, %p59
      %p61 = scmp.ne.s32.totalorder %s50, %s51
      %p62 = scmp.eq.s32.totalorder %s30, 0
      %p63 = por %p61, %p62
      %p64 = scmp.ne.s32.totalorder %s50, %s51
      %p65 = scmp.eq.s32.totalorder %s31, 1
      %p66 = por %p64, %p65
      %p68 = scmp.ne.s32.totalorder %s51, %s67
      %p69 = scmp.eq.s32.totalorder %s31, 0
      %p70 = por %p68, %p69
      %s71 = ssub.s32 %s32, %s44
      %s72 = ssub.s32 %s33, %s40
      %s73 = sor.u32 %s71, %s72
      %p74 = scmp.eq.s32.totalorder %s73, 0
      %s76 = sadd.s32 %s75, 1
      %s77 = scalar_select %p74, %s75, %s76
      %p80 = pneg %p74
      %p81 = scmp.eq.s32.totalorder %s25, 1
      %p82 = por %p80, %p81
      %p83 = scmp.ne.s32.totalorder %s75, %s78
      %p84 = scmp.eq.s32.totalorder %s25, 0
      %p85 = por %p83, %p84
      %p86 = scmp.ne.s32.totalorder %s75, %s78
      %p87 = scmp.eq.s32.totalorder %s30, 1
      %p88 = por %p86, %p87
      %p89 = scmp.ne.s32.totalorder %s78, %s79
      %p90 = scmp.eq.s32.totalorder %s30, 0
      %p91 = por %p89, %p90
      %p92 = scmp.ne.s32.totalorder %s78, %s79
      %p93 = scmp.eq.s32.totalorder %s31, 1
      %p94 = por %p92, %p93
      %p96 = scmp.ne.s32.totalorder %s79, %s95
      %p97 = scmp.eq.s32.totalorder %s31, 0
      %p98 = por %p96, %p97
      %s99 = ssub.s32 %s33, %s40
      %p100 = scmp.eq.s32.totalorder %s99, 0
      %s102 = sadd.s32 %s101, 1
      %s103 = scalar_select %p100, %s101, %s102
      %p106 = pneg %p100
      %p107 = scmp.eq.s32.totalorder %s25, 1
      %p108 = por %p106, %p107
      %p109 = scmp.ne.s32.totalorder %s101, %s104
      %p110 = scmp.eq.s32.totalorder %s25, 0
      %p111 = por %p109, %p110
      %p112 = scmp.ne.s32.totalorder %s101, %s104
      %p113 = scmp.eq.s32.totalorder %s30, 1
      %p114 = por %p112, %p113
      %p115 = scmp.ne.s32.totalorder %s104, %s105
      %p116 = scmp.eq.s32.totalorder %s30, 0
      %p117 = por %p115, %p116
      %p118 = scmp.ne.s32.totalorder %s104, %s105
      %p119 = scmp.eq.s32.totalorder %s31, 1
      %p120 = por %p118, %p119
      %p122 = scmp.ne.s32.totalorder %s105, %s121
      %p123 = scmp.eq.s32.totalorder %s31, 0
      %p124 = por %p122, %p123
      %s126 = sadd.s32 %s125, 1
      %p129 = scmp.eq.s32.totalorder %s25, 1
      %p130 = scmp.ne.s32.totalorder %s125, %s127
      %p131 = scmp.eq.s32.totalorder %s25, 0
      %p132 = por %p130, %p131
      %p133 = scmp.ne.s32.totalorder %s125, %s127
      %p134 = scmp.eq.s32.totalorder %s30, 1
      %p135 = por %p133, %p134
      %p136 = scmp.ne.s32.totalorder %s127, %s128
      %p137 = scmp.eq.s32.totalorder %s30, 0
      %p138 = por %p136, %p137
      %p139 = scmp.ne.s32.totalorder %s127, %s128
      %p140 = scmp.eq.s32.totalorder %s31, 1
      %p141 = por %p139, %p140
      %p143 = scmp.ne.s32.totalorder %s128, %s142
      %p144 = scmp.eq.s32.totalorder %s31, 0
      %p145 = por %p143, %p144
      %s147 = sadd.s32 %s146, 1
      %p150 = scmp.eq.s32.totalorder %s25, 1
      %p151 = scmp.ne.s32.totalorder %s146, %s148
      %p152 = scmp.eq.s32.totalorder %s25, 0
      %p153 = por %p151, %p152
      %p154 = scmp.ne.s32.totalorder %s146, %s148
      %p155 = scmp.eq.s32.totalorder %s30, 1
      %p156 = por %p154, %p155
      %p157 = scmp.ne.s32.totalorder %s148, %s149
      %p158 = scmp.eq.s32.totalorder %s30, 0
      %p159 = por %p157, %p158
      %p160 = scmp.ne.s32.totalorder %s148, %s149
      %p161 = scmp.eq.s32.totalorder %s31, 1
      %p162 = por %p160, %p161
      %p164 = scmp.ne.s32.totalorder %s149, %s163
      %p165 = scmp.eq.s32.totalorder %s31, 0
      %p166 = por %p164, %p165
      %s168 = sadd.s32 %s167, 1
      %p171 = scmp.eq.s32.totalorder %s25, 1
      %p172 = scmp.ne.s32.totalorder %s167, %s169
      %p173 = scmp.eq.s32.totalorder %s25, 0
      %p174 = por %p172, %p173
      %p175 = scmp.ne.s32.totalorder %s167, %s169
      %p176 = scmp.eq.s32.totalorder %s30, 1
      %p177 = por %p175, %p176
      %p178 = scmp.ne.s32.totalorder %s169, %s170
      %p179 = scmp.eq.s32.totalorder %s30, 0
      %p180 = por %p178, %p179
      %p181 = scmp.ne.s32.totalorder %s169, %s170
      %p182 = scmp.eq.s32.totalorder %s31, 1
      %p183 = por %p181, %p182
      %p185 = scmp.ne.s32.totalorder %s170, %s184
      %p186 = scmp.eq.s32.totalorder %s31, 0
      %p187 = por %p185, %p186
      %s189 = sadd.s32 %s188, 1
      %p192 = scmp.eq.s32.totalorder %s25, 1
      %p193 = scmp.ne.s32.totalorder %s188, %s190
      %p194 = scmp.eq.s32.totalorder %s25, 0
      %p195 = por %p193, %p194
      %p196 = scmp.ne.s32.totalorder %s188, %s190
      %p197 = scmp.eq.s32.totalorder %s30, 1
      %p198 = por %p196, %p197
      %p199 = scmp.ne.s32.totalorder %s190, %s191
      %p200 = scmp.eq.s32.totalorder %s30, 0
      %p201 = por %p199, %p200
      %p202 = scmp.ne.s32.totalorder %s190, %s191
      %p203 = scmp.eq.s32.totalorder %s31, 1
      %p204 = por %p202, %p203
      %p206 = scmp.ne.s32.totalorder %s191, %s205
      %p207 = scmp.eq.s32.totalorder %s31, 0
      %p208 = por %p206, %p207
      %s210 = sadd.s32 %s209, 1
      %p213 = scmp.eq.s32.totalorder %s25, 1
      %p214 = scmp.ne.s32.totalorder %s209, %s211
      %p215 = scmp.eq.s32.totalorder %s25, 0
      %p216 = por %p214, %p215
      %p217 = scmp.ne.s32.totalorder %s209, %s211
      %p218 = scmp.eq.s32.totalorder %s30, 1
      %p219 = por %p217, %p218
      %p220 = scmp.ne.s32.totalorder %s211, %s212
      %p221 = scmp.eq.s32.totalorder %s30, 0
      %p222 = por %p220, %p221
      %p223 = scmp.ne.s32.totalorder %s211, %s212
      %p224 = scmp.eq.s32.totalorder %s31, 1
      %p225 = por %p223, %p224
      %p227 = scmp.ne.s32.totalorder %s212, %s226
      %p228 = scmp.eq.s32.totalorder %s31, 0
      %p229 = por %p227, %p228
      %s231 = sadd.s32 %s230, 1
      %p234 = scmp.eq.s32.totalorder %s25, 1
      %p235 = scmp.ne.s32.totalorder %s230, %s232
      %p236 = scmp.eq.s32.totalorder %s25, 0
      %p237 = por %p235, %p236
      %p238 = scmp.ne.s32.totalorder %s230, %s232
      %p239 = scmp.eq.s32.totalorder %s30, 1
      %p240 = por %p238, %p239
      %p241 = scmp.ne.s32.totalorder %s232, %s233
      %p242 = scmp.eq.s32.totalorder %s30, 0
      %p243 = por %p241, %p242
      %p244 = scmp.ne.s32.totalorder %s232, %s233
      %p245 = scmp.eq.s32.totalorder %s31, 1
      %p246 = por %p244, %p245
      %p248 = scmp.ne.s32.totalorder %s233, %s247
      %p249 = scmp.eq.s32.totalorder %s31, 0
      %p250 = por %p248, %p249
      %s252 = sadd.s32 %s251, 1
      %p255 = scmp.eq.s32.totalorder %s25, 1
      %p256 = scmp.ne.s32.totalorder %s251, %s253
      %p257 = scmp.eq.s32.totalorder %s25, 0
      %p258 = por %p256, %p257
      %p259 = scmp.ne.s32.totalorder %s251, %s253
      %p260 = scmp.eq.s32.totalorder %s30, 1
      %p261 = por %p259, %p260
      %p262 = scmp.ne.s32.totalorder %s253, %s254
      %p263 = scmp.eq.s32.totalorder %s30, 0
      %p264 = por %p262, %p263
      %p265 = scmp.ne.s32.totalorder %s253, %s254
      %p266 = scmp.eq.s32.totalorder %s31, 1
      %p267 = por %p265, %p266
      %p269 = scmp.ne.s32.totalorder %s254, %s268
      %p270 = scmp.eq.s32.totalorder %s31, 0
      %p271 = por %p269, %p270
      %s273 = sadd.s32 %s272, 1
      %p276 = scmp.eq.s32.totalorder %s25, 1
      %p277 = scmp.ne.s32.totalorder %s272, %s274
      %p278 = scmp.eq.s32.totalorder %s25, 0
      %p279 = por %p277, %p278
      %p280 = scmp.ne.s32.totalorder %s272, %s274
      %p281 = scmp.eq.s32.totalorder %s30, 1
      %p282 = por %p280, %p281
      %p283 = scmp.ne.s32.totalorder %s274, %s275
      %p284 = scmp.eq.s32.totalorder %s30, 0
      %p285 = por %p283, %p284
      %p286 = scmp.ne.s32.totalorder %s274, %s275
      %p287 = scmp.eq.s32.totalorder %s31, 1
      %p288 = por %p286, %p287
      %p290 = scmp.ne.s32.totalorder %s275, %s289
      %p291 = scmp.eq.s32.totalorder %s31, 0
      %p292 = por %p290, %p291
      %s293 = ssub.s32 %s32, %s44
      %s294 = ssub.s32 %s33, %s40
      %s295 = sor.u32 %s293, %s294
      %p296 = scmp.eq.s32.totalorder %s295, 0
      %s298 = sadd.s32 %s297, 1
      %s299 = scalar_select %p296, %s297, %s298
      %p302 = pneg %p296
      %p303 = scmp.eq.s32.totalorder %s25, 1
      %p304 = por %p302, %p303
      %p305 = scmp.ne.s32.totalorder %s297, %s300
      %p306 = scmp.eq.s32.totalorder %s25, 0
      %p307 = por %p305, %p306
      %p308 = scmp.ne.s32.totalorder %s297, %s300
      %p309 = scmp.eq.s32.totalorder %s30, 1
      %p310 = por %p308, %p309
      %p311 = scmp.ne.s32.totalorder %s300, %s301
      %p312 = scmp.eq.s32.totalorder %s30, 0
      %p313 = por %p311, %p312
      %p314 = scmp.ne.s32.totalorder %s300, %s301
      %p315 = scmp.eq.s32.totalorder %s31, 1
      %p316 = por %p314, %p315
      %p318 = scmp.ne.s32.totalorder %s301, %s317
      %p319 = scmp.eq.s32.totalorder %s31, 0
      %p320 = por %p318, %p319
      %s321 = ssub.s32 %s32, %s44
      %s322 = ssub.s32 %s33, %s40
      %s323 = sor.u32 %s321, %s322
      %p324 = scmp.eq.s32.totalorder %s323, 0
      %s326 = sadd.s32 %s325, 1
      %s327 = scalar_select %p324, %s325, %s326
      %p330 = pneg %p324
      %p331 = scmp.eq.s32.totalorder %s25, 1
      %p332 = por %p330, %p331
      %p333 = scmp.ne.s32.totalorder %s325, %s328
      %p334 = scmp.eq.s32.totalorder %s25, 0
      %p335 = por %p333, %p334
      %p336 = scmp.ne.s32.totalorder %s325, %s328
      %p337 = scmp.eq.s32.totalorder %s30, 1
      %p338 = por %p336, %p337
      %p339 = scmp.ne.s32.totalorder %s328, %s329
      %p340 = scmp.eq.s32.totalorder %s30, 0
      %p341 = por %p339, %p340
      %p342 = scmp.ne.s32.totalorder %s328, %s329
      %p343 = scmp.eq.s32.totalorder %s31, 1
      %p344 = por %p342, %p343
      %p346 = scmp.ne.s32.totalorder %s329, %s345
      %p347 = scmp.eq.s32.totalorder %s31, 0
      %p348 = por %p346, %p347
      %p349 = scmp.le.s32.totalorder 1, %s25
      %p350 = scmp.lt.s32.totalorder %s25, 3
      %p351 = pnand %p349, %p350
      %p352 = pneg %p351
      // Predicated region
      $region9: #{tpu_custom_call.1} parent=5 // pred_check
        _
      $region10: #{tpu_custom_call.1} parent=5 // pred_check_branch
        %354 = sbr.rel (%p351) target = $region12
      $region11: #{tpu_custom_call.1} parent=5 // pred_region
        %s355 = ssub.s32 %s25, 1
        // Predicated region
        $region13: #{tpu_custom_call.1} parent=11 // pred_check
          %p356 = pneg %p117
        $region14: #{tpu_custom_call.1} parent=11 // pred_check_branch
          %358 = sbr.rel (%p356) target = $region16
        $region15: #{tpu_custom_call.1} parent=11 // pred_region
          %p359 = scmp.lt.s32.totalorder %s35, 0
          %s360 = scalar_select %p359, %s35, 0
          %s361 = smul.addr %s360, 8
          %s362 = scalar_lea.vmem %s2, %s361
        $region16: #{tpu_custom_call.1} parent=11 // pred_fallthru
          _
        // Predicated region
        $region17: #{tpu_custom_call.1} parent=11 // pred_check
          %p363 = pneg %p138
        $region18: #{tpu_custom_call.1} parent=11 // pred_check_branch
          %365 = sbr.rel (%p363) target = $region20
        $region19: #{tpu_custom_call.1} parent=11 // pred_region
          _
        $region20: #{tpu_custom_call.1} parent=11 // pred_fallthru
          _
        // Predicated region
        $region21: #{tpu_custom_call.1} parent=11 // pred_check
          %p366 = pneg %p159
        $region22: #{tpu_custom_call.1} parent=11 // pred_check_branch
          %368 = sbr.rel (%p366) target = $region24
        $region23: #{tpu_custom_call.1} parent=11 // pred_region
          _
        $region24: #{tpu_custom_call.1} parent=11 // pred_fallthru
          _
        // Predicated region
        $region25: #{tpu_custom_call.1} parent=11 // pred_check
          %p369 = pneg %p180
        $region26: #{tpu_custom_call.1} parent=11 // pred_check_branch
          %371 = sbr.rel (%p369) target = $region28
        $region27: #{tpu_custom_call.1} parent=11 // pred_region
          _
        $region28: #{tpu_custom_call.1} parent=11 // pred_fallthru
          _
        // Predicated region
        $region29: #{tpu_custom_call.1} parent=11 // pred_check
          %p372 = pneg %p201
        $region30: #{tpu_custom_call.1} parent=11 // pred_check_branch
          %374 = sbr.rel (%p372) target = $region32
        $region31: #{tpu_custom_call.1} parent=11 // pred_region
          _
        $region32: #{tpu_custom_call.1} parent=11 // pred_fallthru
          _
        // Predicated region
        $region33: #{tpu_custom_call.1} parent=11 // pred_check
          %p375 = pneg %p222
        $region34: #{tpu_custom_call.1} parent=11 // pred_check_branch
          %377 = sbr.rel (%p375) target = $region36
        $region35: #{tpu_custom_call.1} parent=11 // pred_region
          _
        $region36: #{tpu_custom_call.1} parent=11 // pred_fallthru
          _
        // Predicated region
        $region37: #{tpu_custom_call.1} parent=11 // pred_check
          %p378 = pneg %p243
        $region38: #{tpu_custom_call.1} parent=11 // pred_check_branch
          %380 = sbr.rel (%p378) target = $region40
        $region39: #{tpu_custom_call.1} parent=11 // pred_region
          _
        $region40: #{tpu_custom_call.1} parent=11 // pred_fallthru
          _
        // Predicated region
        $region41: #{tpu_custom_call.1} parent=11 // pred_check
          %p381 = pneg %p264
        $region42: #{tpu_custom_call.1} parent=11 // pred_check_branch
          %383 = sbr.rel (%p381) target = $region44
        $region43: #{tpu_custom_call.1} parent=11 // pred_region
          _
        $region44: #{tpu_custom_call.1} parent=11 // pred_fallthru
          _
        // Predicated region
        $region45: #{tpu_custom_call.1} parent=11 // pred_check
          %p384 = pneg %p285
        $region46: #{tpu_custom_call.1} parent=11 // pred_check_branch
          %386 = sbr.rel (%p384) target = $region48
        $region47: #{tpu_custom_call.1} parent=11 // pred_region
          _
        $region48: #{tpu_custom_call.1} parent=11 // pred_fallthru
          _
      $region12: #{tpu_custom_call.1} parent=5 // pred_fallthru
        _
      %p387 = scmp.lt.s32.totalorder %s25, 2
      // Predicated region
      $region49: #{tpu_custom_call.1} parent=5 // pred_check
        %p388 = pneg %p387
      $region50: #{tpu_custom_call.1} parent=5 // pred_check_branch
        %390 = sbr.rel (%p388) target = $region52
      $region51: #{tpu_custom_call.1} parent=5 // pred_region
        // Predicated region
        $region53: #{tpu_custom_call.1} parent=51 // pred_check
          %p391 = pneg %p57
        $region54: #{tpu_custom_call.1} parent=51 // pred_check_branch
          %393 = sbr.rel (%p391) target = $region56
        $region55: #{tpu_custom_call.1} parent=51 // pred_region
          %p394 = scmp.lt.s32.totalorder %s32, 1
          %s395 = scalar_select %p394, %s32, 1
          %s396 = smul.addr %s395, 4
          %s397 = scalar_lea.vmem %s0, %s396
        $region56: #{tpu_custom_call.1} parent=51 // pred_fallthru
          _
        // Predicated region
        $region57: #{tpu_custom_call.1} parent=51 // pred_check
          %p398 = pneg %p85
        $region58: #{tpu_custom_call.1} parent=51 // pred_check_branch
          %400 = sbr.rel (%p398) target = $region60
        $region59: #{tpu_custom_call.1} parent=51 // pred_region
          %p401 = scmp.lt.s32.totalorder %s32, 1
          %s402 = scalar_select %p401, %s32, 1
          %p403 = scmp.lt.s32.totalorder %s33, 0
          %s404 = scalar_select %p403, %s33, 0
          %s405 = sadd.s32 %s404, %s402
          %s406 = smul.addr %s405, 4
          %s407 = scalar_lea.vmem %s1, %s406
        $region60: #{tpu_custom_call.1} parent=51 // pred_fallthru
          _
      $region52: #{tpu_custom_call.1} parent=5 // pred_fallthru
        _
      %p408 = scmp.le.s32.totalorder 1, %s25
      %p409 = scmp.lt.s32.totalorder %s25, 3
      %p410 = pnand %p408, %p409
      %p411 = pneg %p410
      // Predicated region
      $region61: #{tpu_custom_call.1} parent=5 // pred_check
        _
      $region62: #{tpu_custom_call.1} parent=5 // pred_check_branch
        %413 = sbr.rel (%p410) target = $region64
      $region63: #{tpu_custom_call.1} parent=5 // pred_region
        %s414 = ssub.s32 %s25, 1
        %p415 = scmp.lt.s32.totalorder %s34, 1
        %s416 = scalar_select %p415, %s34, 1
        %s417 = smul.addr %s416, 4
        %s418 = scalar_lea.vmem %s0, %s417
        %p419 = pneg %p63
        %p420 = pneg %p60
        %p421 = scmp.lt.s32.totalorder %s34, 1
        %s422 = scalar_select %p421, %s34, 1
        %p423 = scmp.lt.s32.totalorder %s35, 0
        %s424 = scalar_select %p423, %s35, 0
        %s425 = sadd.s32 %s424, %s422
        %s426 = smul.addr %s425, 4
        %s427 = scalar_lea.vmem %s1, %s426
        %p428 = pneg %p91
        %p429 = pneg %p88
        %p430 = scmp.lt.s32.totalorder %s35, 0
        %s431 = scalar_select %p430, %s35, 0
        %s432 = smul.addr %s431, 8
        %s433 = scalar_lea.vmem %s2, %s432
        %p434 = pneg %p117
        %p435 = pneg %p114
        %p436 = pneg %p138
        %p437 = pneg %p135
        %p438 = pneg %p159
        %p439 = pneg %p156
        %p440 = pneg %p180
        %p441 = pneg %p177
        %p442 = pneg %p201
        %p443 = pneg %p198
        %p444 = pneg %p222
        %p445 = pneg %p219
        %p446 = pneg %p243
        %p447 = pneg %p240
        %p448 = pneg %p264
        %p449 = pneg %p261
        %p450 = pneg %p285
        %p451 = pneg %p282
        %p452 = pneg %p313
        %p453 = pneg %p310
        %s454 = sand.u32 %s300, 1
        %s455 = scalar_lea.sflag [#allocation5], %s454
        %s456 = sand.u32 %s300, 1
        %s457 = smul.addr %s456, 32
        %s458 = scalar_lea.vmem [#allocation4], %s457
        %p459 = pneg %p341
        %p460 = pneg %p338
        %s461 = sand.u32 %s328, 1
        %s462 = scalar_lea.sflag [#allocation7], %s461
        %s463 = sand.u32 %s328, 1
        %s464 = smul.addr %s463, 8
        %s465 = scalar_lea.vmem [#allocation6], %s464
        %p466 = scmp.lt.s32.totalorder %s34, 1
        %s467 = scalar_select %p466, %s34, 1
        %s468 = smul.addr %s467, 4
        %s469 = scalar_lea.vmem %s0, %s468
        %p470 = scmp.lt.s32.totalorder %s34, 1
        %s471 = scalar_select %p470, %s34, 1
        %p472 = scmp.lt.s32.totalorder %s35, 0
        %s473 = scalar_select %p472, %s35, 0
        %s474 = sadd.s32 %s473, %s471
        %s475 = smul.addr %s474, 4
        %s476 = scalar_lea.vmem %s1, %s475
        %p477 = scmp.lt.s32.totalorder %s35, 0
        %s478 = scalar_select %p477, %s35, 0
        %s479 = smul.addr %s478, 8
        %s480 = scalar_lea.vmem %s2, %s479
        %p482 = scmp.eq.s32.totalorder %s35, 0
        // Predicated region
        $region65: #{tpu_custom_call.1} parent=63 // pred_check
          %p483 = pneg %p482
        $region66: #{tpu_custom_call.1} parent=63 // pred_check_branch
          %485 = sbr.rel (%p483) target = $region68
        $region67: #{tpu_custom_call.1} parent=63 // pred_region
          %v486 = vld [vmem:[%s469] sm:$0xf]
          %v487 = vld [vmem:[%s5] sm:$0xf]
          %v488 = vld [vmem:[%s5 + $0x4] sm:$0xf]
          %v489 = vld [vmem:[%s5 + $0x8] sm:$0xf]
          %v490 = vld [vmem:[%s5 + $0xc] sm:$0xf]
          %v491 = vld [vmem:[%s6] sm:$0x1]
          %v493 = vlaneseq
          %v494 = vshrl.u32 %v493, 7
          %v495 = vsub.s32 0, %v494
          %v496 = vrot.slane %v491, %v495
          %v502 = vunpack.c.l.b16 %v487
          %v503 = vunpack.c.l.b16 %v488
          %v504 = vunpack.c.l.b16 %v489
          %v505 = vunpack.c.l.b16 %v490
          %v506 = vpack.c.b16 %v503, %v502
          %v507 = vpack.c.b16 %v505, %v504
          %vm510 = vcmask 261120
          %v512 = vsel %vm510, %v486, 0
          %514 = vmatprep.subr.bf16.mxu0 0
          %515 = vmatpush1.bf16.msra.mxu0 0
          %516 = vmatprep.subr.bf16.mxu0 0
          %517 = vmatpush1.bf16.msra.mxu0 0
          %518 = vmatprep.subr.bf16.mxu0 0
          %519 = vmatpush1.bf16.msra.mxu0 0
          %520 = vmatprep.subr.bf16.mxu0 0
          %521 = vmatpush1.bf16.msra.mxu0 0
          %522 = vmatprep.subr.bf16.mxu0 0
          %523 = vmatpush1.bf16.msra.mxu0 0
          %524 = vmatprep.subr.bf16.mxu0 0
          %525 = vmatpush1.bf16.msra.mxu0 0
          %526 = vmatprep.subr.bf16.mxu0 0
          %527 = vmatpush1.bf16.msra.mxu0 %v507
          %528 = vmatprep.subr.bf16.mxu0 0
          %529 = vmatpush1.bf16.msra.mxu0 %v506
          %530 = vmatprep.subr.bf16.mxu0 0
          %531 = vmatpush2.bf16.msra.mxu0 0
          %532 = vmatprep.subr.bf16.mxu0 0
          %533 = vmatpush2.bf16.msra.mxu0 0
          %534 = vmatprep.subr.bf16.mxu0 0
          %535 = vmatpush2.bf16.msra.mxu0 0
          %536 = vmatprep.subr.bf16.mxu0 0
          %537 = vmatpush2.bf16.msra.mxu0 0
          %538 = vmatprep.subr.bf16.mxu0 0
          %539 = vmatpush2.bf16.msra.mxu0 0
          %540 = vmatprep.subr.bf16.mxu0 0
          %541 = vmatpush2.bf16.msra.mxu0 0
          %542 = vmatprep.subr.bf16.mxu0 0
          %543 = vmatpush2.bf16.msra.mxu0 0
          %544 = vmatprep.subr.bf16.mxu0 0
          %545 = vmatpush2.bf16.msra.mxu0 0
          %546 = vmatprep.mubr.bf16.mxu0 0
          %547 = vmatmul.mubr.bf16.gmra.mxu0 %v512
          %v548 = vpop.f32.mrf.mxu0
          %v549 = vadd.f32 %v496, %v548
          %v550 = vpop.f32.mrf.mxu0
          %v551 = vpop.f32.mrf.mxu0
          %v552 = vpop.f32.mrf.mxu0
          %553 = vdwg.mxu0
          %v554 = vpack.c.bf16 %v549, %v549
          %555 = vst [vmem:[#allocation2] sm:$0xf] %v554
          %v556 = vld [vmem:[%s7] sm:$0xf]
          %v557 = vld [vmem:[%s7 + $0x4] sm:$0xf]
          %v558 = vld [vmem:[%s7 + $0x8] sm:$0xf]
          %v559 = vld [vmem:[%s7 + $0xc] sm:$0xf]
          %v560 = vld [vmem:[%s8] sm:$0x1]
          %v562 = vlaneseq
          %v563 = vshrl.u32 %v562, 7
          %v564 = vsub.s32 0, %v563
          %v565 = vrot.slane %v560, %v564
          %v571 = vunpack.c.l.b16 %v556
          %v572 = vunpack.c.l.b16 %v557
          %v573 = vunpack.c.l.b16 %v558
          %v574 = vunpack.c.l.b16 %v559
          %v575 = vpack.c.b16 %v572, %v571
          %v576 = vpack.c.b16 %v574, %v573
          %579 = vmatprep.subr.bf16.mxu0 0
          %580 = vmatpush1.bf16.msra.mxu0 0
          %581 = vmatprep.subr.bf16.mxu0 0
          %582 = vmatpush1.bf16.msra.mxu0 0
          %583 = vmatprep.subr.bf16.mxu0 0
          %584 = vmatpush1.bf16.msra.mxu0 0
          %585 = vmatprep.subr.bf16.mxu0 0
          %586 = vmatpush1.bf16.msra.mxu0 0
          %587 = vmatprep.subr.bf16.mxu0 0
          %588 = vmatpush1.bf16.msra.mxu0 0
          %589 = vmatprep.subr.bf16.mxu0 0
          %590 = vmatpush1.bf16.msra.mxu0 0
          %591 = vmatprep.subr.bf16.mxu0 0
          %592 = vmatpush1.bf16.msra.mxu0 %v576
          %593 = vmatprep.subr.bf16.mxu0 0
          %594 = vmatpush1.bf16.msra.mxu0 %v575
          %595 = vmatprep.subr.bf16.mxu0 0
          %596 = vmatpush2.bf16.msra.mxu0 0
          %597 = vmatprep.subr.bf16.mxu0 0
          %598 = vmatpush2.bf16.msra.mxu0 0
          %599 = vmatprep.subr.bf16.mxu0 0
          %600 = vmatpush2.bf16.msra.mxu0 0
          %601 = vmatprep.subr.bf16.mxu0 0
          %602 = vmatpush2.bf16.msra.mxu0 0
          %603 = vmatprep.subr.bf16.mxu0 0
          %604 = vmatpush2.bf16.msra.mxu0 0
          %605 = vmatprep.subr.bf16.mxu0 0
          %606 = vmatpush2.bf16.msra.mxu0 0
          %607 = vmatprep.subr.bf16.mxu0 0
          %608 = vmatpush2.bf16.msra.mxu0 0
          %609 = vmatprep.subr.bf16.mxu0 0
          %610 = vmatpush2.bf16.msra.mxu0 0
          %611 = vmatprep.mubr.bf16.mxu0 0
          %612 = vmatmul.mubr.bf16.gmra.mxu0 %v512
          %v613 = vpop.f32.mrf.mxu0
          %v614 = vadd.f32 %v565, %v613
          %v615 = vpop.f32.mrf.mxu0
          %v616 = vpop.f32.mrf.mxu0
          %v617 = vpop.f32.mrf.mxu0
          %618 = vdwg.mxu0
          %v619 = vpack.c.bf16 %v614, %v614
          %620 = vst [vmem:[#allocation3] sm:$0xf] %v619
          %s621 = scalar_lea.vmem %s5, 16
          %v622 = vld [vmem:[%s621] sm:$0xf]
          %v623 = vld [vmem:[%s621 + $0x4] sm:$0xf]
          %v624 = vld [vmem:[%s621 + $0x8] sm:$0xf]
          %v625 = vld [vmem:[%s621 + $0xc] sm:$0xf]
          %s626 = scalar_lea.vmem %s6, 1
          %v627 = vld [vmem:[%s626] sm:$0x1]
          %v629 = vlaneseq
          %v630 = vshrl.u32 %v629, 7
          %v631 = vsub.s32 0, %v630
          %v632 = vrot.slane %v627, %v631
          %v638 = vunpack.c.l.b16 %v622
          %v639 = vunpack.c.l.b16 %v623
          %v640 = vunpack.c.l.b16 %v624
          %v641 = vunpack.c.l.b16 %v625
          %v642 = vpack.c.b16 %v639, %v638
          %v643 = vpack.c.b16 %v641, %v640
          %646 = vmatprep.subr.bf16.mxu0 0
          %647 = vmatpush1.bf16.msra.mxu0 0
          %648 = vmatprep.subr.bf16.mxu0 0
          %649 = vmatpush1.bf16.msra.mxu0 0
          %650 = vmatprep.subr.bf16.mxu0 0
          %651 = vmatpush1.bf16.msra.mxu0 0
          %652 = vmatprep.subr.bf16.mxu0 0
          %653 = vmatpush1.bf16.msra.mxu0 0
          %654 = vmatprep.subr.bf16.mxu0 0
          %655 = vmatpush1.bf16.msra.mxu0 0
          %656 = vmatprep.subr.bf16.mxu0 0
          %657 = vmatpush1.bf16.msra.mxu0 0
          %658 = vmatprep.subr.bf16.mxu0 0
          %659 = vmatpush1.bf16.msra.mxu0 %v643
          %660 = vmatprep.subr.bf16.mxu0 0
          %661 = vmatpush1.bf16.msra.mxu0 %v642
          %662 = vmatprep.subr.bf16.mxu0 0
          %663 = vmatpush2.bf16.msra.mxu0 0
          %664 = vmatprep.subr.bf16.mxu0 0
          %665 = vmatpush2.bf16.msra.mxu0 0
          %666 = vmatprep.subr.bf16.mxu0 0
          %667 = vmatpush2.bf16.msra.mxu0 0
          %668 = vmatprep.subr.bf16.mxu0 0
          %669 = vmatpush2.bf16.msra.mxu0 0
          %670 = vmatprep.subr.bf16.mxu0 0
          %671 = vmatpush2.bf16.msra.mxu0 0
          %672 = vmatprep.subr.bf16.mxu0 0
          %673 = vmatpush2.bf16.msra.mxu0 0
          %674 = vmatprep.subr.bf16.mxu0 0
          %675 = vmatpush2.bf16.msra.mxu0 0
          %676 = vmatprep.subr.bf16.mxu0 0
          %677 = vmatpush2.bf16.msra.mxu0 0
          %678 = vmatprep.mubr.bf16.mxu0 0
          %679 = vmatmul.mubr.bf16.gmra.mxu0 %v512
          %v680 = vpop.f32.mrf.mxu0
          %v681 = vadd.f32 %v632, %v680
          %v682 = vpop.f32.mrf.mxu0
          %v683 = vpop.f32.mrf.mxu0
          %v684 = vpop.f32.mrf.mxu0
          %685 = vdwg.mxu0
          %v686 = vpack.c.bf16 %v681, %v681
          %s687 = scalar_lea.vmem [#allocation2], 4
          %688 = vst [vmem:[%s687] sm:$0xf] %v686
          %s689 = scalar_lea.vmem %s7, 16
          %v690 = vld [vmem:[%s689] sm:$0xf]
          %v691 = vld [vmem:[%s689 + $0x4] sm:$0xf]
          %v692 = vld [vmem:[%s689 + $0x8] sm:$0xf]
          %v693 = vld [vmem:[%s689 + $0xc] sm:$0xf]
          %s694 = scalar_lea.vmem %s8, 1
          %v695 = vld [vmem:[%s694] sm:$0x1]
          %v697 = vlaneseq
          %v698 = vshrl.u32 %v697, 7
          %v699 = vsub.s32 0, %v698
          %v700 = vrot.slane %v695, %v699
          %v706 = vunpack.c.l.b16 %v690
          %v707 = vunpack.c.l.b16 %v691
          %v708 = vunpack.c.l.b16 %v692
          %v709 = vunpack.c.l.b16 %v693
          %v710 = vpack.c.b16 %v707, %v706
          %v711 = vpack.c.b16 %v709, %v708
          %714 = vmatprep.subr.bf16.mxu0 0
          %715 = vmatpush1.bf16.msra.mxu0 0
          %716 = vmatprep.subr.bf16.mxu0 0
          %717 = vmatpush1.bf16.msra.mxu0 0
          %718 = vmatprep.subr.bf16.mxu0 0
          %719 = vmatpush1.bf16.msra.mxu0 0
          %720 = vmatprep.subr.bf16.mxu0 0
          %721 = vmatpush1.bf16.msra.mxu0 0
          %722 = vmatprep.subr.bf16.mxu0 0
          %723 = vmatpush1.bf16.msra.mxu0 0
          %724 = vmatprep.subr.bf16.mxu0 0
          %725 = vmatpush1.bf16.msra.mxu0 0
          %726 = vmatprep.subr.bf16.mxu0 0
          %727 = vmatpush1.bf16.msra.mxu0 %v711
          %728 = vmatprep.subr.bf16.mxu0 0
          %729 = vmatpush1.bf16.msra.mxu0 %v710
          %730 = vmatprep.subr.bf16.mxu0 0
          %731 = vmatpush2.bf16.msra.mxu0 0
          %732 = vmatprep.subr.bf16.mxu0 0
          %733 = vmatpush2.bf16.msra.mxu0 0
          %734 = vmatprep.subr.bf16.mxu0 0
          %735 = vmatpush2.bf16.msra.mxu0 0
          %736 = vmatprep.subr.bf16.mxu0 0
          %737 = vmatpush2.bf16.msra.mxu0 0
          %738 = vmatprep.subr.bf16.mxu0 0
          %739 = vmatpush2.bf16.msra.mxu0 0
          %740 = vmatprep.subr.bf16.mxu0 0
          %741 = vmatpush2.bf16.msra.mxu0 0
          %742 = vmatprep.subr.bf16.mxu0 0
          %743 = vmatpush2.bf16.msra.mxu0 0
          %744 = vmatprep.subr.bf16.mxu0 0
          %745 = vmatpush2.bf16.msra.mxu0 0
          %746 = vmatprep.mubr.bf16.mxu0 0
          %747 = vmatmul.mubr.bf16.gmra.mxu0 %v512
          %v748 = vpop.f32.mrf.mxu0
          %v749 = vadd.f32 %v700, %v748
          %v750 = vpop.f32.mrf.mxu0
          %v751 = vpop.f32.mrf.mxu0
          %v752 = vpop.f32.mrf.mxu0
          %753 = vdwg.mxu0
          %v754 = vpack.c.bf16 %v749, %v749
          %s755 = scalar_lea.vmem [#allocation3], 4
          %756 = vst [vmem:[%s755] sm:$0xf] %v754
          %s757 = scalar_lea.vmem %s5, 32
          %v758 = vld [vmem:[%s757] sm:$0xf]
          %v759 = vld [vmem:[%s757 + $0x4] sm:$0xf]
          %v760 = vld [vmem:[%s757 + $0x8] sm:$0xf]
          %v761 = vld [vmem:[%s757 + $0xc] sm:$0xf]
          %s762 = scalar_lea.vmem %s6, 2
          %v763 = vld [vmem:[%s762] sm:$0x1]
          %v765 = vlaneseq
          %v766 = vshrl.u32 %v765, 7
          %v767 = vsub.s32 0, %v766
          %v768 = vrot.slane %v763, %v767
          %v774 = vunpack.c.l.b16 %v758
          %v775 = vunpack.c.l.b16 %v759
          %v776 = vunpack.c.l.b16 %v760
          %v777 = vunpack.c.l.b16 %v761
          %v778 = vpack.c.b16 %v775, %v774
          %v779 = vpack.c.b16 %v777, %v776
          %782 = vmatprep.subr.bf16.mxu0 0
          %783 = vmatpush1.bf16.msra.mxu0 0
          %784 = vmatprep.subr.bf16.mxu0 0
          %785 = vmatpush1.bf16.msra.mxu0 0
          %786 = vmatprep.subr.bf16.mxu0 0
          %787 = vmatpush1.bf16.msra.mxu0 0
          %788 = vmatprep.subr.bf16.mxu0 0
          %789 = vmatpush1.bf16.msra.mxu0 0
          %790 = vmatprep.subr.bf16.mxu0 0
          %791 = vmatpush1.bf16.msra.mxu0 0
          %792 = vmatprep.subr.bf16.mxu0 0
          %793 = vmatpush1.bf16.msra.mxu0 0
          %794 = vmatprep.subr.bf16.mxu0 0
          %795 = vmatpush1.bf16.msra.mxu0 %v779
          %796 = vmatprep.subr.bf16.mxu0 0
          %797 = vmatpush1.bf16.msra.mxu0 %v778
          %798 = vmatprep.subr.bf16.mxu0 0
          %799 = vmatpush2.bf16.msra.mxu0 0
          %800 = vmatprep.subr.bf16.mxu0 0
          %801 = vmatpush2.bf16.msra.mxu0 0
          %802 = vmatprep.subr.bf16.mxu0 0
          %803 = vmatpush2.bf16.msra.mxu0 0
          %804 = vmatprep.subr.bf16.mxu0 0
          %805 = vmatpush2.bf16.msra.mxu0 0
          %806 = vmatprep.subr.bf16.mxu0 0
          %807 = vmatpush2.bf16.msra.mxu0 0
          %808 = vmatprep.subr.bf16.mxu0 0
          %809 = vmatpush2.bf16.msra.mxu0 0
          %810 = vmatprep.subr.bf16.mxu0 0
          %811 = vmatpush2.bf16.msra.mxu0 0
          %812 = vmatprep.subr.bf16.mxu0 0
          %813 = vmatpush2.bf16.msra.mxu0 0
          %814 = vmatprep.mubr.bf16.mxu0 0
          %815 = vmatmul.mubr.bf16.gmra.mxu0 %v512
          %v816 = vpop.f32.mrf.mxu0
          %v817 = vadd.f32 %v768, %v816
          %v818 = vpop.f32.mrf.mxu0
          %v819 = vpop.f32.mrf.mxu0
          %v820 = vpop.f32.mrf.mxu0
          %821 = vdwg.mxu0
          %v822 = vpack.c.bf16 %v817, %v817
          %s823 = scalar_lea.vmem [#allocation2], 8
          %824 = vst [vmem:[%s823] sm:$0xf] %v822
          %s825 = scalar_lea.vmem %s7, 32
          %v826 = vld [vmem:[%s825] sm:$0xf]
          %v827 = vld [vmem:[%s825 + $0x4] sm:$0xf]
          %v828 = vld [vmem:[%s825 + $0x8] sm:$0xf]
          %v829 = vld [vmem:[%s825 + $0xc] sm:$0xf]
          %s830 = scalar_lea.vmem %s8, 2
          %v831 = vld [vmem:[%s830] sm:$0x1]
          %v833 = vlaneseq
          %v834 = vshrl.u32 %v833, 7
          %v835 = vsub.s32 0, %v834
          %v836 = vrot.slane %v831, %v835
          %v842 = vunpack.c.l.b16 %v826
          %v843 = vunpack.c.l.b16 %v827
          %v844 = vunpack.c.l.b16 %v828
          %v845 = vunpack.c.l.b16 %v829
          %v846 = vpack.c.b16 %v843, %v842
          %v847 = vpack.c.b16 %v845, %v844
          %850 = vmatprep.subr.bf16.mxu0 0
          %851 = vmatpush1.bf16.msra.mxu0 0
          %852 = vmatprep.subr.bf16.mxu0 0
          %853 = vmatpush1.bf16.msra.mxu0 0
          %854 = vmatprep.subr.bf16.mxu0 0
          %855 = vmatpush1.bf16.msra.mxu0 0
          %856 = vmatprep.subr.bf16.mxu0 0
          %857 = vmatpush1.bf16.msra.mxu0 0
          %858 = vmatprep.subr.bf16.mxu0 0
          %859 = vmatpush1.bf16.msra.mxu0 0
          %860 = vmatprep.subr.bf16.mxu0 0
          %861 = vmatpush1.bf16.msra.mxu0 0
          %862 = vmatprep.subr.bf16.mxu0 0
          %863 = vmatpush1.bf16.msra.mxu0 %v847
          %864 = vmatprep.subr.bf16.mxu0 0
          %865 = vmatpush1.bf16.msra.mxu0 %v846
          %866 = vmatprep.subr.bf16.mxu0 0
          %867 = vmatpush2.bf16.msra.mxu0 0
          %868 = vmatprep.subr.bf16.mxu0 0
          %869 = vmatpush2.bf16.msra.mxu0 0
          %870 = vmatprep.subr.bf16.mxu0 0
          %871 = vmatpush2.bf16.msra.mxu0 0
          %872 = vmatprep.subr.bf16.mxu0 0
          %873 = vmatpush2.bf16.msra.mxu0 0
          %874 = vmatprep.subr.bf16.mxu0 0
          %875 = vmatpush2.bf16.msra.mxu0 0
          %876 = vmatprep.subr.bf16.mxu0 0
          %877 = vmatpush2.bf16.msra.mxu0 0
          %878 = vmatprep.subr.bf16.mxu0 0
          %879 = vmatpush2.bf16.msra.mxu0 0
          %880 = vmatprep.subr.bf16.mxu0 0
          %881 = vmatpush2.bf16.msra.mxu0 0
          %882 = vmatprep.mubr.bf16.mxu0 0
          %883 = vmatmul.mubr.bf16.gmra.mxu0 %v512
          %v884 = vpop.f32.mrf.mxu0
          %v885 = vadd.f32 %v836, %v884
          %v886 = vpop.f32.mrf.mxu0
          %v887 = vpop.f32.mrf.mxu0
          %v888 = vpop.f32.mrf.mxu0
          %889 = vdwg.mxu0
          %v890 = vpack.c.bf16 %v885, %v885
          %s891 = scalar_lea.vmem [#allocation3], 8
          %892 = vst [vmem:[%s891] sm:$0xf] %v890
          %s893 = scalar_lea.vmem %s5, 48
          %v894 = vld [vmem:[%s893] sm:$0xf]
          %v895 = vld [vmem:[%s893 + $0x4] sm:$0xf]
          %v896 = vld [vmem:[%s893 + $0x8] sm:$0xf]
          %v897 = vld [vmem:[%s893 + $0xc] sm:$0xf]
          %s898 = scalar_lea.vmem %s6, 3
          %v899 = vld [vmem:[%s898] sm:$0x1]
          %v901 = vlaneseq
          %v902 = vshrl.u32 %v901, 7
          %v903 = vsub.s32 0, %v902
          %v904 = vrot.slane %v899, %v903
          %v910 = vunpack.c.l.b16 %v894
          %v911 = vunpack.c.l.b16 %v895
          %v912 = vunpack.c.l.b16 %v896
          %v913 = vunpack.c.l.b16 %v897
          %v914 = vpack.c.b16 %v911, %v910
          %v915 = vpack.c.b16 %v913, %v912
          %918 = vmatprep.subr.bf16.mxu0 0
          %919 = vmatpush1.bf16.msra.mxu0 0
          %920 = vmatprep.subr.bf16.mxu0 0
          %921 = vmatpush1.bf16.msra.mxu0 0
          %922 = vmatprep.subr.bf16.mxu0 0
          %923 = vmatpush1.bf16.msra.mxu0 0
          %924 = vmatprep.subr.bf16.mxu0 0
          %925 = vmatpush1.bf16.msra.mxu0 0
          %926 = vmatprep.subr.bf16.mxu0 0
          %927 = vmatpush1.bf16.msra.mxu0 0
          %928 = vmatprep.subr.bf16.mxu0 0
          %929 = vmatpush1.bf16.msra.mxu0 0
          %930 = vmatprep.subr.bf16.mxu0 0
          %931 = vmatpush1.bf16.msra.mxu0 %v915
          %932 = vmatprep.subr.bf16.mxu0 0
          %933 = vmatpush1.bf16.msra.mxu0 %v914
          %934 = vmatprep.subr.bf16.mxu0 0
          %935 = vmatpush2.bf16.msra.mxu0 0
          %936 = vmatprep.subr.bf16.mxu0 0
          %937 = vmatpush2.bf16.msra.mxu0 0
          %938 = vmatprep.subr.bf16.mxu0 0
          %939 = vmatpush2.bf16.msra.mxu0 0
          %940 = vmatprep.subr.bf16.mxu0 0
          %941 = vmatpush2.bf16.msra.mxu0 0
          %942 = vmatprep.subr.bf16.mxu0 0
          %943 = vmatpush2.bf16.msra.mxu0 0
          %944 = vmatprep.subr.bf16.mxu0 0
          %945 = vmatpush2.bf16.msra.mxu0 0
          %946 = vmatprep.subr.bf16.mxu0 0
          %947 = vmatpush2.bf16.msra.mxu0 0
          %948 = vmatprep.subr.bf16.mxu0 0
          %949 = vmatpush2.bf16.msra.mxu0 0
          %950 = vmatprep.mubr.bf16.mxu0 0
          %951 = vmatmul.mubr.bf16.gmra.mxu0 %v512
          %v952 = vpop.f32.mrf.mxu0
          %v953 = vadd.f32 %v904, %v952
          %v954 = vpop.f32.mrf.mxu0
          %v955 = vpop.f32.mrf.mxu0
          %v956 = vpop.f32.mrf.mxu0
          %957 = vdwg.mxu0
          %v958 = vpack.c.bf16 %v953, %v953
          %s959 = scalar_lea.vmem [#allocation2], 12
          %960 = vst [vmem:[%s959] sm:$0xf] %v958
          %s961 = scalar_lea.vmem %s7, 48
          %v962 = vld [vmem:[%s961] sm:$0xf]
          %v963 = vld [vmem:[%s961 + $0x4] sm:$0xf]
          %v964 = vld [vmem:[%s961 + $0x8] sm:$0xf]
          %v965 = vld [vmem:[%s961 + $0xc] sm:$0xf]
          %s966 = scalar_lea.vmem %s8, 3
          %v967 = vld [vmem:[%s966] sm:$0x1]
          %v969 = vlaneseq
          %v970 = vshrl.u32 %v969, 7
          %v971 = vsub.s32 0, %v970
          %v972 = vrot.slane %v967, %v971
          %v978 = vunpack.c.l.b16 %v962
          %v979 = vunpack.c.l.b16 %v963
          %v980 = vunpack.c.l.b16 %v964
          %v981 = vunpack.c.l.b16 %v965
          %v982 = vpack.c.b16 %v979, %v978
          %v983 = vpack.c.b16 %v981, %v980
          %986 = vmatprep.subr.bf16.mxu0 0
          %987 = vmatpush1.bf16.msra.mxu0 0
          %988 = vmatprep.subr.bf16.mxu0 0
          %989 = vmatpush1.bf16.msra.mxu0 0
          %990 = vmatprep.subr.bf16.mxu0 0
          %991 = vmatpush1.bf16.msra.mxu0 0
          %992 = vmatprep.subr.bf16.mxu0 0
          %993 = vmatpush1.bf16.msra.mxu0 0
          %994 = vmatprep.subr.bf16.mxu0 0
          %995 = vmatpush1.bf16.msra.mxu0 0
          %996 = vmatprep.subr.bf16.mxu0 0
          %997 = vmatpush1.bf16.msra.mxu0 0
          %998 = vmatprep.subr.bf16.mxu0 0
          %999 = vmatpush1.bf16.msra.mxu0 %v983
          %1000 = vmatprep.subr.bf16.mxu0 0
          %1001 = vmatpush1.bf16.msra.mxu0 %v982
          %1002 = vmatprep.subr.bf16.mxu0 0
          %1003 = vmatpush2.bf16.msra.mxu0 0
          %1004 = vmatprep.subr.bf16.mxu0 0
          %1005 = vmatpush2.bf16.msra.mxu0 0
          %1006 = vmatprep.subr.bf16.mxu0 0
          %1007 = vmatpush2.bf16.msra.mxu0 0
          %1008 = vmatprep.subr.bf16.mxu0 0
          %1009 = vmatpush2.bf16.msra.mxu0 0
          %1010 = vmatprep.subr.bf16.mxu0 0
          %1011 = vmatpush2.bf16.msra.mxu0 0
          %1012 = vmatprep.subr.bf16.mxu0 0
          %1013 = vmatpush2.bf16.msra.mxu0 0
          %1014 = vmatprep.subr.bf16.mxu0 0
          %1015 = vmatpush2.bf16.msra.mxu0 0
          %1016 = vmatprep.subr.bf16.mxu0 0
          %1017 = vmatpush2.bf16.msra.mxu0 0
          %1018 = vmatprep.mubr.bf16.mxu0 0
          %1019 = vmatmul.mubr.bf16.gmra.mxu0 %v512
          %v1020 = vpop.f32.mrf.mxu0
          %v1021 = vadd.f32 %v972, %v1020
          %v1022 = vpop.f32.mrf.mxu0
          %v1023 = vpop.f32.mrf.mxu0
          %v1024 = vpop.f32.mrf.mxu0
          %1025 = vdwg.mxu0
          %v1026 = vpack.c.bf16 %v1021, %v1021
          %s1027 = scalar_lea.vmem [#allocation3], 12
          %1028 = vst [vmem:[%s1027] sm:$0xf] %v1026
        $region68: #{tpu_custom_call.1} parent=63 // pred_fallthru
          _
        %v1029 = vld [vmem:[%s476] sm:$0xf]
        %v1030 = vld [vmem:[%s480] sm:$0xff]
        %v1031 = vld [vmem:[%s10] sm:$0x1]
        %v1032 = vld [vmem:[%s3] sm:$0xf]
        %v1033 = vld [vmem:[%s3 + $0x4] sm:$0xf]
        %v1034 = vld [vmem:[%s3 + $0x8] sm:$0xf]
        %v1035 = vld [vmem:[%s3 + $0xc] sm:$0xf]
        %v1036 = vld [vmem:[%s4] sm:$0x1]
        %v1038 = vlaneseq
        %v1039 = vshrl.u32 %v1038, 7
        %v1040 = vsub.s32 0, %v1039
        %v1041 = vrot.slane %v1036, %v1040
        %v1047 = vunpack.c.l.b16 %v1032
        %v1048 = vunpack.c.l.b16 %v1033
        %v1049 = vunpack.c.l.b16 %v1034
        %v1050 = vunpack.c.l.b16 %v1035
        %v1051 = vpack.c.b16 %v1048, %v1047
        %v1052 = vpack.c.b16 %v1050, %v1049
        %vm1055 = vcmask 261120
        %v1057 = vsel %vm1055, %v1029, 0
        %1059 = vmatprep.subr.bf16.mxu0 0
        %1060 = vmatpush1.bf16.msra.mxu0 0
        %1061 = vmatprep.subr.bf16.mxu0 0
        %1062 = vmatpush1.bf16.msra.mxu0 0
        %1063 = vmatprep.subr.bf16.mxu0 0
        %1064 = vmatpush1.bf16.msra.mxu0 0
        %1065 = vmatprep.subr.bf16.mxu0 0
        %1066 = vmatpush1.bf16.msra.mxu0 0
        %1067 = vmatprep.subr.bf16.mxu0 0
        %1068 = vmatpush1.bf16.msra.mxu0 0
        %1069 = vmatprep.subr.bf16.mxu0 0
        %1070 = vmatpush1.bf16.msra.mxu0 0
        %1071 = vmatprep.subr.bf16.mxu0 0
        %1072 = vmatpush1.bf16.msra.mxu0 %v1052
        %1073 = vmatprep.subr.bf16.mxu0 0
        %1074 = vmatpush1.bf16.msra.mxu0 %v1051
        %1075 = vmatprep.subr.bf16.mxu0 0
        %1076 = vmatpush2.bf16.msra.mxu0 0
        %1077 = vmatprep.subr.bf16.mxu0 0
        %1078 = vmatpush2.bf16.msra.mxu0 0
        %1079 = vmatprep.subr.bf16.mxu0 0
        %1080 = vmatpush2.bf16.msra.mxu0 0
        %1081 = vmatprep.subr.bf16.mxu0 0
        %1082 = vmatpush2.bf16.msra.mxu0 0
        %1083 = vmatprep.subr.bf16.mxu0 0
        %1084 = vmatpush2.bf16.msra.mxu0 0
        %1085 = vmatprep.subr.bf16.mxu0 0
        %1086 = vmatpush2.bf16.msra.mxu0 0
        %1087 = vmatprep.subr.bf16.mxu0 0
        %1088 = vmatpush2.bf16.msra.mxu0 0
        %1089 = vmatprep.subr.bf16.mxu0 0
        %1090 = vmatpush2.bf16.msra.mxu0 0
        %1091 = vmatprep.mubr.bf16.mxu0 0
        %1092 = vmatmul.mubr.bf16.gmra.mxu0 %v1057
        %v1093 = vpop.f32.mrf.mxu0
        %v1094 = vadd.f32 %v1041, %v1093
        %v1095 = vpop.f32.mrf.mxu0
        %v1096 = vpop.f32.mrf.mxu0
        %v1097 = vpop.f32.mrf.mxu0
        %1098 = vdwg.mxu0
        %v1099 = vpack.c.bf16 %v1094, %v1094
        %v1100 = vld [vmem:[#allocation2] sm:$0xf]
        %1101 = vmatprep.subr.bf16.mxu0 0
        %1102 = vmatpush1.bf16.xpose.msra.mxu0 0
        %1103 = vmatprep.subr.bf16.mxu0 0
        %1104 = vmatpush1.bf16.xpose.msra.mxu0 0
        %1105 = vmatprep.subr.bf16.mxu0 0
        %1106 = vmatpush1.bf16.xpose.msra.mxu0 0
        %1107 = vmatprep.subr.bf16.mxu0 0
        %1108 = vmatpush1.bf16.xpose.msra.mxu0 0
        %1109 = vmatprep.subr.bf16.mxu0 0
        %1110 = vmatpush1.bf16.xpose.msra.mxu0 0
        %1111 = vmatprep.subr.bf16.mxu0 0
        %1112 = vmatpush1.bf16.xpose.msra.mxu0 0
        %1113 = vmatprep.subr.bf16.mxu0 0
        %1114 = vmatpush1.bf16.xpose.msra.mxu0 0
        %1115 = vmatprep.subr.bf16.mxu0 0
        %1116 = vmatpush1.bf16.xpose.msra.mxu0 %v1100
        %1117 = vmatprep.subr.bf16.mxu0 0
        %1118 = vmatpush2.bf16.xpose.msra.mxu0 0
        %1119 = vmatprep.subr.bf16.mxu0 0
        %1120 = vmatpush2.bf16.xpose.msra.mxu0 0
        %1121 = vmatprep.subr.bf16.mxu0 0
        %1122 = vmatpush2.bf16.xpose.msra.mxu0 0
        %1123 = vmatprep.subr.bf16.mxu0 0
        %1124 = vmatpush2.bf16.xpose.msra.mxu0 0
        %1125 = vmatprep.subr.bf16.mxu0 0
        %1126 = vmatpush2.bf16.xpose.msra.mxu0 0
        %1127 = vmatprep.subr.bf16.mxu0 0
        %1128 = vmatpush2.bf16.xpose.msra.mxu0 0
        %1129 = vmatprep.subr.bf16.mxu0 0
        %1130 = vmatpush2.bf16.xpose.msra.mxu0 0
        %1131 = vmatprep.subr.bf16.mxu0 0
        %1132 = vmatpush2.bf16.xpose.msra.mxu0 0
        %1133 = vmatprep.mubr.bf16.mxu0 0
        %1134 = vmatmul.mubr.bf16.gmra.mxu0 %v1099
        %v1135 = vpop.f32.mrf.mxu0
        %v1136 = vadd.f32 %v1030, %v1135
        %v1137 = vpop.f32.mrf.mxu0
        %v1138 = vpop.f32.mrf.mxu0
        %v1139 = vpop.f32.mrf.mxu0
        %1140 = vdwg.mxu0
        %vm1141 = vcmask 64512
        %v1142 = vsel %vm1141, %v1136, -inf
        %1143 = vmax.xlane.f32.xlu0 %v1142
        %v1144 = vpop.xlane.xlu0 %1143
        %v1145 = vsub.f32 %v1136, %v1144
        %v1146 = vmul.f32 %v1145, 1.442695
        %v1147 = vpow.pop %v1146
        %v1148 = vsel %vm1141, %v1147, 0.0
        %1149 = vadd.xlane.f32.xlu0 %v1148
        %v1150 = vpop.xlane.xlu0 %1149
        %v1151 = vrcp.pop %v1150
        %v1152 = vmul.f32 %v1147, %v1151
        %1153 = vst.msk [vmem:[%s458] sm:$0xff] %vm1141, %v1152
        %v1154 = vpack.c.bf16 %v1152, %v1152
        %v1155 = vld [vmem:[#allocation3] sm:$0xf]
        %v1157 = vsel %vm1141, %v1154, 0
        %vm1159 = vcmask 1043456
        %v1161 = vsel %vm1159, %v1155, 0
        %1163 = vmatprep.subr.bf16.mxu0 0
        %1164 = vmatpush1.bf16.msra.mxu0 0
        %1165 = vmatprep.subr.bf16.mxu0 0
        %1166 = vmatpush1.bf16.msra.mxu0 0
        %1167 = vmatprep.subr.bf16.mxu0 0
        %1168 = vmatpush1.bf16.msra.mxu0 0
        %1169 = vmatprep.subr.bf16.mxu0 0
        %1170 = vmatpush1.bf16.msra.mxu0 0
        %1171 = vmatprep.subr.bf16.mxu0 0
        %1172 = vmatpush1.bf16.msra.mxu0 0
        %1173 = vmatprep.subr.bf16.mxu0 0
        %1174 = vmatpush1.bf16.msra.mxu0 0
        %1175 = vmatprep.subr.bf16.mxu0 0
        %1176 = vmatpush1.bf16.msra.mxu0 0
        %1177 = vmatprep.subr.bf16.mxu0 0
        %1178 = vmatpush1.bf16.msra.mxu0 %v1161
        %1179 = vmatprep.subr.bf16.mxu0 0
        %1180 = vmatpush2.bf16.msra.mxu0 0
        %1181 = vmatprep.subr.bf16.mxu0 0
        %1182 = vmatpush2.bf16.msra.mxu0 0
        %1183 = vmatprep.subr.bf16.mxu0 0
        %1184 = vmatpush2.bf16.msra.mxu0 0
        %1185 = vmatprep.subr.bf16.mxu0 0
        %1186 = vmatpush2.bf16.msra.mxu0 0
        %1187 = vmatprep.subr.bf16.mxu0 0
        %1188 = vmatpush2.bf16.msra.mxu0 0
        %1189 = vmatprep.subr.bf16.mxu0 0
        %1190 = vmatpush2.bf16.msra.mxu0 0
        %1191 = vmatprep.subr.bf16.mxu0 0
        %1192 = vmatpush2.bf16.msra.mxu0 0
        %1193 = vmatprep.subr.bf16.mxu0 0
        %1194 = vmatpush2.bf16.msra.mxu0 0
        %1195 = vmatprep.mubr.bf16.mxu0 0
        %1196 = vmatmul.mubr.bf16.gmra.mxu0 %v1157
        %v1197 = vpop.f32.mrf.mxu0
        %v1198 = vadd.f32 0.0, %v1197
        %v1199 = vpop.f32.mrf.mxu0
        %v1200 = vpop.f32.mrf.mxu0
        %v1201 = vpop.f32.mrf.mxu0
        %1202 = vdwg.mxu0
        %v1203 = vpack.c.bf16 %v1198, %v1198
        %v1204 = vld [vmem:[%s9] sm:$0xf]
        %v1205 = vld [vmem:[%s9 + $0x4] sm:$0xf]
        %v1206 = vld [vmem:[%s9 + $0x8] sm:$0xf]
        %v1207 = vld [vmem:[%s9 + $0xc] sm:$0xf]
        %v1208 = vld [vmem:[%s9 + $0x10] sm:$0xf]
        %v1209 = vld [vmem:[%s9 + $0x14] sm:$0xf]
        %v1210 = vld [vmem:[%s9 + $0x18] sm:$0xf]
        %v1211 = vld [vmem:[%s9 + $0x1c] sm:$0xf]
        %v1212 = vld [vmem:[%s9 + $0x20] sm:$0xf]
        %v1213 = vld [vmem:[%s9 + $0x24] sm:$0xf]
        %v1214 = vld [vmem:[%s9 + $0x28] sm:$0xf]
        %v1215 = vld [vmem:[%s9 + $0x2c] sm:$0xf]
        %v1216 = vld [vmem:[%s9 + $0x30] sm:$0xf]
        %v1217 = vld [vmem:[%s9 + $0x34] sm:$0xf]
        %v1218 = vld [vmem:[%s9 + $0x38] sm:$0xf]
        %v1219 = vld [vmem:[%s9 + $0x3c] sm:$0xf]
        %s1220 = scalar_lea.vmem %s3, 16
        %v1221 = vld [vmem:[%s1220] sm:$0xf]
        %v1222 = vld [vmem:[%s1220 + $0x4] sm:$0xf]
        %v1223 = vld [vmem:[%s1220 + $0x8] sm:$0xf]
        %v1224 = vld [vmem:[%s1220 + $0xc] sm:$0xf]
        %s1225 = scalar_lea.vmem %s4, 1
        %v1226 = vld [vmem:[%s1225] sm:$0x1]
        %v1228 = vlaneseq
        %v1229 = vshrl.u32 %v1228, 7
        %v1230 = vsub.s32 0, %v1229
        %v1231 = vrot.slane %v1226, %v1230
        %v1237 = vunpack.c.l.b16 %v1221
        %v1238 = vunpack.c.l.b16 %v1222
        %v1239 = vunpack.c.l.b16 %v1223
        %v1240 = vunpack.c.l.b16 %v1224
        %v1241 = vpack.c.b16 %v1238, %v1237
        %v1242 = vpack.c.b16 %v1240, %v1239
        %1245 = vmatprep.subr.bf16.mxu0 0
        %1246 = vmatpush1.bf16.msra.mxu0 0
        %1247 = vmatprep.subr.bf16.mxu0 0
        %1248 = vmatpush1.bf16.msra.mxu0 0
        %1249 = vmatprep.subr.bf16.mxu0 0
        %1250 = vmatpush1.bf16.msra.mxu0 0
        %1251 = vmatprep.subr.bf16.mxu0 0
        %1252 = vmatpush1.bf16.msra.mxu0 0
        %1253 = vmatprep.subr.bf16.mxu0 0
        %1254 = vmatpush1.bf16.msra.mxu0 0
        %1255 = vmatprep.subr.bf16.mxu0 0
        %1256 = vmatpush1.bf16.msra.mxu0 0
        %1257 = vmatprep.subr.bf16.mxu0 0
        %1258 = vmatpush1.bf16.msra.mxu0 %v1242
        %1259 = vmatprep.subr.bf16.mxu0 0
        %1260 = vmatpush1.bf16.msra.mxu0 %v1241
        %1261 = vmatprep.subr.bf16.mxu0 0
        %1262 = vmatpush2.bf16.msra.mxu0 0
        %1263 = vmatprep.subr.bf16.mxu0 0
        %1264 = vmatpush2.bf16.msra.mxu0 0
        %1265 = vmatprep.subr.bf16.mxu0 0
        %1266 = vmatpush2.bf16.msra.mxu0 0
        %1267 = vmatprep.subr.bf16.mxu0 0
        %1268 = vmatpush2.bf16.msra.mxu0 0
        %1269 = vmatprep.subr.bf16.mxu0 0
        %1270 = vmatpush2.bf16.msra.mxu0 0
        %1271 = vmatprep.subr.bf16.mxu0 0
        %1272 = vmatpush2.bf16.msra.mxu0 0
        %1273 = vmatprep.subr.bf16.mxu0 0
        %1274 = vmatpush2.bf16.msra.mxu0 0
        %1275 = vmatprep.subr.bf16.mxu0 0
        %1276 = vmatpush2.bf16.msra.mxu0 0
        %1277 = vmatprep.mubr.bf16.mxu0 0
        %1278 = vmatmul.mubr.bf16.gmra.mxu0 %v1057
        %v1279 = vpop.f32.mrf.mxu0
        %v1280 = vadd.f32 %v1231, %v1279
        %v1281 = vpop.f32.mrf.mxu0
        %v1282 = vpop.f32.mrf.mxu0
        %v1283 = vpop.f32.mrf.mxu0
        %1284 = vdwg.mxu0
        %v1285 = vpack.c.bf16 %v1280, %v1280
        %s1286 = scalar_lea.vmem [#allocation2], 4
        %v1287 = vld [vmem:[%s1286] sm:$0xf]
        %1288 = vmatprep.subr.bf16.mxu0 0
        %1289 = vmatpush1.bf16.xpose.msra.mxu0 0
        %1290 = vmatprep.subr.bf16.mxu0 0
        %1291 = vmatpush1.bf16.xpose.msra.mxu0 0
        %1292 = vmatprep.subr.bf16.mxu0 0
        %1293 = vmatpush1.bf16.xpose.msra.mxu0 0
        %1294 = vmatprep.subr.bf16.mxu0 0
        %1295 = vmatpush1.bf16.xpose.msra.mxu0 0
        %1296 = vmatprep.subr.bf16.mxu0 0
        %1297 = vmatpush1.bf16.xpose.msra.mxu0 0
        %1298 = vmatprep.subr.bf16.mxu0 0
        %1299 = vmatpush1.bf16.xpose.msra.mxu0 0
        %1300 = vmatprep.subr.bf16.mxu0 0
        %1301 = vmatpush1.bf16.xpose.msra.mxu0 0
        %1302 = vmatprep.subr.bf16.mxu0 0
        %1303 = vmatpush1.bf16.xpose.msra.mxu0 %v1287
        %1304 = vmatprep.subr.bf16.mxu0 0
        %1305 = vmatpush2.bf16.xpose.msra.mxu0 0
        %1306 = vmatprep.subr.bf16.mxu0 0
        %1307 = vmatpush2.bf16.xpose.msra.mxu0 0
        %1308 = vmatprep.subr.bf16.mxu0 0
        %1309 = vmatpush2.bf16.xpose.msra.mxu0 0
        %1310 = vmatprep.subr.bf16.mxu0 0
        %1311 = vmatpush2.bf16.xpose.msra.mxu0 0
        %1312 = vmatprep.subr.bf16.mxu0 0
        %1313 = vmatpush2.bf16.xpose.msra.mxu0 0
        %1314 = vmatprep.subr.bf16.mxu0 0
        %1315 = vmatpush2.bf16.xpose.msra.mxu0 0
        %1316 = vmatprep.subr.bf16.mxu0 0
        %1317 = vmatpush2.bf16.xpose.msra.mxu0 0
        %1318 = vmatprep.subr.bf16.mxu0 0
        %1319 = vmatpush2.bf16.xpose.msra.mxu0 0
        %1320 = vmatprep.mubr.bf16.mxu0 0
        %1321 = vmatmul.mubr.bf16.gmra.mxu0 %v1285
        %v1322 = vpop.f32.mrf.mxu0
        %v1323 = vadd.f32 %v1030, %v1322
        %v1324 = vpop.f32.mrf.mxu0
        %v1325 = vpop.f32.mrf.mxu0
        %v1326 = vpop.f32.mrf.mxu0
        %1327 = vdwg.mxu0
        %v1328 = vsel %vm1141, %v1323, -inf
        %1329 = vmax.xlane.f32.xlu0 %v1328
        %v1330 = vpop.xlane.xlu0 %1329
        %v1331 = vsub.f32 %v1323, %v1330
        %v1332 = vmul.f32 %v1331, 1.442695
        %v1333 = vpow.pop %v1332
        %v1334 = vsel %vm1141, %v1333, 0.0
        %1335 = vadd.xlane.f32.xlu0 %v1334
        %v1336 = vpop.xlane.xlu0 %1335
        %v1337 = vrcp.pop %v1336
        %v1338 = vmul.f32 %v1333, %v1337
        %s1339 = scalar_lea.vmem %s458, 8 [#allocation4]
        %1340 = vst.msk [vmem:[%s1339] sm:$0xff] %vm1141, %v1338
        %v1341 = vpack.c.bf16 %v1338, %v1338
        %s1342 = scalar_lea.vmem [#allocation3], 4
        %v1343 = vld [vmem:[%s1342] sm:$0xf]
        %v1345 = vsel %vm1141, %v1341, 0
        %v1348 = vsel %vm1159, %v1343, 0
        %1350 = vmatprep.subr.bf16.mxu0 0
        %1351 = vmatpush1.bf16.msra.mxu0 0
        %1352 = vmatprep.subr.bf16.mxu0 0
        %1353 = vmatpush1.bf16.msra.mxu0 0
        %1354 = vmatprep.subr.bf16.mxu0 0
        %1355 = vmatpush1.bf16.msra.mxu0 0
        %1356 = vmatprep.subr.bf16.mxu0 0
        %1357 = vmatpush1.bf16.msra.mxu0 0
        %1358 = vmatprep.subr.bf16.mxu0 0
        %1359 = vmatpush1.bf16.msra.mxu0 0
        %1360 = vmatprep.subr.bf16.mxu0 0
        %1361 = vmatpush1.bf16.msra.mxu0 0
        %1362 = vmatprep.subr.bf16.mxu0 0
        %1363 = vmatpush1.bf16.msra.mxu0 0
        %1364 = vmatprep.subr.bf16.mxu0 0
        %1365 = vmatpush1.bf16.msra.mxu0 %v1348
        %1366 = vmatprep.subr.bf16.mxu0 0
        %1367 = vmatpush2.bf16.msra.mxu0 0
        %1368 = vmatprep.subr.bf16.mxu0 0
        %1369 = vmatpush2.bf16.msra.mxu0 0
        %1370 = vmatprep.subr.bf16.mxu0 0
        %1371 = vmatpush2.bf16.msra.mxu0 0
        %1372 = vmatprep.subr.bf16.mxu0 0
        %1373 = vmatpush2.bf16.msra.mxu0 0
        %1374 = vmatprep.subr.bf16.mxu0 0
        %1375 = vmatpush2.bf16.msra.mxu0 0
        %1376 = vmatprep.subr.bf16.mxu0 0
        %1377 = vmatpush2.bf16.msra.mxu0 0
        %1378 = vmatprep.subr.bf16.mxu0 0
        %1379 = vmatpush2.bf16.msra.mxu0 0
        %1380 = vmatprep.subr.bf16.mxu0 0
        %1381 = vmatpush2.bf16.msra.mxu0 0
        %1382 = vmatprep.mubr.bf16.mxu0 0
        %1383 = vmatmul.mubr.bf16.gmra.mxu0 %v1345
        %v1384 = vpop.f32.mrf.mxu0
        %v1385 = vadd.f32 0.0, %v1384
        %v1386 = vpop.f32.mrf.mxu0
        %v1387 = vpop.f32.mrf.mxu0
        %v1388 = vpop.f32.mrf.mxu0
        %1389 = vdwg.mxu0
        %v1390 = vpack.c.bf16 %v1385, %v1385
        %s1391 = scalar_lea.vmem %s9, 64
        %v1392 = vld [vmem:[%s1391] sm:$0xf]
        %v1393 = vld [vmem:[%s1391 + $0x4] sm:$0xf]
        %v1394 = vld [vmem:[%s1391 + $0x8] sm:$0xf]
        %v1395 = vld [vmem:[%s1391 + $0xc] sm:$0xf]
        %v1396 = vld [vmem:[%s1391 + $0x10] sm:$0xf]
        %v1397 = vld [vmem:[%s1391 + $0x14] sm:$0xf]
        %v1398 = vld [vmem:[%s1391 + $0x18] sm:$0xf]
        %v1399 = vld [vmem:[%s1391 + $0x1c] sm:$0xf]
        %v1400 = vld [vmem:[%s1391 + $0x20] sm:$0xf]
        %v1401 = vld [vmem:[%s1391 + $0x24] sm:$0xf]
        %v1402 = vld [vmem:[%s1391 + $0x28] sm:$0xf]
        %v1403 = vld [vmem:[%s1391 + $0x2c] sm:$0xf]
        %v1404 = vld [vmem:[%s1391 + $0x30] sm:$0xf]
        %v1405 = vld [vmem:[%s1391 + $0x34] sm:$0xf]
        %v1406 = vld [vmem:[%s1391 + $0x38] sm:$0xf]
        %v1407 = vld [vmem:[%s1391 + $0x3c] sm:$0xf]
        %v1424 = vunpack.c.l.b16 %v1392
        %v1425 = vunpack.c.l.b16 %v1393
        %v1426 = vunpack.c.l.b16 %v1394
        %v1427 = vunpack.c.l.b16 %v1395
        %v1428 = vunpack.c.l.b16 %v1396
        %v1429 = vunpack.c.l.b16 %v1397
        %v1430 = vunpack.c.l.b16 %v1398
        %v1431 = vunpack.c.l.b16 %v1399
        %v1432 = vunpack.c.l.b16 %v1400
        %v1433 = vunpack.c.l.b16 %v1401
        %v1434 = vunpack.c.l.b16 %v1402
        %v1435 = vunpack.c.l.b16 %v1403
        %v1436 = vunpack.c.l.b16 %v1404
        %v1437 = vunpack.c.l.b16 %v1405
        %v1438 = vunpack.c.l.b16 %v1406
        %v1439 = vunpack.c.l.b16 %v1407
        %v1440 = vpack.c.b16 %v1425, %v1424
        %v1441 = vpack.c.b16 %v1427, %v1426
        %v1442 = vpack.c.b16 %v1429, %v1428
        %v1443 = vpack.c.b16 %v1431, %v1430
        %v1444 = vpack.c.b16 %v1433, %v1432
        %v1445 = vpack.c.b16 %v1435, %v1434
        %v1446 = vpack.c.b16 %v1437, %v1436
        %v1447 = vpack.c.b16 %v1439, %v1438
        %1456 = vmatprep.subr.bf16.mxu0 0
        %1457 = vmatpush1.bf16.msra.mxu0 %v1447
        %1458 = vmatprep.subr.bf16.mxu0 0
        %1459 = vmatpush1.bf16.msra.mxu0 %v1446
        %1460 = vmatprep.subr.bf16.mxu0 0
        %1461 = vmatpush1.bf16.msra.mxu0 %v1445
        %1462 = vmatprep.subr.bf16.mxu0 0
        %1463 = vmatpush1.bf16.msra.mxu0 %v1444
        %1464 = vmatprep.subr.bf16.mxu0 0
        %1465 = vmatpush1.bf16.msra.mxu0 %v1443
        %1466 = vmatprep.subr.bf16.mxu0 0
        %1467 = vmatpush1.bf16.msra.mxu0 %v1442
        %1468 = vmatprep.subr.bf16.mxu0 0
        %1469 = vmatpush1.bf16.msra.mxu0 %v1441
        %1470 = vmatprep.subr.bf16.mxu0 0
        %1471 = vmatpush1.bf16.msra.mxu0 %v1440
        %1472 = vmatprep.subr.bf16.mxu0 0
        %1473 = vmatpush2.bf16.msra.mxu0 0
        %1474 = vmatprep.subr.bf16.mxu0 0
        %1475 = vmatpush2.bf16.msra.mxu0 0
        %1476 = vmatprep.subr.bf16.mxu0 0
        %1477 = vmatpush2.bf16.msra.mxu0 0
        %1478 = vmatprep.subr.bf16.mxu0 0
        %1479 = vmatpush2.bf16.msra.mxu0 0
        %1480 = vmatprep.subr.bf16.mxu0 0
        %1481 = vmatpush2.bf16.msra.mxu0 0
        %1482 = vmatprep.subr.bf16.mxu0 0
        %1483 = vmatpush2.bf16.msra.mxu0 0
        %1484 = vmatprep.subr.bf16.mxu0 0
        %1485 = vmatpush2.bf16.msra.mxu0 0
        %1486 = vmatprep.subr.bf16.mxu0 0
        %1487 = vmatpush2.bf16.msra.mxu0 0
        %1488 = vmatprep.mubr.bf16.mxu0 0
        %1489 = vmatmul.mubr.bf16.gmra.mxu0 %v1390
        %v1490 = vpop.f32.mrf.mxu0
        %v1491 = vadd.f32 0.0, %v1490
        %v1492 = vpop.f32.mrf.mxu0
        %v1493 = vpop.f32.mrf.mxu0
        %v1494 = vpop.f32.mrf.mxu0
        %1495 = vdwg.mxu0
        %v1512 = vunpack.c.l.b16 %v1204
        %v1513 = vunpack.c.l.b16 %v1205
        %v1514 = vunpack.c.l.b16 %v1206
        %v1515 = vunpack.c.l.b16 %v1207
        %v1516 = vunpack.c.l.b16 %v1208
        %v1517 = vunpack.c.l.b16 %v1209
        %v1518 = vunpack.c.l.b16 %v1210
        %v1519 = vunpack.c.l.b16 %v1211
        %v1520 = vunpack.c.l.b16 %v1212
        %v1521 = vunpack.c.l.b16 %v1213
        %v1522 = vunpack.c.l.b16 %v1214
        %v1523 = vunpack.c.l.b16 %v1215
        %v1524 = vunpack.c.l.b16 %v1216
        %v1525 = vunpack.c.l.b16 %v1217
        %v1526 = vunpack.c.l.b16 %v1218
        %v1527 = vunpack.c.l.b16 %v1219
        %v1528 = vpack.c.b16 %v1513, %v1512
        %v1529 = vpack.c.b16 %v1515, %v1514
        %v1530 = vpack.c.b16 %v1517, %v1516
        %v1531 = vpack.c.b16 %v1519, %v1518
        %v1532 = vpack.c.b16 %v1521, %v1520
        %v1533 = vpack.c.b16 %v1523, %v1522
        %v1534 = vpack.c.b16 %v1525, %v1524
        %v1535 = vpack.c.b16 %v1527, %v1526
        %1544 = vmatprep.subr.bf16.mxu0 0
        %1545 = vmatpush1.bf16.msra.mxu0 %v1535
        %1546 = vmatprep.subr.bf16.mxu0 0
        %1547 = vmatpush1.bf16.msra.mxu0 %v1534
        %1548 = vmatprep.subr.bf16.mxu0 0
        %1549 = vmatpush1.bf16.msra.mxu0 %v1533
        %1550 = vmatprep.subr.bf16.mxu0 0
        %1551 = vmatpush1.bf16.msra.mxu0 %v1532
        %1552 = vmatprep.subr.bf16.mxu0 0
        %1553 = vmatpush1.bf16.msra.mxu0 %v1531
        %1554 = vmatprep.subr.bf16.mxu0 0
        %1555 = vmatpush1.bf16.msra.mxu0 %v1530
        %1556 = vmatprep.subr.bf16.mxu0 0
        %1557 = vmatpush1.bf16.msra.mxu0 %v1529
        %1558 = vmatprep.subr.bf16.mxu0 0
        %1559 = vmatpush1.bf16.msra.mxu0 %v1528
        %1560 = vmatprep.subr.bf16.mxu0 0
        %1561 = vmatpush2.bf16.msra.mxu0 0
        %1562 = vmatprep.subr.bf16.mxu0 0
        %1563 = vmatpush2.bf16.msra.mxu0 0
        %1564 = vmatprep.subr.bf16.mxu0 0
        %1565 = vmatpush2.bf16.msra.mxu0 0
        %1566 = vmatprep.subr.bf16.mxu0 0
        %1567 = vmatpush2.bf16.msra.mxu0 0
        %1568 = vmatprep.subr.bf16.mxu0 0
        %1569 = vmatpush2.bf16.msra.mxu0 0
        %1570 = vmatprep.subr.bf16.mxu0 0
        %1571 = vmatpush2.bf16.msra.mxu0 0
        %1572 = vmatprep.subr.bf16.mxu0 0
        %1573 = vmatpush2.bf16.msra.mxu0 0
        %1574 = vmatprep.subr.bf16.mxu0 0
        %1575 = vmatpush2.bf16.msra.mxu0 0
        %1576 = vmatprep.mubr.bf16.mxu0 0
        %1577 = vmatmul.mubr.bf16.gmra.mxu0 %v1203
        %v1578 = vpop.f32.mrf.mxu0
        %v1579 = vadd.f32 %v1491, %v1578
        %v1580 = vpop.f32.mrf.mxu0
        %v1581 = vpop.f32.mrf.mxu0
        %v1582 = vpop.f32.mrf.mxu0
        %1583 = vdwg.mxu0
        %s1584 = scalar_lea.vmem %s3, 32
        %v1585 = vld [vmem:[%s1584] sm:$0xf]
        %v1586 = vld [vmem:[%s1584 + $0x4] sm:$0xf]
        %v1587 = vld [vmem:[%s1584 + $0x8] sm:$0xf]
        %v1588 = vld [vmem:[%s1584 + $0xc] sm:$0xf]
        %s1589 = scalar_lea.vmem %s4, 2
        %v1590 = vld [vmem:[%s1589] sm:$0x1]
        %v1592 = vlaneseq
        %v1593 = vshrl.u32 %v1592, 7
        %v1594 = vsub.s32 0, %v1593
        %v1595 = vrot.slane %v1590, %v1594
        %v1601 = vunpack.c.l.b16 %v1585
        %v1602 = vunpack.c.l.b16 %v1586
        %v1603 = vunpack.c.l.b16 %v1587
        %v1604 = vunpack.c.l.b16 %v1588
        %v1605 = vpack.c.b16 %v1602, %v1601
        %v1606 = vpack.c.b16 %v1604, %v1603
        %1609 = vmatprep.subr.bf16.mxu0 0
        %1610 = vmatpush1.bf16.msra.mxu0 0
        %1611 = vmatprep.subr.bf16.mxu0 0
        %1612 = vmatpush1.bf16.msra.mxu0 0
        %1613 = vmatprep.subr.bf16.mxu0 0
        %1614 = vmatpush1.bf16.msra.mxu0 0
        %1615 = vmatprep.subr.bf16.mxu0 0
        %1616 = vmatpush1.bf16.msra.mxu0 0
        %1617 = vmatprep.subr.bf16.mxu0 0
        %1618 = vmatpush1.bf16.msra.mxu0 0
        %1619 = vmatprep.subr.bf16.mxu0 0
        %1620 = vmatpush1.bf16.msra.mxu0 0
        %1621 = vmatprep.subr.bf16.mxu0 0
        %1622 = vmatpush1.bf16.msra.mxu0 %v1606
        %1623 = vmatprep.subr.bf16.mxu0 0
        %1624 = vmatpush1.bf16.msra.mxu0 %v1605
        %1625 = vmatprep.subr.bf16.mxu0 0
        %1626 = vmatpush2.bf16.msra.mxu0 0
        %1627 = vmatprep.subr.bf16.mxu0 0
        %1628 = vmatpush2.bf16.msra.mxu0 0
        %1629 = vmatprep.subr.bf16.mxu0 0
        %1630 = vmatpush2.bf16.msra.mxu0 0
        %1631 = vmatprep.subr.bf16.mxu0 0
        %1632 = vmatpush2.bf16.msra.mxu0 0
        %1633 = vmatprep.subr.bf16.mxu0 0
        %1634 = vmatpush2.bf16.msra.mxu0 0
        %1635 = vmatprep.subr.bf16.mxu0 0
        %1636 = vmatpush2.bf16.msra.mxu0 0
        %1637 = vmatprep.subr.bf16.mxu0 0
        %1638 = vmatpush2.bf16.msra.mxu0 0
        %1639 = vmatprep.subr.bf16.mxu0 0
        %1640 = vmatpush2.bf16.msra.mxu0 0
        %1641 = vmatprep.mubr.bf16.mxu0 0
        %1642 = vmatmul.mubr.bf16.gmra.mxu0 %v1057
        %v1643 = vpop.f32.mrf.mxu0
        %v1644 = vadd.f32 %v1595, %v1643
        %v1645 = vpop.f32.mrf.mxu0
        %v1646 = vpop.f32.mrf.mxu0
        %v1647 = vpop.f32.mrf.mxu0
        %1648 = vdwg.mxu0
        %v1649 = vpack.c.bf16 %v1644, %v1644
        %s1650 = scalar_lea.vmem [#allocation2], 8
        %v1651 = vld [vmem:[%s1650] sm:$0xf]
        %1652 = vmatprep.subr.bf16.mxu0 0
        %1653 = vmatpush1.bf16.xpose.msra.mxu0 0
        %1654 = vmatprep.subr.bf16.mxu0 0
        %1655 = vmatpush1.bf16.xpose.msra.mxu0 0
        %1656 = vmatprep.subr.bf16.mxu0 0
        %1657 = vmatpush1.bf16.xpose.msra.mxu0 0
        %1658 = vmatprep.subr.bf16.mxu0 0
        %1659 = vmatpush1.bf16.xpose.msra.mxu0 0
        %1660 = vmatprep.subr.bf16.mxu0 0
        %1661 = vmatpush1.bf16.xpose.msra.mxu0 0
        %1662 = vmatprep.subr.bf16.mxu0 0
        %1663 = vmatpush1.bf16.xpose.msra.mxu0 0
        %1664 = vmatprep.subr.bf16.mxu0 0
        %1665 = vmatpush1.bf16.xpose.msra.mxu0 0
        %1666 = vmatprep.subr.bf16.mxu0 0
        %1667 = vmatpush1.bf16.xpose.msra.mxu0 %v1651
        %1668 = vmatprep.subr.bf16.mxu0 0
        %1669 = vmatpush2.bf16.xpose.msra.mxu0 0
        %1670 = vmatprep.subr.bf16.mxu0 0
        %1671 = vmatpush2.bf16.xpose.msra.mxu0 0
        %1672 = vmatprep.subr.bf16.mxu0 0
        %1673 = vmatpush2.bf16.xpose.msra.mxu0 0
        %1674 = vmatprep.subr.bf16.mxu0 0
        %1675 = vmatpush2.bf16.xpose.msra.mxu0 0
        %1676 = vmatprep.subr.bf16.mxu0 0
        %1677 = vmatpush2.bf16.xpose.msra.mxu0 0
        %1678 = vmatprep.subr.bf16.mxu0 0
        %1679 = vmatpush2.bf16.xpose.msra.mxu0 0
        %1680 = vmatprep.subr.bf16.mxu0 0
        %1681 = vmatpush2.bf16.xpose.msra.mxu0 0
        %1682 = vmatprep.subr.bf16.mxu0 0
        %1683 = vmatpush2.bf16.xpose.msra.mxu0 0
        %1684 = vmatprep.mubr.bf16.mxu0 0
        %1685 = vmatmul.mubr.bf16.gmra.mxu0 %v1649
        %v1686 = vpop.f32.mrf.mxu0
        %v1687 = vadd.f32 %v1030, %v1686
        %v1688 = vpop.f32.mrf.mxu0
        %v1689 = vpop.f32.mrf.mxu0
        %v1690 = vpop.f32.mrf.mxu0
        %1691 = vdwg.mxu0
        %v1692 = vsel %vm1141, %v1687, -inf
        %1693 = vmax.xlane.f32.xlu0 %v1692
        %v1694 = vpop.xlane.xlu0 %1693
        %v1695 = vsub.f32 %v1687, %v1694
        %v1696 = vmul.f32 %v1695, 1.442695
        %v1697 = vpow.pop %v1696
        %v1698 = vsel %vm1141, %v1697, 0.0
        %1699 = vadd.xlane.f32.xlu0 %v1698
        %v1700 = vpop.xlane.xlu0 %1699
        %v1701 = vrcp.pop %v1700
        %v1702 = vmul.f32 %v1697, %v1701
        %s1703 = scalar_lea.vmem %s458, 16 [#allocation4]
        %1704 = vst.msk [vmem:[%s1703] sm:$0xff] %vm1141, %v1702
        %v1705 = vpack.c.bf16 %v1702, %v1702
        %s1706 = scalar_lea.vmem [#allocation3], 8
        %v1707 = vld [vmem:[%s1706] sm:$0xf]
        %v1709 = vsel %vm1141, %v1705, 0
        %v1712 = vsel %vm1159, %v1707, 0
        %1714 = vmatprep.subr.bf16.mxu0 0
        %1715 = vmatpush1.bf16.msra.mxu0 0
        %1716 = vmatprep.subr.bf16.mxu0 0
        %1717 = vmatpush1.bf16.msra.mxu0 0
        %1718 = vmatprep.subr.bf16.mxu0 0
        %1719 = vmatpush1.bf16.msra.mxu0 0
        %1720 = vmatprep.subr.bf16.mxu0 0
        %1721 = vmatpush1.bf16.msra.mxu0 0
        %1722 = vmatprep.subr.bf16.mxu0 0
        %1723 = vmatpush1.bf16.msra.mxu0 0
        %1724 = vmatprep.subr.bf16.mxu0 0
        %1725 = vmatpush1.bf16.msra.mxu0 0
        %1726 = vmatprep.subr.bf16.mxu0 0
        %1727 = vmatpush1.bf16.msra.mxu0 0
        %1728 = vmatprep.subr.bf16.mxu0 0
        %1729 = vmatpush1.bf16.msra.mxu0 %v1712
        %1730 = vmatprep.subr.bf16.mxu0 0
        %1731 = vmatpush2.bf16.msra.mxu0 0
        %1732 = vmatprep.subr.bf16.mxu0 0
        %1733 = vmatpush2.bf16.msra.mxu0 0
        %1734 = vmatprep.subr.bf16.mxu0 0
        %1735 = vmatpush2.bf16.msra.mxu0 0
        %1736 = vmatprep.subr.bf16.mxu0 0
        %1737 = vmatpush2.bf16.msra.mxu0 0
        %1738 = vmatprep.subr.bf16.mxu0 0
        %1739 = vmatpush2.bf16.msra.mxu0 0
        %1740 = vmatprep.subr.bf16.mxu0 0
        %1741 = vmatpush2.bf16.msra.mxu0 0
        %1742 = vmatprep.subr.bf16.mxu0 0
        %1743 = vmatpush2.bf16.msra.mxu0 0
        %1744 = vmatprep.subr.bf16.mxu0 0
        %1745 = vmatpush2.bf16.msra.mxu0 0
        %1746 = vmatprep.mubr.bf16.mxu0 0
        %1747 = vmatmul.mubr.bf16.gmra.mxu0 %v1709
        %v1748 = vpop.f32.mrf.mxu0
        %v1749 = vadd.f32 0.0, %v1748
        %v1750 = vpop.f32.mrf.mxu0
        %v1751 = vpop.f32.mrf.mxu0
        %v1752 = vpop.f32.mrf.mxu0
        %1753 = vdwg.mxu0
        %v1754 = vpack.c.bf16 %v1749, %v1749
        %s1755 = scalar_lea.vmem %s9, 128
        %v1756 = vld [vmem:[%s1755] sm:$0xf]
        %v1757 = vld [vmem:[%s1755 + $0x4] sm:$0xf]
        %v1758 = vld [vmem:[%s1755 + $0x8] sm:$0xf]
        %v1759 = vld [vmem:[%s1755 + $0xc] sm:$0xf]
        %v1760 = vld [vmem:[%s1755 + $0x10] sm:$0xf]
        %v1761 = vld [vmem:[%s1755 + $0x14] sm:$0xf]
        %v1762 = vld [vmem:[%s1755 + $0x18] sm:$0xf]
        %v1763 = vld [vmem:[%s1755 + $0x1c] sm:$0xf]
        %v1764 = vld [vmem:[%s1755 + $0x20] sm:$0xf]
        %v1765 = vld [vmem:[%s1755 + $0x24] sm:$0xf]
        %v1766 = vld [vmem:[%s1755 + $0x28] sm:$0xf]
        %v1767 = vld [vmem:[%s1755 + $0x2c] sm:$0xf]
        %v1768 = vld [vmem:[%s1755 + $0x30] sm:$0xf]
        %v1769 = vld [vmem:[%s1755 + $0x34] sm:$0xf]
        %v1770 = vld [vmem:[%s1755 + $0x38] sm:$0xf]
        %v1771 = vld [vmem:[%s1755 + $0x3c] sm:$0xf]
        %v1788 = vunpack.c.l.b16 %v1756
        %v1789 = vunpack.c.l.b16 %v1757
        %v1790 = vunpack.c.l.b16 %v1758
        %v1791 = vunpack.c.l.b16 %v1759
        %v1792 = vunpack.c.l.b16 %v1760
        %v1793 = vunpack.c.l.b16 %v1761
        %v1794 = vunpack.c.l.b16 %v1762
        %v1795 = vunpack.c.l.b16 %v1763
        %v1796 = vunpack.c.l.b16 %v1764
        %v1797 = vunpack.c.l.b16 %v1765
        %v1798 = vunpack.c.l.b16 %v1766
        %v1799 = vunpack.c.l.b16 %v1767
        %v1800 = vunpack.c.l.b16 %v1768
        %v1801 = vunpack.c.l.b16 %v1769
        %v1802 = vunpack.c.l.b16 %v1770
        %v1803 = vunpack.c.l.b16 %v1771
        %v1804 = vpack.c.b16 %v1789, %v1788
        %v1805 = vpack.c.b16 %v1791, %v1790
        %v1806 = vpack.c.b16 %v1793, %v1792
        %v1807 = vpack.c.b16 %v1795, %v1794
        %v1808 = vpack.c.b16 %v1797, %v1796
        %v1809 = vpack.c.b16 %v1799, %v1798
        %v1810 = vpack.c.b16 %v1801, %v1800
        %v1811 = vpack.c.b16 %v1803, %v1802
        %1820 = vmatprep.subr.bf16.mxu0 0
        %1821 = vmatpush1.bf16.msra.mxu0 %v1811
        %1822 = vmatprep.subr.bf16.mxu0 0
        %1823 = vmatpush1.bf16.msra.mxu0 %v1810
        %1824 = vmatprep.subr.bf16.mxu0 0
        %1825 = vmatpush1.bf16.msra.mxu0 %v1809
        %1826 = vmatprep.subr.bf16.mxu0 0
        %1827 = vmatpush1.bf16.msra.mxu0 %v1808
        %1828 = vmatprep.subr.bf16.mxu0 0
        %1829 = vmatpush1.bf16.msra.mxu0 %v1807
        %1830 = vmatprep.subr.bf16.mxu0 0
        %1831 = vmatpush1.bf16.msra.mxu0 %v1806
        %1832 = vmatprep.subr.bf16.mxu0 0
        %1833 = vmatpush1.bf16.msra.mxu0 %v1805
        %1834 = vmatprep.subr.bf16.mxu0 0
        %1835 = vmatpush1.bf16.msra.mxu0 %v1804
        %1836 = vmatprep.subr.bf16.mxu0 0
        %1837 = vmatpush2.bf16.msra.mxu0 0
        %1838 = vmatprep.subr.bf16.mxu0 0
        %1839 = vmatpush2.bf16.msra.mxu0 0
        %1840 = vmatprep.subr.bf16.mxu0 0
        %1841 = vmatpush2.bf16.msra.mxu0 0
        %1842 = vmatprep.subr.bf16.mxu0 0
        %1843 = vmatpush2.bf16.msra.mxu0 0
        %1844 = vmatprep.subr.bf16.mxu0 0
        %1845 = vmatpush2.bf16.msra.mxu0 0
        %1846 = vmatprep.subr.bf16.mxu0 0
        %1847 = vmatpush2.bf16.msra.mxu0 0
        %1848 = vmatprep.subr.bf16.mxu0 0
        %1849 = vmatpush2.bf16.msra.mxu0 0
        %1850 = vmatprep.subr.bf16.mxu0 0
        %1851 = vmatpush2.bf16.msra.mxu0 0
        %1852 = vmatprep.mubr.bf16.mxu0 0
        %1853 = vmatmul.mubr.bf16.gmra.mxu0 %v1754
        %v1854 = vpop.f32.mrf.mxu0
        %v1855 = vadd.f32 0.0, %v1854
        %v1856 = vpop.f32.mrf.mxu0
        %v1857 = vpop.f32.mrf.mxu0
        %v1858 = vpop.f32.mrf.mxu0
        %1859 = vdwg.mxu0
        %v1860 = vadd.f32 %v1579, %v1855
        %s1861 = scalar_lea.vmem %s3, 48
        %v1862 = vld [vmem:[%s1861] sm:$0xf]
        %v1863 = vld [vmem:[%s1861 + $0x4] sm:$0xf]
        %v1864 = vld [vmem:[%s1861 + $0x8] sm:$0xf]
        %v1865 = vld [vmem:[%s1861 + $0xc] sm:$0xf]
        %s1866 = scalar_lea.vmem %s4, 3
        %v1867 = vld [vmem:[%s1866] sm:$0x1]
        %v1869 = vlaneseq
        %v1870 = vshrl.u32 %v1869, 7
        %v1871 = vsub.s32 0, %v1870
        %v1872 = vrot.slane %v1867, %v1871
        %v1878 = vunpack.c.l.b16 %v1862
        %v1879 = vunpack.c.l.b16 %v1863
        %v1880 = vunpack.c.l.b16 %v1864
        %v1881 = vunpack.c.l.b16 %v1865
        %v1882 = vpack.c.b16 %v1879, %v1878
        %v1883 = vpack.c.b16 %v1881, %v1880
        %1886 = vmatprep.subr.bf16.mxu0 0
        %1887 = vmatpush1.bf16.msra.mxu0 0
        %1888 = vmatprep.subr.bf16.mxu0 0
        %1889 = vmatpush1.bf16.msra.mxu0 0
        %1890 = vmatprep.subr.bf16.mxu0 0
        %1891 = vmatpush1.bf16.msra.mxu0 0
        %1892 = vmatprep.subr.bf16.mxu0 0
        %1893 = vmatpush1.bf16.msra.mxu0 0
        %1894 = vmatprep.subr.bf16.mxu0 0
        %1895 = vmatpush1.bf16.msra.mxu0 0
        %1896 = vmatprep.subr.bf16.mxu0 0
        %1897 = vmatpush1.bf16.msra.mxu0 0
        %1898 = vmatprep.subr.bf16.mxu0 0
        %1899 = vmatpush1.bf16.msra.mxu0 %v1883
        %1900 = vmatprep.subr.bf16.mxu0 0
        %1901 = vmatpush1.bf16.msra.mxu0 %v1882
        %1902 = vmatprep.subr.bf16.mxu0 0
        %1903 = vmatpush2.bf16.msra.mxu0 0
        %1904 = vmatprep.subr.bf16.mxu0 0
        %1905 = vmatpush2.bf16.msra.mxu0 0
        %1906 = vmatprep.subr.bf16.mxu0 0
        %1907 = vmatpush2.bf16.msra.mxu0 0
        %1908 = vmatprep.subr.bf16.mxu0 0
        %1909 = vmatpush2.bf16.msra.mxu0 0
        %1910 = vmatprep.subr.bf16.mxu0 0
        %1911 = vmatpush2.bf16.msra.mxu0 0
        %1912 = vmatprep.subr.bf16.mxu0 0
        %1913 = vmatpush2.bf16.msra.mxu0 0
        %1914 = vmatprep.subr.bf16.mxu0 0
        %1915 = vmatpush2.bf16.msra.mxu0 0
        %1916 = vmatprep.subr.bf16.mxu0 0
        %1917 = vmatpush2.bf16.msra.mxu0 0
        %1918 = vmatprep.mubr.bf16.mxu0 0
        %1919 = vmatmul.mubr.bf16.gmra.mxu0 %v1057
        %v1920 = vpop.f32.mrf.mxu0
        %v1921 = vadd.f32 %v1872, %v1920
        %v1922 = vpop.f32.mrf.mxu0
        %v1923 = vpop.f32.mrf.mxu0
        %v1924 = vpop.f32.mrf.mxu0
        %1925 = vdwg.mxu0
        %v1926 = vpack.c.bf16 %v1921, %v1921
        %s1927 = scalar_lea.vmem [#allocation2], 12
        %v1928 = vld [vmem:[%s1927] sm:$0xf]
        %1929 = vmatprep.subr.bf16.mxu0 0
        %1930 = vmatpush1.bf16.xpose.msra.mxu0 0
        %1931 = vmatprep.subr.bf16.mxu0 0
        %1932 = vmatpush1.bf16.xpose.msra.mxu0 0
        %1933 = vmatprep.subr.bf16.mxu0 0
        %1934 = vmatpush1.bf16.xpose.msra.mxu0 0
        %1935 = vmatprep.subr.bf16.mxu0 0
        %1936 = vmatpush1.bf16.xpose.msra.mxu0 0
        %1937 = vmatprep.subr.bf16.mxu0 0
        %1938 = vmatpush1.bf16.xpose.msra.mxu0 0
        %1939 = vmatprep.subr.bf16.mxu0 0
        %1940 = vmatpush1.bf16.xpose.msra.mxu0 0
        %1941 = vmatprep.subr.bf16.mxu0 0
        %1942 = vmatpush1.bf16.xpose.msra.mxu0 0
        %1943 = vmatprep.subr.bf16.mxu0 0
        %1944 = vmatpush1.bf16.xpose.msra.mxu0 %v1928
        %1945 = vmatprep.subr.bf16.mxu0 0
        %1946 = vmatpush2.bf16.xpose.msra.mxu0 0
        %1947 = vmatprep.subr.bf16.mxu0 0
        %1948 = vmatpush2.bf16.xpose.msra.mxu0 0
        %1949 = vmatprep.subr.bf16.mxu0 0
        %1950 = vmatpush2.bf16.xpose.msra.mxu0 0
        %1951 = vmatprep.subr.bf16.mxu0 0
        %1952 = vmatpush2.bf16.xpose.msra.mxu0 0
        %1953 = vmatprep.subr.bf16.mxu0 0
        %1954 = vmatpush2.bf16.xpose.msra.mxu0 0
        %1955 = vmatprep.subr.bf16.mxu0 0
        %1956 = vmatpush2.bf16.xpose.msra.mxu0 0
        %1957 = vmatprep.subr.bf16.mxu0 0
        %1958 = vmatpush2.bf16.xpose.msra.mxu0 0
        %1959 = vmatprep.subr.bf16.mxu0 0
        %1960 = vmatpush2.bf16.xpose.msra.mxu0 0
        %1961 = vmatprep.mubr.bf16.mxu0 0
        %1962 = vmatmul.mubr.bf16.gmra.mxu0 %v1926
        %v1963 = vpop.f32.mrf.mxu0
        %v1964 = vadd.f32 %v1030, %v1963
        %v1965 = vpop.f32.mrf.mxu0
        %v1966 = vpop.f32.mrf.mxu0
        %v1967 = vpop.f32.mrf.mxu0
        %1968 = vdwg.mxu0
        %v1969 = vsel %vm1141, %v1964, -inf
        %1970 = vmax.xlane.f32.xlu0 %v1969
        %v1971 = vpop.xlane.xlu0 %1970
        %v1972 = vsub.f32 %v1964, %v1971
        %v1973 = vmul.f32 %v1972, 1.442695
        %v1974 = vpow.pop %v1973
        %v1975 = vsel %vm1141, %v1974, 0.0
        %1976 = vadd.xlane.f32.xlu0 %v1975
        %v1977 = vpop.xlane.xlu0 %1976
        %v1978 = vrcp.pop %v1977
        %v1979 = vmul.f32 %v1974, %v1978
        %s1980 = scalar_lea.vmem %s458, 24 [#allocation4]
        %1981 = vst.msk [vmem:[%s1980] sm:$0xff] %vm1141, %v1979
        %v1982 = vpack.c.bf16 %v1979, %v1979
        %s1983 = scalar_lea.vmem [#allocation3], 12
        %v1984 = vld [vmem:[%s1983] sm:$0xf]
        %v1986 = vsel %vm1141, %v1982, 0
        %v1989 = vsel %vm1159, %v1984, 0
        %1991 = vmatprep.subr.bf16.mxu0 0
        %1992 = vmatpush1.bf16.msra.mxu0 0
        %1993 = vmatprep.subr.bf16.mxu0 0
        %1994 = vmatpush1.bf16.msra.mxu0 0
        %1995 = vmatprep.subr.bf16.mxu0 0
        %1996 = vmatpush1.bf16.msra.mxu0 0
        %1997 = vmatprep.subr.bf16.mxu0 0
        %1998 = vmatpush1.bf16.msra.mxu0 0
        %1999 = vmatprep.subr.bf16.mxu0 0
        %2000 = vmatpush1.bf16.msra.mxu0 0
        %2001 = vmatprep.subr.bf16.mxu0 0
        %2002 = vmatpush1.bf16.msra.mxu0 0
        %2003 = vmatprep.subr.bf16.mxu0 0
        %2004 = vmatpush1.bf16.msra.mxu0 0
        %2005 = vmatprep.subr.bf16.mxu0 0
        %2006 = vmatpush1.bf16.msra.mxu0 %v1989
        %2007 = vmatprep.subr.bf16.mxu0 0
        %2008 = vmatpush2.bf16.msra.mxu0 0
        %2009 = vmatprep.subr.bf16.mxu0 0
        %2010 = vmatpush2.bf16.msra.mxu0 0
        %2011 = vmatprep.subr.bf16.mxu0 0
        %2012 = vmatpush2.bf16.msra.mxu0 0
        %2013 = vmatprep.subr.bf16.mxu0 0
        %2014 = vmatpush2.bf16.msra.mxu0 0
        %2015 = vmatprep.subr.bf16.mxu0 0
        %2016 = vmatpush2.bf16.msra.mxu0 0
        %2017 = vmatprep.subr.bf16.mxu0 0
        %2018 = vmatpush2.bf16.msra.mxu0 0
        %2019 = vmatprep.subr.bf16.mxu0 0
        %2020 = vmatpush2.bf16.msra.mxu0 0
        %2021 = vmatprep.subr.bf16.mxu0 0
        %2022 = vmatpush2.bf16.msra.mxu0 0
        %2023 = vmatprep.mubr.bf16.mxu0 0
        %2024 = vmatmul.mubr.bf16.gmra.mxu0 %v1986
        %v2025 = vpop.f32.mrf.mxu0
        %v2026 = vadd.f32 0.0, %v2025
        %v2027 = vpop.f32.mrf.mxu0
        %v2028 = vpop.f32.mrf.mxu0
        %v2029 = vpop.f32.mrf.mxu0
        %2030 = vdwg.mxu0
        %v2031 = vpack.c.bf16 %v2026, %v2026
        %s2032 = scalar_lea.vmem %s9, 192
        %v2033 = vld [vmem:[%s2032] sm:$0xf]
        %v2034 = vld [vmem:[%s2032 + $0x4] sm:$0xf]
        %v2035 = vld [vmem:[%s2032 + $0x8] sm:$0xf]
        %v2036 = vld [vmem:[%s2032 + $0xc] sm:$0xf]
        %v2037 = vld [vmem:[%s2032 + $0x10] sm:$0xf]
        %v2038 = vld [vmem:[%s2032 + $0x14] sm:$0xf]
        %v2039 = vld [vmem:[%s2032 + $0x18] sm:$0xf]
        %v2040 = vld [vmem:[%s2032 + $0x1c] sm:$0xf]
        %v2041 = vld [vmem:[%s2032 + $0x20] sm:$0xf]
        %v2042 = vld [vmem:[%s2032 + $0x24] sm:$0xf]
        %v2043 = vld [vmem:[%s2032 + $0x28] sm:$0xf]
        %v2044 = vld [vmem:[%s2032 + $0x2c] sm:$0xf]
        %v2045 = vld [vmem:[%s2032 + $0x30] sm:$0xf]
        %v2046 = vld [vmem:[%s2032 + $0x34] sm:$0xf]
        %v2047 = vld [vmem:[%s2032 + $0x38] sm:$0xf]
        %v2048 = vld [vmem:[%s2032 + $0x3c] sm:$0xf]
        %v2065 = vunpack.c.l.b16 %v2033
        %v2066 = vunpack.c.l.b16 %v2034
        %v2067 = vunpack.c.l.b16 %v2035
        %v2068 = vunpack.c.l.b16 %v2036
        %v2069 = vunpack.c.l.b16 %v2037
        %v2070 = vunpack.c.l.b16 %v2038
        %v2071 = vunpack.c.l.b16 %v2039
        %v2072 = vunpack.c.l.b16 %v2040
        %v2073 = vunpack.c.l.b16 %v2041
        %v2074 = vunpack.c.l.b16 %v2042
        %v2075 = vunpack.c.l.b16 %v2043
        %v2076 = vunpack.c.l.b16 %v2044
        %v2077 = vunpack.c.l.b16 %v2045
        %v2078 = vunpack.c.l.b16 %v2046
        %v2079 = vunpack.c.l.b16 %v2047
        %v2080 = vunpack.c.l.b16 %v2048
        %v2081 = vpack.c.b16 %v2066, %v2065
        %v2082 = vpack.c.b16 %v2068, %v2067
        %v2083 = vpack.c.b16 %v2070, %v2069
        %v2084 = vpack.c.b16 %v2072, %v2071
        %v2085 = vpack.c.b16 %v2074, %v2073
        %v2086 = vpack.c.b16 %v2076, %v2075
        %v2087 = vpack.c.b16 %v2078, %v2077
        %v2088 = vpack.c.b16 %v2080, %v2079
        %2097 = vmatprep.subr.bf16.mxu0 0
        %2098 = vmatpush1.bf16.msra.mxu0 %v2088
        %2099 = vmatprep.subr.bf16.mxu0 0
        %2100 = vmatpush1.bf16.msra.mxu0 %v2087
        %2101 = vmatprep.subr.bf16.mxu0 0
        %2102 = vmatpush1.bf16.msra.mxu0 %v2086
        %2103 = vmatprep.subr.bf16.mxu0 0
        %2104 = vmatpush1.bf16.msra.mxu0 %v2085
        %2105 = vmatprep.subr.bf16.mxu0 0
        %2106 = vmatpush1.bf16.msra.mxu0 %v2084
        %2107 = vmatprep.subr.bf16.mxu0 0
        %2108 = vmatpush1.bf16.msra.mxu0 %v2083
        %2109 = vmatprep.subr.bf16.mxu0 0
        %2110 = vmatpush1.bf16.msra.mxu0 %v2082
        %2111 = vmatprep.subr.bf16.mxu0 0
        %2112 = vmatpush1.bf16.msra.mxu0 %v2081
        %2113 = vmatprep.subr.bf16.mxu0 0
        %2114 = vmatpush2.bf16.msra.mxu0 0
        %2115 = vmatprep.subr.bf16.mxu0 0
        %2116 = vmatpush2.bf16.msra.mxu0 0
        %2117 = vmatprep.subr.bf16.mxu0 0
        %2118 = vmatpush2.bf16.msra.mxu0 0
        %2119 = vmatprep.subr.bf16.mxu0 0
        %2120 = vmatpush2.bf16.msra.mxu0 0
        %2121 = vmatprep.subr.bf16.mxu0 0
        %2122 = vmatpush2.bf16.msra.mxu0 0
        %2123 = vmatprep.subr.bf16.mxu0 0
        %2124 = vmatpush2.bf16.msra.mxu0 0
        %2125 = vmatprep.subr.bf16.mxu0 0
        %2126 = vmatpush2.bf16.msra.mxu0 0
        %2127 = vmatprep.subr.bf16.mxu0 0
        %2128 = vmatpush2.bf16.msra.mxu0 0
        %2129 = vmatprep.mubr.bf16.mxu0 0
        %2130 = vmatmul.mubr.bf16.gmra.mxu0 %v2031
        %v2131 = vpop.f32.mrf.mxu0
        %v2132 = vadd.f32 0.0, %v2131
        %v2133 = vpop.f32.mrf.mxu0
        %v2134 = vpop.f32.mrf.mxu0
        %v2135 = vpop.f32.mrf.mxu0
        %2136 = vdwg.mxu0
        %v2137 = vadd.f32 %v1860, %v2132
        %v2139 = vlaneseq
        %v2140 = vshrl.u32 %v2139, 7
        %v2141 = vsub.s32 0, %v2140
        %v2142 = vrot.slane %v1031, %v2141
        %v2144 = vadd.f32 %v2137, %v2142
        %2145 = vst.msk [vmem:[%s465] sm:$0xff] %vm1055, %v2144
        %s2146 = sand.u32 %s300, 1
        %s2147 = scalar_lea.sflag [#allocation5], %s2146
        %s2148 = sand.u32 %s300, 1
        %s2149 = smul.addr %s2148, 32
        %s2150 = scalar_lea.vmem [#allocation4], %s2149
        %s2151 = sand.u32 %s328, 1
        %s2152 = scalar_lea.sflag [#allocation7], %s2151
        %s2153 = sand.u32 %s328, 1
        %s2154 = smul.addr %s2153, 8
        %s2155 = scalar_lea.vmem [#allocation6], %s2154
        // Predicated region
        $region69: #{tpu_custom_call.1} parent=63 // pred_check
          %p2156 = pneg %p310
        $region70: #{tpu_custom_call.1} parent=63 // pred_check_branch
          %2158 = sbr.rel (%p2156) target = $region72
        $region71: #{tpu_custom_call.1} parent=63 // pred_region
          %s2160 = ssub.s32 512, 512
          %2161 = vsyncadd %s2147, %s2160
          %s2162 = smul.addr %s34, 4
          %s2163 = sadd.s32 %s35, %s2162
          %s2164 = smul.addr %s2163, 128
          %s2165 = scalar_lea.hbm %s11, %s2164
          %s2166 = sshll.u32 %s2150, 4
          %s2167 = int_to_ptr.vmem [resolvable:$true] %s2166
          %2172 = dma.vmem_to_hbm [thread:$0]  %s2167, 512, %s2165, %s2147, 128, 128, 8
        $region72: #{tpu_custom_call.1} parent=63 // pred_fallthru
          _
        // Predicated region
        $region73: #{tpu_custom_call.1} parent=63 // pred_check
          %p2173 = pneg %p338
        $region74: #{tpu_custom_call.1} parent=63 // pred_check_branch
          %2175 = sbr.rel (%p2173) target = $region76
        $region75: #{tpu_custom_call.1} parent=63 // pred_region
          %s2177 = ssub.s32 128, 128
          %2178 = vsyncadd %s2152, %s2177
          %s2179 = sadd.s32 %s35, %s34
          %s2180 = smul.addr %s2179, 128
          %s2181 = scalar_lea.hbm %s12, %s2180
          %s2183 = sshll.u32 %s2155, 4
          %s2184 = int_to_ptr.vmem [resolvable:$true] %s2183
          %2186 = dma.vmem_to_hbm [thread:$0]  %s2184, 128, %s2181, %s2152
        $region76: #{tpu_custom_call.1} parent=63 // pred_fallthru
          _
      $region64: #{tpu_custom_call.1} parent=5 // pred_fallthru
        _
      %p2187 = scmp.le.s32.totalorder 2, %s25
      // Predicated region
      $region77: #{tpu_custom_call.1} parent=5 // pred_check
        %p2188 = pneg %p2187
      $region78: #{tpu_custom_call.1} parent=5 // pred_check_branch
        %2190 = sbr.rel (%p2188) target = $region80
      $region79: #{tpu_custom_call.1} parent=5 // pred_region
        %s2191 = ssub.s32 %s25, 2
        // Predicated region
        $region81: #{tpu_custom_call.1} parent=79 // pred_check
          %p2192 = pneg %p316
        $region82: #{tpu_custom_call.1} parent=79 // pred_check_branch
          %2194 = sbr.rel (%p2192) target = $region84
        $region83: #{tpu_custom_call.1} parent=79 // pred_region
          %s2195 = sand.u32 %s301, 1
          %s2196 = scalar_lea.sflag [#allocation5], %s2195
          %s2197 = sand.u32 %s301, 1
          %s2198 = smul.addr %s2197, 32
          %s2199 = scalar_lea.vmem [#allocation4], %s2198
          %2200 = dma.done %s2196, 512
        $region84: #{tpu_custom_call.1} parent=79 // pred_fallthru
          _
        // Predicated region
        $region85: #{tpu_custom_call.1} parent=79 // pred_check
          %p2201 = pneg %p344
        $region86: #{tpu_custom_call.1} parent=79 // pred_check_branch
          %2203 = sbr.rel (%p2201) target = $region88
        $region87: #{tpu_custom_call.1} parent=79 // pred_region
          %s2204 = sand.u32 %s329, 1
          %s2205 = scalar_lea.sflag [#allocation7], %s2204
          %s2206 = sand.u32 %s329, 1
          %s2207 = smul.addr %s2206, 8
          %s2208 = scalar_lea.vmem [#allocation6], %s2207
          %2209 = dma.done %s2205, 128
        $region88: #{tpu_custom_call.1} parent=79 // pred_fallthru
          _
      $region80: #{tpu_custom_call.1} parent=5 // pred_fallthru
        _
    $region6: #{tpu_custom_call.1} parent=1 // loop_footer
      %s29 = sadd.s32 1, %s25
    $region7: #{tpu_custom_call.1} parent=1 // loop_footer_branch
      %24 = sbr.rel target = $region3
    $region8: #{tpu_custom_call.1} parent=1 // loop_exit
      _
    %2210 = vsyncpa [#allocation5], 1
    %s2211 = scalar_lea.sflag [#allocation5], 1
    %2212 = vsyncpa %s2211, 1
    %2213 = vsyncpa [#allocation7], 1
    %s2214 = scalar_lea.sflag [#allocation7], 1
    %2215 = vsyncpa %s2214, 1

</llo_original>
